<compile_context>
chip_gen: v5e
topology: v5e:2x2
jax: 0.10.0
libtpu: 0.0.40
codegen_flags: <defaults>
</compile_context>

<pallas_src>
import functools

import jax
import jax.numpy as jnp
import numpy as np
from jax import lax
from jax.experimental import pallas as pl
from jax.experimental.pallas import tpu as pltpu


_MAX_STATIC_UNROLL = 16          # fully unroll the time loop when L <= this
_VMEM_BUDGET_BYTES = 24 << 20    # conservative: fits v7x's 32 MiB scoped VMEM
_VMEM_LIMIT_BYTES = 32 * 1024 * 1024


# ----------------------------------------------------------------------------
# Pallas kernel
# ----------------------------------------------------------------------------
def banet_kernel(S, L, time_unrolled,          # static python values (closure)
                 x_ref,                        # (1, L*Nb, D)  bf16
                 wih0, whh0, bias0,            # layer 0: (D,4K) bf16, (K,4K) bf16, (1,4K) f32
                 wih1, whh1, bias1,            # layer 1
                 wih2, whh2, bias2,            # layer 2
                 wta, bta,                     # temporal attn: (K,1) bf16, (1,1) f32
                 wfc1, bfc1,                   # set attn fc1: (K,K) bf16, (1,K) f32
                 wfc2, bfc2,                   # set attn fc2: (K,K) bf16, (1,K) f32
                 wfc, bfc,                     # final fc (padded): (S*K,Cp) bf16, (1,Cp) f32
                 out_ref,                      # (1, Bb, Cp)  f32
                 G_scr, H_scr):                # scratch: (L*Nb,4K) bf16, (L*Nb,K) f32
    f32, bf16 = jnp.float32, jnp.bfloat16
    Bb = out_ref.shape[1]
    K = H_scr.shape[-1]
    Nb = Bb * S
    scale = 1.0 / (K ** 0.5)

    # Lane mask selecting the cell-candidate ("g", tanh) gate inside the
    # lane-dense 4K-wide gate tile (PyTorch gate order i, f, g, o).
    lane = lax.broadcasted_iota(jnp.int32, (Nb, 4 * K), 1)
    g_mask = (lane >= 2 * K) & (lane < 3 * K)

    x2 = x_ref[0]                                           # (L*Nb, D) bf16

    def lstm_step(gx_bf16, h, c, whh_v):
        """One LSTM cell update: single lane-dense recurrent matmul, masked
        activations on the full 128-lane gate tile, f32 state update."""
        pre = gx_bf16.astype(f32) + jnp.dot(h.astype(bf16), whh_v,
                                            preferred_element_type=f32)
        act = jnp.where(g_mask, jnp.tanh(pre), jax.nn.sigmoid(pre))
        i_g = act[:, 0 * K:1 * K]
        f_g = act[:, 1 * K:2 * K]
        g_g = act[:, 2 * K:3 * K]
        o_g = act[:, 3 * K:4 * K]
        c_new = f_g * c + i_g * g_g
        h_new = o_g * jnp.tanh(c_new)
        return h_new, c_new

    layers = ((wih0, whh0, bias0, False),
              (wih1, whh1, bias1, False),
              (wih2, whh2, bias2, True))

    Hw = None
    for li, (wih, whh, bias, is_last) in enumerate(layers):
        # Hoisted input projection: ONE (L*Nb, in) @ (in, 4K) MXU matmul with
        # bf16 operands, f32 accumulation, bf16 scratch storage.
        inp = x2 if li == 0 else H_scr[...].astype(bf16)
        G_scr[...] = (jnp.dot(inp, wih[...], preferred_element_type=f32)
                      + bias[...]).astype(bf16)
        whh_v = whh[...]                                    # (K, 4K) bf16

        h0 = jnp.zeros((Nb, K), f32)
        c0 = jnp.zeros((Nb, K), f32)

        if not is_last:
            # Layers 0/1: run the recurrence, store h_t for the next layer's
            # hoisted projection.
            if time_unrolled:
                h, c = h0, c0
                for t in range(L):
                    h, c = lstm_step(G_scr[pl.ds(t * Nb, Nb), :], h, c, whh_v)
                    H_scr[pl.ds(t * Nb, Nb), :] = h
            else:
                def body(t, carry):
                    h, c = carry
                    off = t * Nb
                    if Nb % 8 == 0:
                        off = pl.multiple_of(off, 8)
                    h, c = lstm_step(G_scr[pl.ds(off, Nb), :], h, c, whh_v)
                    H_scr[pl.ds(off, Nb), :] = h
                    return (h, c)
                lax.fori_loop(0, L, body, (h0, c0), unroll=2)
        else:
            # Last layer: fuse the temporal-attention softmax online into the
            # time loop (per-row running max, num/den accumulators); no H
            # materialization and no selection-matrix matmuls.
            wta_v = wta[...]                                # (K, 1) bf16
            bta_v = bta[...]                                # (1, 1) f32
            m0 = jnp.full((Nb, 1), -jnp.inf, f32)
            d0 = jnp.zeros((Nb, 1), f32)
            n0 = jnp.zeros((Nb, K), f32)

            def attn_step(gx, carry):
                h, c, m, den, num = carry
                h, c = lstm_step(gx, h, c, whh_v)
                logit = (jnp.dot(h.astype(bf16), wta_v,
                                 preferred_element_type=f32)
                         + bta_v) * scale                   # (Nb, 1)
                m_new = jnp.maximum(m, logit)
                alpha = jnp.exp(m - m_new)
                p = jnp.exp(logit - m_new)
                den = alpha * den + p
                num = alpha * num + p * h
                return (h, c, m_new, den, num)

            carry = (h0, c0, m0, d0, n0)
            if time_unrolled:
                for t in range(L):
                    carry = attn_step(G_scr[pl.ds(t * Nb, Nb), :], carry)
            else:
                def body(t, carry):
                    off = t * Nb
                    if Nb % 8 == 0:
                        off = pl.multiple_of(off, 8)
                    return attn_step(G_scr[pl.ds(off, Nb), :], carry)
                carry = lax.fori_loop(0, L, body, carry, unroll=2)
            _, _, _, den, num = carry
            # den >= 1 by construction (per-row max), so approx recip is safe.
            Hw = num * pl.reciprocal(den, approx=True)      # (Nb, K) f32

    # ------------------------------------------------------------------
    # Body-part (set) attention: fc1 -> tanh -> fc2 -> softmax over S.
    # ------------------------------------------------------------------
    fc1_out = jnp.tanh(jnp.dot(Hw.astype(bf16), wfc1[...],
                               preferred_element_type=f32) + bfc1[...])
    s_attn = jnp.dot(fc1_out.astype(bf16), wfc2[...],
                     preferred_element_type=f32) + bfc2[...]
    s_attn = s_attn.reshape(Bb, S, K) * scale
    s_attn = jnp.exp(s_attn - jnp.max(s_attn, axis=1, keepdims=True))
    s_attn = s_attn * pl.reciprocal(jnp.sum(s_attn, axis=1, keepdims=True),
                                    approx=True)

    Hf = Hw.reshape(Bb, S, K) * s_attn                      # (Bb, S, K)
    flat = Hf.reshape(Bb, S * K)

    # Final classifier (lane-dense padded columns; dropout p=0 is identity).
    out_ref[0] = (jnp.dot(flat.astype(bf16), wfc[...],
                          preferred_element_type=f32) + bfc[...])


# ----------------------------------------------------------------------------
# Batch-block picker: largest sublane-aligned batch block whose working set
# (double-buffered x/out blocks + scratch + resident weights) fits a budget
# that is safe on every generation (v7x: 64 MiB physical / 32 MiB scoped).
# ----------------------------------------------------------------------------
def _pick_batch_block(Bdim, S, L, D, K, Cp, weight_bytes,
                      budget=_VMEM_BUDGET_BYTES):
    candidates = []
    for bb in range(1, Bdim + 1):
        if Bdim % bb:
            continue
        nb = bb * S
        if (nb % 8) and bb != Bdim:
            continue                                  # keep blocks 8-row aligned
        need = (2 * L * nb * D * 2                    # x block, bf16, 2 buffers
                + 2 * bb * Cp * 4                     # out block, f32, 2 buffers
                + L * nb * 4 * K * 2                  # G_scr (bf16)
                + L * nb * K * 4                      # H_scr (f32)
                + weight_bytes)                       # resident weights
        if need <= budget:
            candidates.append(bb)
    if not candidates:
        for bb in range(1, Bdim + 1):
            if Bdim % bb == 0 and (bb * S) % 8 == 0:
                return bb
        return Bdim
    # Prefer the largest block that still leaves >= 2 grid steps so v7x's two
    # TensorCores (dimension_semantics="parallel") both get work.
    multi = [bb for bb in candidates if Bdim // bb >= 2]
    return max(multi) if multi else max(candidates)


# ----------------------------------------------------------------------------
# Wrapper
# ----------------------------------------------------------------------------
def banet_forward(x, params, *, S, K, num_classes, batch_block=None):
    (wih0, whh0, b0, wih1, whh1, b1, wih2, whh2, b2,
     wta, bta, wfc1, bfc1, wfc2, bfc2, wfc, bfc) = params
    f32, bf16 = jnp.float32, jnp.bfloat16
    Bdim, L, Dp = x.shape
    assert Dp % S == 0, "last dim must be a multiple of body_part_feature_num"
    D = Dp // S
    C = num_classes
    Cp = ((max(C, 128) + 127) // 128) * 128          # lane-dense output width

    def wcast(w):
        return w.astype(bf16)

    wfc_p = jnp.zeros((S * K, Cp), f32).at[:, :C].set(wfc).astype(bf16)
    bfc_p = jnp.zeros((1, Cp), f32).at[:, :C].set(bfc)

    w_inputs = (wcast(wih0), wcast(whh0), b0.astype(f32),
                wcast(wih1), wcast(whh1), b1.astype(f32),
                wcast(wih2), wcast(whh2), b2.astype(f32),
                wcast(wta.T), bta.astype(f32),
                wcast(wfc1), bfc1.astype(f32), wcast(wfc2), bfc2.astype(f32),
                wfc_p, bfc_p)
    weight_bytes = sum(int(np.prod(a.shape)) * a.dtype.itemsize
                       for a in w_inputs)

    if batch_block is None:
        batch_block = _pick_batch_block(Bdim, S, L, D, K, Cp, weight_bytes)
    assert Bdim % batch_block == 0
    nblk = Bdim // batch_block
    Nb = batch_block * S

    # PyTorch: view(B,L,D'//S,S) -> permute(0,1,3,2) -> permute(0,2,1,3)
    #          -> reshape(B*S,L,D).  Then per batch block, time-major flat
    #          rows r = t*Nb + n_local with n_local = b_local*S + s.
    xr = x.reshape(Bdim, L, D, S).transpose(0, 3, 1, 2)          # (B, S, L, D)
    xr = xr.reshape(nblk, batch_block, S, L, D)
    xr = xr.transpose(0, 3, 1, 2, 4).reshape(nblk, L * Nb, D)
    x3 = xr.astype(bf16)

    inputs = (x3,) + w_inputs

    const2 = lambda b: (0, 0)                 # weights: fetched once, resident
    in_specs = [pl.BlockSpec((1, L * Nb, D), lambda b: (b, 0, 0))]
    in_specs += [pl.BlockSpec(w.shape, const2) for w in w_inputs]

    time_unrolled = L <= _MAX_STATIC_UNROLL

    out = pl.pallas_call(
        functools.partial(banet_kernel, S, L, time_unrolled),
        grid=(nblk,),
        out_shape=jax.ShapeDtypeStruct((nblk, batch_block, Cp), f32),
        in_specs=in_specs,
        out_specs=pl.BlockSpec((1, batch_block, Cp), lambda b: (b, 0, 0)),
        scratch_shapes=[
            pltpu.VMEM((L * Nb, 4 * K), jnp.bfloat16),   # gate pre-activations
            pltpu.VMEM((L * Nb, K), jnp.float32),        # per-layer hidden seq
        ],
        compiler_params=pltpu.CompilerParams(
            dimension_semantics=("parallel",),
            vmem_limit_bytes=_VMEM_LIMIT_BYTES),
    )(*inputs)
    return out.reshape(Bdim, Cp)[:, :C]


# ----------------------------------------------------------------------------
# Deterministic parameter init (shapes from BANet.__init__)
# ----------------------------------------------------------------------------
def init_params(key, D, K, S, C, num_layers=3):
    keys = iter(jax.random.split(key, 64))

    def u(shape, s):
        return jax.random.uniform(next(keys), shape, jnp.float32, -s, s)

    s = 1.0 / (K ** 0.5)
    params = []
    in_dims = [D] + [K] * (num_layers - 1)
    for ind in in_dims:                                   # nn.LSTM params
        w_ih = u((4 * K, ind), s)
        w_hh = u((4 * K, K), s)
        b_ih = u((4 * K,), s)
        b_hh = u((4 * K,), s)
        params += [w_ih.T, w_hh.T, (b_ih + b_hh).reshape(1, 4 * K)]
    # temporal_attn = Conv1d(K, 1, kernel_size=1): weight (1,K,1), bias (1,)
    params += [u((K,), s).reshape(1, K), u((1,), s).reshape(1, 1)]
    # set_attn_fc1 / fc2: Linear(K, K)
    for _ in range(2):
        params += [u((K, K), s).T, u((K,), s).reshape(1, K)]
    # fc: Linear(K*S, C)
    sf = 1.0 / ((S * K) ** 0.5)
    params += [u((C, S * K), sf).T, u((C,), sf).reshape(1, C)]
    return params


# ----------------------------------------------------------------------------
# Pure-JAX reference (exact f32 math, for the numeric sanity check)
# ----------------------------------------------------------------------------
def banet_reference(x, params, *, S, K, num_classes):
    (wih0, whh0, b0, wih1, whh1, b1, wih2, whh2, b2,
     wta, bta, wfc1, bfc1, wfc2, bfc2, wfc, bfc) = params
    Bdim, L, Dp = x.shape
    D = Dp // S
    N = Bdim * S
    layer_in = x.reshape(Bdim, L, D, S).transpose(0, 3, 1, 2).reshape(N, L, D)
    for (wih, whh, b) in ((wih0, whh0, b0), (wih1, whh1, b1), (wih2, whh2, b2)):
        h = jnp.zeros((N, K), jnp.float32)
        c = jnp.zeros((N, K), jnp.float32)
        outs = []
        for t in range(L):
            gates = layer_in[:, t, :] @ wih + h @ whh + b
            i_g = jax.nn.sigmoid(gates[:, :K])
            f_g = jax.nn.sigmoid(gates[:, K:2 * K])
            g_g = jnp.tanh(gates[:, 2 * K:3 * K])
            o_g = jax.nn.sigmoid(gates[:, 3 * K:])
            c = f_g * c + i_g * g_g
            h = o_g * jnp.tanh(c)
            outs.append(h)
        layer_in = jnp.stack(outs, axis=1)                 # (N, L, K)
    H = layer_in
    logits = (jnp.einsum('nlk,k->nl', H, wta[0]) + bta[0, 0]) / (K ** 0.5)
    A = jax.nn.softmax(logits, axis=-1)
    Hw = jnp.einsum('nl,nlk->nk', A, H)
    Bt = jnp.tanh(Hw @ wfc1 + bfc1)
    Bt = Bt @ wfc2 + bfc2
    Bt = jax.nn.softmax((Bt / (K ** 0.5)).reshape(Bdim, S, K), axis=1)
    Hf = Hw.reshape(Bdim, S, K) * Bt
    return Hf.reshape(Bdim, S * K) @ wfc + bfc


# TODO(synk): pretrain branch (reconstruction_head LSTM) and nn.Dropout(p>0)
# are not exercised by the inference forward pass and are not implemented.

if __name__ == "__main__":
    # Small shapes consistent with the module:
    #   body_part_feature_num S=4, per-part input_dim D=8 -> D' = 32,
    #   hidden_dim K=32, num_classes C=5, lstm_layers=3, batch B=4, seq L=8.
    B, L, S, D, K, C = 4, 8, 4, 8, 32, 5
    key = jax.random.PRNGKey(0)
    kx, kp = jax.random.split(key)
    x = jax.random.normal(kx, (B, L, S * D), jnp.float32)
    params = init_params(kp, D, K, S, C)

    out = banet_forward(x, params, S=S, K=K, num_classes=C)
    out = jax.block_until_ready(out)

    ref = banet_reference(x, params, S=S, K=K, num_classes=C)
    np.testing.assert_allclose(np.asarray(out), np.asarray(ref),
                               rtol=2e-2, atol=2e-2)
    print("KERNEL_OK")
</pallas_src>

<mosaic_0001>
module attributes {stable_mosaic.version = 11 : i64} {
  func.func @banet_kernel(%arg0: i32, %arg1: memref<1x64x8xbf16, #tpu.memory_space<vmem>>, %arg2: memref<8x128xbf16, #tpu.memory_space<vmem>>, %arg3: memref<32x128xbf16, #tpu.memory_space<vmem>>, %arg4: memref<1x128xf32, #tpu.memory_space<vmem>>, %arg5: memref<32x128xbf16, #tpu.memory_space<vmem>>, %arg6: memref<32x128xbf16, #tpu.memory_space<vmem>>, %arg7: memref<1x128xf32, #tpu.memory_space<vmem>>, %arg8: memref<32x128xbf16, #tpu.memory_space<vmem>>, %arg9: memref<32x128xbf16, #tpu.memory_space<vmem>>, %arg10: memref<1x128xf32, #tpu.memory_space<vmem>>, %arg11: memref<32x1xbf16, #tpu.memory_space<vmem>>, %arg12: memref<1x1xf32, #tpu.memory_space<vmem>>, %arg13: memref<32x32xbf16, #tpu.memory_space<vmem>>, %arg14: memref<1x32xf32, #tpu.memory_space<vmem>>, %arg15: memref<32x32xbf16, #tpu.memory_space<vmem>>, %arg16: memref<1x32xf32, #tpu.memory_space<vmem>>, %arg17: memref<128x128xbf16, #tpu.memory_space<vmem>>, %arg18: memref<1x128xf32, #tpu.memory_space<vmem>>, %arg19: memref<1x2x128xf32, #tpu.memory_space<vmem>>, %arg20: memref<64x128xbf16, #tpu.memory_space<vmem>>, %arg21: memref<64x32xf32, #tpu.memory_space<vmem>>) attributes {dimension_semantics = [#tpu.dimension_semantics<parallel>], iteration_bounds = array<i64: 2>, scalar_prefetch = 0 : i64, scratch_operands = 2 : i64, tpu.core_type = #tpu.core_type<tc>, window_params = [{transform_indices = @transform_0, window_bounds = array<i64: 1, 64, 8>}, {pipeline_mode = #tpu.pipeline_mode<synchronous>, transform_indices = @transform_1, window_bounds = array<i64: 8, 128>}, {pipeline_mode = #tpu.pipeline_mode<synchronous>, transform_indices = @transform_2, window_bounds = array<i64: 32, 128>}, {pipeline_mode = #tpu.pipeline_mode<synchronous>, transform_indices = @transform_3, window_bounds = array<i64: 1, 128>}, {pipeline_mode = #tpu.pipeline_mode<synchronous>, transform_indices = @transform_4, window_bounds = array<i64: 32, 128>}, {pipeline_mode = #tpu.pipeline_mode<synchronous>, transform_indices = @transform_5, window_bounds = array<i64: 32, 128>}, {pipeline_mode = #tpu.pipeline_mode<synchronous>, transform_indices = @transform_6, window_bounds = array<i64: 1, 128>}, {pipeline_mode = #tpu.pipeline_mode<synchronous>, transform_indices = @transform_7, window_bounds = array<i64: 32, 128>}, {pipeline_mode = #tpu.pipeline_mode<synchronous>, transform_indices = @transform_8, window_bounds = array<i64: 32, 128>}, {pipeline_mode = #tpu.pipeline_mode<synchronous>, transform_indices = @transform_9, window_bounds = array<i64: 1, 128>}, {pipeline_mode = #tpu.pipeline_mode<synchronous>, transform_indices = @transform_10, window_bounds = array<i64: 32, 1>}, {pipeline_mode = #tpu.pipeline_mode<synchronous>, transform_indices = @transform_11, window_bounds = array<i64: 1, 1>}, {pipeline_mode = #tpu.pipeline_mode<synchronous>, transform_indices = @transform_12, window_bounds = array<i64: 32, 32>}, {pipeline_mode = #tpu.pipeline_mode<synchronous>, transform_indices = @transform_13, window_bounds = array<i64: 1, 32>}, {pipeline_mode = #tpu.pipeline_mode<synchronous>, transform_indices = @transform_14, window_bounds = array<i64: 32, 32>}, {pipeline_mode = #tpu.pipeline_mode<synchronous>, transform_indices = @transform_15, window_bounds = array<i64: 1, 32>}, {pipeline_mode = #tpu.pipeline_mode<synchronous>, transform_indices = @transform_16, window_bounds = array<i64: 128, 128>}, {pipeline_mode = #tpu.pipeline_mode<synchronous>, transform_indices = @transform_17, window_bounds = array<i64: 1, 128>}, {transform_indices = @transform_18, window_bounds = array<i64: 1, 2, 128>}]} {
    %0 = tpu.iota {dimensions = array<i32: 1>} : vector<8x128xi32>
    %c64_i32 = arith.constant 64 : i32
    %1 = vector.broadcast %c64_i32 : i32 to vector<8x128xi32>
    %2 = arith.cmpi sge, %0, %1 : vector<8x128xi32>
    %c96_i32 = arith.constant 96 : i32
    %3 = vector.broadcast %c96_i32 : i32 to vector<8x128xi32>
    %4 = arith.cmpi slt, %0, %3 : vector<8x128xi32>
    %5 = arith.andi %2, %4 : vector<8x128xi1>
    %c0 = arith.constant 0 : index
    %c0_0 = arith.constant 0 : index
    %c0_1 = arith.constant 0 : index
    %6 = vector.load %arg1[%c0, %c0_0, %c0_1] : memref<1x64x8xbf16, #tpu.memory_space<vmem>>, vector<1x64x8xbf16>
    %7 = vector.shape_cast %6 : vector<1x64x8xbf16> to vector<64x8xbf16>
    %c0_2 = arith.constant 0 : index
    %c0_3 = arith.constant 0 : index
    %8 = vector.load %arg2[%c0_2, %c0_3] : memref<8x128xbf16, #tpu.memory_space<vmem>>, vector<8x128xbf16>
    %cst = arith.constant dense<0.000000e+00> : vector<64x128xf32>
    %9 = tpu.matmul %7, %8, %cst {dimension_numbers = #tpu.dot_dimension_numbers<[1], [0], [0], [1], [0, 0, 1, 1], [], []>} : vector<64x8xbf16>, vector<8x128xbf16>, vector<64x128xf32> -> vector<64x128xf32>
    %c0_4 = arith.constant 0 : index
    %c0_5 = arith.constant 0 : index
    %10 = vector.load %arg4[%c0_4, %c0_5] : memref<1x128xf32, #tpu.memory_space<vmem>>, vector<1x128xf32>
    %11 = vector.broadcast %10 : vector<1x128xf32> to vector<64x128xf32>
    %12 = arith.addf %9, %11 : vector<64x128xf32>
    %13 = arith.truncf %12 : vector<64x128xf32> to vector<64x128xbf16>
    %c0_6 = arith.constant 0 : index
    %c0_7 = arith.constant 0 : index
    %14 = vector.load %arg20[%c0_6, %c0_7] : memref<64x128xbf16, #tpu.memory_space<vmem>>, vector<64x128xbf16>
    tpu.vector_store %arg20[%c0_6, %c0_7], %13 {strides = array<i32>} : memref<64x128xbf16, #tpu.memory_space<vmem>>, vector<64x128xbf16>,
    %c0_8 = arith.constant 0 : index
    %c0_9 = arith.constant 0 : index
    %15 = vector.load %arg3[%c0_8, %c0_9] : memref<32x128xbf16, #tpu.memory_space<vmem>>, vector<32x128xbf16>
    %cst_10 = arith.constant 0.000000e+00 : f32
    %16 = vector.broadcast %cst_10 : f32 to vector<8x32xf32>
    %cst_11 = arith.constant 0.000000e+00 : f32
    %17 = vector.broadcast %cst_11 : f32 to vector<8x32xf32>
    %c0_12 = arith.constant 0 : index
    %c0_13 = arith.constant 0 : index
    %18 = vector.load %arg20[%c0_12, %c0_13] : memref<64x128xbf16, #tpu.memory_space<vmem>>, vector<8x128xbf16>
    %19 = arith.extf %18 : vector<8x128xbf16> to vector<8x128xf32>
    %20 = arith.truncf %16 : vector<8x32xf32> to vector<8x32xbf16>
    %cst_14 = arith.constant dense<0.000000e+00> : vector<8x128xf32>
    %21 = tpu.matmul %20, %15, %cst_14 {dimension_numbers = #tpu.dot_dimension_numbers<[1], [0], [0], [1], [0, 0, 1, 1], [], []>} : vector<8x32xbf16>, vector<32x128xbf16>, vector<8x128xf32> -> vector<8x128xf32>
    %22 = arith.addf %19, %21 : vector<8x128xf32>
    %23 = math.tanh %22 : vector<8x128xf32>
    %24 = arith.negf %22 : vector<8x128xf32>
    %25 = math.exp %24 : vector<8x128xf32>
    %cst_15 = arith.constant 1.000000e+00 : f32
    %26 = vector.broadcast %cst_15 : f32 to vector<8x128xf32>
    %27 = arith.addf %26, %25 : vector<8x128xf32>
    %28 = arith.divf %26, %27 : vector<8x128xf32>
    %29 = arith.select %5, %23, %28 : vector<8x128xi1>, vector<8x128xf32>
    %30 = vector.extract_strided_slice %29 {offsets = [0, 0], sizes = [8, 32], strides = [1, 1]} : vector<8x128xf32> to vector<8x32xf32>
    %31 = vector.extract_strided_slice %29 {offsets = [0, 32], sizes = [8, 32], strides = [1, 1]} : vector<8x128xf32> to vector<8x32xf32>
    %32 = vector.extract_strided_slice %29 {offsets = [0, 64], sizes = [8, 32], strides = [1, 1]} : vector<8x128xf32> to vector<8x32xf32>
    %33 = vector.extract_strided_slice %29 {offsets = [0, 96], sizes = [8, 32], strides = [1, 1]} : vector<8x128xf32> to vector<8x32xf32>
    %34 = arith.mulf %31, %17 : vector<8x32xf32>
    %35 = arith.mulf %30, %32 : vector<8x32xf32>
    %36 = arith.addf %34, %35 : vector<8x32xf32>
    %37 = math.tanh %36 : vector<8x32xf32>
    %38 = arith.mulf %33, %37 : vector<8x32xf32>
    %c0_16 = arith.constant 0 : index
    %c0_17 = arith.constant 0 : index
    %39 = vector.load %arg21[%c0_16, %c0_17] : memref<64x32xf32, #tpu.memory_space<vmem>>, vector<8x32xf32>
    tpu.vector_store %arg21[%c0_16, %c0_17], %38 {strides = array<i32>} : memref<64x32xf32, #tpu.memory_space<vmem>>, vector<8x32xf32>,
    %c8 = arith.constant 8 : index
    %c0_18 = arith.constant 0 : index
    %40 = vector.load %arg20[%c8, %c0_18] : memref<64x128xbf16, #tpu.memory_space<vmem>>, vector<8x128xbf16>
    %41 = arith.extf %40 : vector<8x128xbf16> to vector<8x128xf32>
    %42 = arith.truncf %38 : vector<8x32xf32> to vector<8x32xbf16>
    %cst_19 = arith.constant dense<0.000000e+00> : vector<8x128xf32>
    %43 = tpu.matmul %42, %15, %cst_19 {dimension_numbers = #tpu.dot_dimension_numbers<[1], [0], [0], [1], [0, 0, 1, 1], [], []>} : vector<8x32xbf16>, vector<32x128xbf16>, vector<8x128xf32> -> vector<8x128xf32>
    %44 = arith.addf %41, %43 : vector<8x128xf32>
    %45 = math.tanh %44 : vector<8x128xf32>
    %46 = arith.negf %44 : vector<8x128xf32>
    %47 = math.exp %46 : vector<8x128xf32>
    %cst_20 = arith.constant 1.000000e+00 : f32
    %48 = vector.broadcast %cst_20 : f32 to vector<8x128xf32>
    %49 = arith.addf %48, %47 : vector<8x128xf32>
    %50 = arith.divf %48, %49 : vector<8x128xf32>
    %51 = arith.select %5, %45, %50 : vector<8x128xi1>, vector<8x128xf32>
    %52 = vector.extract_strided_slice %51 {offsets = [0, 0], sizes = [8, 32], strides = [1, 1]} : vector<8x128xf32> to vector<8x32xf32>
    %53 = vector.extract_strided_slice %51 {offsets = [0, 32], sizes = [8, 32], strides = [1, 1]} : vector<8x128xf32> to vector<8x32xf32>
    %54 = vector.extract_strided_slice %51 {offsets = [0, 64], sizes = [8, 32], strides = [1, 1]} : vector<8x128xf32> to vector<8x32xf32>
    %55 = vector.extract_strided_slice %51 {offsets = [0, 96], sizes = [8, 32], strides = [1, 1]} : vector<8x128xf32> to vector<8x32xf32>
    %56 = arith.mulf %53, %36 : vector<8x32xf32>
    %57 = arith.mulf %52, %54 : vector<8x32xf32>
    %58 = arith.addf %56, %57 : vector<8x32xf32>
    %59 = math.tanh %58 : vector<8x32xf32>
    %60 = arith.mulf %55, %59 : vector<8x32xf32>
    %c8_21 = arith.constant 8 : index
    %c0_22 = arith.constant 0 : index
    %61 = vector.load %arg21[%c8_21, %c0_22] : memref<64x32xf32, #tpu.memory_space<vmem>>, vector<8x32xf32>
    tpu.vector_store %arg21[%c8_21, %c0_22], %60 {strides = array<i32>} : memref<64x32xf32, #tpu.memory_space<vmem>>, vector<8x32xf32>,
    %c16 = arith.constant 16 : index
    %c0_23 = arith.constant 0 : index
    %62 = vector.load %arg20[%c16, %c0_23] : memref<64x128xbf16, #tpu.memory_space<vmem>>, vector<8x128xbf16>
    %63 = arith.extf %62 : vector<8x128xbf16> to vector<8x128xf32>
    %64 = arith.truncf %60 : vector<8x32xf32> to vector<8x32xbf16>
    %cst_24 = arith.constant dense<0.000000e+00> : vector<8x128xf32>
    %65 = tpu.matmul %64, %15, %cst_24 {dimension_numbers = #tpu.dot_dimension_numbers<[1], [0], [0], [1], [0, 0, 1, 1], [], []>} : vector<8x32xbf16>, vector<32x128xbf16>, vector<8x128xf32> -> vector<8x128xf32>
    %66 = arith.addf %63, %65 : vector<8x128xf32>
    %67 = math.tanh %66 : vector<8x128xf32>
    %68 = arith.negf %66 : vector<8x128xf32>
    %69 = math.exp %68 : vector<8x128xf32>
    %cst_25 = arith.constant 1.000000e+00 : f32
    %70 = vector.broadcast %cst_25 : f32 to vector<8x128xf32>
    %71 = arith.addf %70, %69 : vector<8x128xf32>
    %72 = arith.divf %70, %71 : vector<8x128xf32>
    %73 = arith.select %5, %67, %72 : vector<8x128xi1>, vector<8x128xf32>
    %74 = vector.extract_strided_slice %73 {offsets = [0, 0], sizes = [8, 32], strides = [1, 1]} : vector<8x128xf32> to vector<8x32xf32>
    %75 = vector.extract_strided_slice %73 {offsets = [0, 32], sizes = [8, 32], strides = [1, 1]} : vector<8x128xf32> to vector<8x32xf32>
    %76 = vector.extract_strided_slice %73 {offsets = [0, 64], sizes = [8, 32], strides = [1, 1]} : vector<8x128xf32> to vector<8x32xf32>
    %77 = vector.extract_strided_slice %73 {offsets = [0, 96], sizes = [8, 32], strides = [1, 1]} : vector<8x128xf32> to vector<8x32xf32>
    %78 = arith.mulf %75, %58 : vector<8x32xf32>
    %79 = arith.mulf %74, %76 : vector<8x32xf32>
    %80 = arith.addf %78, %79 : vector<8x32xf32>
    %81 = math.tanh %80 : vector<8x32xf32>
    %82 = arith.mulf %77, %81 : vector<8x32xf32>
    %c16_26 = arith.constant 16 : index
    %c0_27 = arith.constant 0 : index
    %83 = vector.load %arg21[%c16_26, %c0_27] : memref<64x32xf32, #tpu.memory_space<vmem>>, vector<8x32xf32>
    tpu.vector_store %arg21[%c16_26, %c0_27], %82 {strides = array<i32>} : memref<64x32xf32, #tpu.memory_space<vmem>>, vector<8x32xf32>,
    %c24 = arith.constant 24 : index
    %c0_28 = arith.constant 0 : index
    %84 = vector.load %arg20[%c24, %c0_28] : memref<64x128xbf16, #tpu.memory_space<vmem>>, vector<8x128xbf16>
    %85 = arith.extf %84 : vector<8x128xbf16> to vector<8x128xf32>
    %86 = arith.truncf %82 : vector<8x32xf32> to vector<8x32xbf16>
    %cst_29 = arith.constant dense<0.000000e+00> : vector<8x128xf32>
    %87 = tpu.matmul %86, %15, %cst_29 {dimension_numbers = #tpu.dot_dimension_numbers<[1], [0], [0], [1], [0, 0, 1, 1], [], []>} : vector<8x32xbf16>, vector<32x128xbf16>, vector<8x128xf32> -> vector<8x128xf32>
    %88 = arith.addf %85, %87 : vector<8x128xf32>
    %89 = math.tanh %88 : vector<8x128xf32>
    %90 = arith.negf %88 : vector<8x128xf32>
    %91 = math.exp %90 : vector<8x128xf32>
    %cst_30 = arith.constant 1.000000e+00 : f32
    %92 = vector.broadcast %cst_30 : f32 to vector<8x128xf32>
    %93 = arith.addf %92, %91 : vector<8x128xf32>
    %94 = arith.divf %92, %93 : vector<8x128xf32>
    %95 = arith.select %5, %89, %94 : vector<8x128xi1>, vector<8x128xf32>
    %96 = vector.extract_strided_slice %95 {offsets = [0, 0], sizes = [8, 32], strides = [1, 1]} : vector<8x128xf32> to vector<8x32xf32>
    %97 = vector.extract_strided_slice %95 {offsets = [0, 32], sizes = [8, 32], strides = [1, 1]} : vector<8x128xf32> to vector<8x32xf32>
    %98 = vector.extract_strided_slice %95 {offsets = [0, 64], sizes = [8, 32], strides = [1, 1]} : vector<8x128xf32> to vector<8x32xf32>
    %99 = vector.extract_strided_slice %95 {offsets = [0, 96], sizes = [8, 32], strides = [1, 1]} : vector<8x128xf32> to vector<8x32xf32>
    %100 = arith.mulf %97, %80 : vector<8x32xf32>
    %101 = arith.mulf %96, %98 : vector<8x32xf32>
    %102 = arith.addf %100, %101 : vector<8x32xf32>
    %103 = math.tanh %102 : vector<8x32xf32>
    %104 = arith.mulf %99, %103 : vector<8x32xf32>
    %c24_31 = arith.constant 24 : index
    %c0_32 = arith.constant 0 : index
    %105 = vector.load %arg21[%c24_31, %c0_32] : memref<64x32xf32, #tpu.memory_space<vmem>>, vector<8x32xf32>
    tpu.vector_store %arg21[%c24_31, %c0_32], %104 {strides = array<i32>} : memref<64x32xf32, #tpu.memory_space<vmem>>, vector<8x32xf32>,
    %c32 = arith.constant 32 : index
    %c0_33 = arith.constant 0 : index
    %106 = vector.load %arg20[%c32, %c0_33] : memref<64x128xbf16, #tpu.memory_space<vmem>>, vector<8x128xbf16>
    %107 = arith.extf %106 : vector<8x128xbf16> to vector<8x128xf32>
    %108 = arith.truncf %104 : vector<8x32xf32> to vector<8x32xbf16>
    %cst_34 = arith.constant dense<0.000000e+00> : vector<8x128xf32>
    %109 = tpu.matmul %108, %15, %cst_34 {dimension_numbers = #tpu.dot_dimension_numbers<[1], [0], [0], [1], [0, 0, 1, 1], [], []>} : vector<8x32xbf16>, vector<32x128xbf16>, vector<8x128xf32> -> vector<8x128xf32>
    %110 = arith.addf %107, %109 : vector<8x128xf32>
    %111 = math.tanh %110 : vector<8x128xf32>
    %112 = arith.negf %110 : vector<8x128xf32>
    %113 = math.exp %112 : vector<8x128xf32>
    %cst_35 = arith.constant 1.000000e+00 : f32
    %114 = vector.broadcast %cst_35 : f32 to vector<8x128xf32>
    %115 = arith.addf %114, %113 : vector<8x128xf32>
    %116 = arith.divf %114, %115 : vector<8x128xf32>
    %117 = arith.select %5, %111, %116 : vector<8x128xi1>, vector<8x128xf32>
    %118 = vector.extract_strided_slice %117 {offsets = [0, 0], sizes = [8, 32], strides = [1, 1]} : vector<8x128xf32> to vector<8x32xf32>
    %119 = vector.extract_strided_slice %117 {offsets = [0, 32], sizes = [8, 32], strides = [1, 1]} : vector<8x128xf32> to vector<8x32xf32>
    %120 = vector.extract_strided_slice %117 {offsets = [0, 64], sizes = [8, 32], strides = [1, 1]} : vector<8x128xf32> to vector<8x32xf32>
    %121 = vector.extract_strided_slice %117 {offsets = [0, 96], sizes = [8, 32], strides = [1, 1]} : vector<8x128xf32> to vector<8x32xf32>
    %122 = arith.mulf %119, %102 : vector<8x32xf32>
    %123 = arith.mulf %118, %120 : vector<8x32xf32>
    %124 = arith.addf %122, %123 : vector<8x32xf32>
    %125 = math.tanh %124 : vector<8x32xf32>
    %126 = arith.mulf %121, %125 : vector<8x32xf32>
    %c32_36 = arith.constant 32 : index
    %c0_37 = arith.constant 0 : index
    %127 = vector.load %arg21[%c32_36, %c0_37] : memref<64x32xf32, #tpu.memory_space<vmem>>, vector<8x32xf32>
    tpu.vector_store %arg21[%c32_36, %c0_37], %126 {strides = array<i32>} : memref<64x32xf32, #tpu.memory_space<vmem>>, vector<8x32xf32>,
    %c40 = arith.constant 40 : index
    %c0_38 = arith.constant 0 : index
    %128 = vector.load %arg20[%c40, %c0_38] : memref<64x128xbf16, #tpu.memory_space<vmem>>, vector<8x128xbf16>
    %129 = arith.extf %128 : vector<8x128xbf16> to vector<8x128xf32>
    %130 = arith.truncf %126 : vector<8x32xf32> to vector<8x32xbf16>
    %cst_39 = arith.constant dense<0.000000e+00> : vector<8x128xf32>
    %131 = tpu.matmul %130, %15, %cst_39 {dimension_numbers = #tpu.dot_dimension_numbers<[1], [0], [0], [1], [0, 0, 1, 1], [], []>} : vector<8x32xbf16>, vector<32x128xbf16>, vector<8x128xf32> -> vector<8x128xf32>
    %132 = arith.addf %129, %131 : vector<8x128xf32>
    %133 = math.tanh %132 : vector<8x128xf32>
    %134 = arith.negf %132 : vector<8x128xf32>
    %135 = math.exp %134 : vector<8x128xf32>
    %cst_40 = arith.constant 1.000000e+00 : f32
    %136 = vector.broadcast %cst_40 : f32 to vector<8x128xf32>
    %137 = arith.addf %136, %135 : vector<8x128xf32>
    %138 = arith.divf %136, %137 : vector<8x128xf32>
    %139 = arith.select %5, %133, %138 : vector<8x128xi1>, vector<8x128xf32>
    %140 = vector.extract_strided_slice %139 {offsets = [0, 0], sizes = [8, 32], strides = [1, 1]} : vector<8x128xf32> to vector<8x32xf32>
    %141 = vector.extract_strided_slice %139 {offsets = [0, 32], sizes = [8, 32], strides = [1, 1]} : vector<8x128xf32> to vector<8x32xf32>
    %142 = vector.extract_strided_slice %139 {offsets = [0, 64], sizes = [8, 32], strides = [1, 1]} : vector<8x128xf32> to vector<8x32xf32>
    %143 = vector.extract_strided_slice %139 {offsets = [0, 96], sizes = [8, 32], strides = [1, 1]} : vector<8x128xf32> to vector<8x32xf32>
    %144 = arith.mulf %141, %124 : vector<8x32xf32>
    %145 = arith.mulf %140, %142 : vector<8x32xf32>
    %146 = arith.addf %144, %145 : vector<8x32xf32>
    %147 = math.tanh %146 : vector<8x32xf32>
    %148 = arith.mulf %143, %147 : vector<8x32xf32>
    %c40_41 = arith.constant 40 : index
    %c0_42 = arith.constant 0 : index
    %149 = vector.load %arg21[%c40_41, %c0_42] : memref<64x32xf32, #tpu.memory_space<vmem>>, vector<8x32xf32>
    tpu.vector_store %arg21[%c40_41, %c0_42], %148 {strides = array<i32>} : memref<64x32xf32, #tpu.memory_space<vmem>>, vector<8x32xf32>,
    %c48 = arith.constant 48 : index
    %c0_43 = arith.constant 0 : index
    %150 = vector.load %arg20[%c48, %c0_43] : memref<64x128xbf16, #tpu.memory_space<vmem>>, vector<8x128xbf16>
    %151 = arith.extf %150 : vector<8x128xbf16> to vector<8x128xf32>
    %152 = arith.truncf %148 : vector<8x32xf32> to vector<8x32xbf16>
    %cst_44 = arith.constant dense<0.000000e+00> : vector<8x128xf32>
    %153 = tpu.matmul %152, %15, %cst_44 {dimension_numbers = #tpu.dot_dimension_numbers<[1], [0], [0], [1], [0, 0, 1, 1], [], []>} : vector<8x32xbf16>, vector<32x128xbf16>, vector<8x128xf32> -> vector<8x128xf32>
    %154 = arith.addf %151, %153 : vector<8x128xf32>
    %155 = math.tanh %154 : vector<8x128xf32>
    %156 = arith.negf %154 : vector<8x128xf32>
    %157 = math.exp %156 : vector<8x128xf32>
    %cst_45 = arith.constant 1.000000e+00 : f32
    %158 = vector.broadcast %cst_45 : f32 to vector<8x128xf32>
    %159 = arith.addf %158, %157 : vector<8x128xf32>
    %160 = arith.divf %158, %159 : vector<8x128xf32>
    %161 = arith.select %5, %155, %160 : vector<8x128xi1>, vector<8x128xf32>
    %162 = vector.extract_strided_slice %161 {offsets = [0, 0], sizes = [8, 32], strides = [1, 1]} : vector<8x128xf32> to vector<8x32xf32>
    %163 = vector.extract_strided_slice %161 {offsets = [0, 32], sizes = [8, 32], strides = [1, 1]} : vector<8x128xf32> to vector<8x32xf32>
    %164 = vector.extract_strided_slice %161 {offsets = [0, 64], sizes = [8, 32], strides = [1, 1]} : vector<8x128xf32> to vector<8x32xf32>
    %165 = vector.extract_strided_slice %161 {offsets = [0, 96], sizes = [8, 32], strides = [1, 1]} : vector<8x128xf32> to vector<8x32xf32>
    %166 = arith.mulf %163, %146 : vector<8x32xf32>
    %167 = arith.mulf %162, %164 : vector<8x32xf32>
    %168 = arith.addf %166, %167 : vector<8x32xf32>
    %169 = math.tanh %168 : vector<8x32xf32>
    %170 = arith.mulf %165, %169 : vector<8x32xf32>
    %c48_46 = arith.constant 48 : index
    %c0_47 = arith.constant 0 : index
    %171 = vector.load %arg21[%c48_46, %c0_47] : memref<64x32xf32, #tpu.memory_space<vmem>>, vector<8x32xf32>
    tpu.vector_store %arg21[%c48_46, %c0_47], %170 {strides = array<i32>} : memref<64x32xf32, #tpu.memory_space<vmem>>, vector<8x32xf32>,
    %c56 = arith.constant 56 : index
    %c0_48 = arith.constant 0 : index
    %172 = vector.load %arg20[%c56, %c0_48] : memref<64x128xbf16, #tpu.memory_space<vmem>>, vector<8x128xbf16>
    %173 = arith.extf %172 : vector<8x128xbf16> to vector<8x128xf32>
    %174 = arith.truncf %170 : vector<8x32xf32> to vector<8x32xbf16>
    %cst_49 = arith.constant dense<0.000000e+00> : vector<8x128xf32>
    %175 = tpu.matmul %174, %15, %cst_49 {dimension_numbers = #tpu.dot_dimension_numbers<[1], [0], [0], [1], [0, 0, 1, 1], [], []>} : vector<8x32xbf16>, vector<32x128xbf16>, vector<8x128xf32> -> vector<8x128xf32>
    %176 = arith.addf %173, %175 : vector<8x128xf32>
    %177 = math.tanh %176 : vector<8x128xf32>
    %178 = arith.negf %176 : vector<8x128xf32>
    %179 = math.exp %178 : vector<8x128xf32>
    %cst_50 = arith.constant 1.000000e+00 : f32
    %180 = vector.broadcast %cst_50 : f32 to vector<8x128xf32>
    %181 = arith.addf %180, %179 : vector<8x128xf32>
    %182 = arith.divf %180, %181 : vector<8x128xf32>
    %183 = arith.select %5, %177, %182 : vector<8x128xi1>, vector<8x128xf32>
    %184 = vector.extract_strided_slice %183 {offsets = [0, 0], sizes = [8, 32], strides = [1, 1]} : vector<8x128xf32> to vector<8x32xf32>
    %185 = vector.extract_strided_slice %183 {offsets = [0, 32], sizes = [8, 32], strides = [1, 1]} : vector<8x128xf32> to vector<8x32xf32>
    %186 = vector.extract_strided_slice %183 {offsets = [0, 64], sizes = [8, 32], strides = [1, 1]} : vector<8x128xf32> to vector<8x32xf32>
    %187 = vector.extract_strided_slice %183 {offsets = [0, 96], sizes = [8, 32], strides = [1, 1]} : vector<8x128xf32> to vector<8x32xf32>
    %188 = arith.mulf %185, %168 : vector<8x32xf32>
    %189 = arith.mulf %184, %186 : vector<8x32xf32>
    %190 = arith.addf %188, %189 : vector<8x32xf32>
    %191 = math.tanh %190 : vector<8x32xf32>
    %192 = arith.mulf %187, %191 : vector<8x32xf32>
    %c56_51 = arith.constant 56 : index
    %c0_52 = arith.constant 0 : index
    %193 = vector.load %arg21[%c56_51, %c0_52] : memref<64x32xf32, #tpu.memory_space<vmem>>, vector<8x32xf32>
    tpu.vector_store %arg21[%c56_51, %c0_52], %192 {strides = array<i32>} : memref<64x32xf32, #tpu.memory_space<vmem>>, vector<8x32xf32>,
    %c0_53 = arith.constant 0 : index
    %c0_54 = arith.constant 0 : index
    %194 = vector.load %arg21[%c0_53, %c0_54] : memref<64x32xf32, #tpu.memory_space<vmem>>, vector<64x32xf32>
    %195 = arith.truncf %194 : vector<64x32xf32> to vector<64x32xbf16>
    %c0_55 = arith.constant 0 : index
    %c0_56 = arith.constant 0 : index
    %196 = vector.load %arg5[%c0_55, %c0_56] : memref<32x128xbf16, #tpu.memory_space<vmem>>, vector<32x128xbf16>
    %cst_57 = arith.constant dense<0.000000e+00> : vector<64x128xf32>
    %197 = tpu.matmul %195, %196, %cst_57 {dimension_numbers = #tpu.dot_dimension_numbers<[1], [0], [0], [1], [0, 0, 1, 1], [], []>} : vector<64x32xbf16>, vector<32x128xbf16>, vector<64x128xf32> -> vector<64x128xf32>
    %c0_58 = arith.constant 0 : index
    %c0_59 = arith.constant 0 : index
    %198 = vector.load %arg7[%c0_58, %c0_59] : memref<1x128xf32, #tpu.memory_space<vmem>>, vector<1x128xf32>
    %199 = vector.broadcast %198 : vector<1x128xf32> to vector<64x128xf32>
    %200 = arith.addf %197, %199 : vector<64x128xf32>
    %201 = arith.truncf %200 : vector<64x128xf32> to vector<64x128xbf16>
    %c0_60 = arith.constant 0 : index
    %c0_61 = arith.constant 0 : index
    %202 = vector.load %arg20[%c0_60, %c0_61] : memref<64x128xbf16, #tpu.memory_space<vmem>>, vector<64x128xbf16>
    tpu.vector_store %arg20[%c0_60, %c0_61], %201 {strides = array<i32>} : memref<64x128xbf16, #tpu.memory_space<vmem>>, vector<64x128xbf16>,
    %c0_62 = arith.constant 0 : index
    %c0_63 = arith.constant 0 : index
    %203 = vector.load %arg6[%c0_62, %c0_63] : memref<32x128xbf16, #tpu.memory_space<vmem>>, vector<32x128xbf16>
    %cst_64 = arith.constant 0.000000e+00 : f32
    %204 = vector.broadcast %cst_64 : f32 to vector<8x32xf32>
    %cst_65 = arith.constant 0.000000e+00 : f32
    %205 = vector.broadcast %cst_65 : f32 to vector<8x32xf32>
    %c0_66 = arith.constant 0 : index
    %c0_67 = arith.constant 0 : index
    %206 = vector.load %arg20[%c0_66, %c0_67] : memref<64x128xbf16, #tpu.memory_space<vmem>>, vector<8x128xbf16>
    %207 = arith.extf %206 : vector<8x128xbf16> to vector<8x128xf32>
    %208 = arith.truncf %204 : vector<8x32xf32> to vector<8x32xbf16>
    %cst_68 = arith.constant dense<0.000000e+00> : vector<8x128xf32>
    %209 = tpu.matmul %208, %203, %cst_68 {dimension_numbers = #tpu.dot_dimension_numbers<[1], [0], [0], [1], [0, 0, 1, 1], [], []>} : vector<8x32xbf16>, vector<32x128xbf16>, vector<8x128xf32> -> vector<8x128xf32>
    %210 = arith.addf %207, %209 : vector<8x128xf32>
    %211 = math.tanh %210 : vector<8x128xf32>
    %212 = arith.negf %210 : vector<8x128xf32>
    %213 = math.exp %212 : vector<8x128xf32>
    %cst_69 = arith.constant 1.000000e+00 : f32
    %214 = vector.broadcast %cst_69 : f32 to vector<8x128xf32>
    %215 = arith.addf %214, %213 : vector<8x128xf32>
    %216 = arith.divf %214, %215 : vector<8x128xf32>
    %217 = arith.select %5, %211, %216 : vector<8x128xi1>, vector<8x128xf32>
    %218 = vector.extract_strided_slice %217 {offsets = [0, 0], sizes = [8, 32], strides = [1, 1]} : vector<8x128xf32> to vector<8x32xf32>
    %219 = vector.extract_strided_slice %217 {offsets = [0, 32], sizes = [8, 32], strides = [1, 1]} : vector<8x128xf32> to vector<8x32xf32>
    %220 = vector.extract_strided_slice %217 {offsets = [0, 64], sizes = [8, 32], strides = [1, 1]} : vector<8x128xf32> to vector<8x32xf32>
    %221 = vector.extract_strided_slice %217 {offsets = [0, 96], sizes = [8, 32], strides = [1, 1]} : vector<8x128xf32> to vector<8x32xf32>
    %222 = arith.mulf %219, %205 : vector<8x32xf32>
    %223 = arith.mulf %218, %220 : vector<8x32xf32>
    %224 = arith.addf %222, %223 : vector<8x32xf32>
    %225 = math.tanh %224 : vector<8x32xf32>
    %226 = arith.mulf %221, %225 : vector<8x32xf32>
    %c0_70 = arith.constant 0 : index
    %c0_71 = arith.constant 0 : index
    %227 = vector.load %arg21[%c0_70, %c0_71] : memref<64x32xf32, #tpu.memory_space<vmem>>, vector<8x32xf32>
    tpu.vector_store %arg21[%c0_70, %c0_71], %226 {strides = array<i32>} : memref<64x32xf32, #tpu.memory_space<vmem>>, vector<8x32xf32>,
    %c8_72 = arith.constant 8 : index
    %c0_73 = arith.constant 0 : index
    %228 = vector.load %arg20[%c8_72, %c0_73] : memref<64x128xbf16, #tpu.memory_space<vmem>>, vector<8x128xbf16>
    %229 = arith.extf %228 : vector<8x128xbf16> to vector<8x128xf32>
    %230 = arith.truncf %226 : vector<8x32xf32> to vector<8x32xbf16>
    %cst_74 = arith.constant dense<0.000000e+00> : vector<8x128xf32>
    %231 = tpu.matmul %230, %203, %cst_74 {dimension_numbers = #tpu.dot_dimension_numbers<[1], [0], [0], [1], [0, 0, 1, 1], [], []>} : vector<8x32xbf16>, vector<32x128xbf16>, vector<8x128xf32> -> vector<8x128xf32>
    %232 = arith.addf %229, %231 : vector<8x128xf32>
    %233 = math.tanh %232 : vector<8x128xf32>
    %234 = arith.negf %232 : vector<8x128xf32>
    %235 = math.exp %234 : vector<8x128xf32>
    %cst_75 = arith.constant 1.000000e+00 : f32
    %236 = vector.broadcast %cst_75 : f32 to vector<8x128xf32>
    %237 = arith.addf %236, %235 : vector<8x128xf32>
    %238 = arith.divf %236, %237 : vector<8x128xf32>
    %239 = arith.select %5, %233, %238 : vector<8x128xi1>, vector<8x128xf32>
    %240 = vector.extract_strided_slice %239 {offsets = [0, 0], sizes = [8, 32], strides = [1, 1]} : vector<8x128xf32> to vector<8x32xf32>
    %241 = vector.extract_strided_slice %239 {offsets = [0, 32], sizes = [8, 32], strides = [1, 1]} : vector<8x128xf32> to vector<8x32xf32>
    %242 = vector.extract_strided_slice %239 {offsets = [0, 64], sizes = [8, 32], strides = [1, 1]} : vector<8x128xf32> to vector<8x32xf32>
    %243 = vector.extract_strided_slice %239 {offsets = [0, 96], sizes = [8, 32], strides = [1, 1]} : vector<8x128xf32> to vector<8x32xf32>
    %244 = arith.mulf %241, %224 : vector<8x32xf32>
    %245 = arith.mulf %240, %242 : vector<8x32xf32>
    %246 = arith.addf %244, %245 : vector<8x32xf32>
    %247 = math.tanh %246 : vector<8x32xf32>
    %248 = arith.mulf %243, %247 : vector<8x32xf32>
    %c8_76 = arith.constant 8 : index
    %c0_77 = arith.constant 0 : index
    %249 = vector.load %arg21[%c8_76, %c0_77] : memref<64x32xf32, #tpu.memory_space<vmem>>, vector<8x32xf32>
    tpu.vector_store %arg21[%c8_76, %c0_77], %248 {strides = array<i32>} : memref<64x32xf32, #tpu.memory_space<vmem>>, vector<8x32xf32>,
    %c16_78 = arith.constant 16 : index
    %c0_79 = arith.constant 0 : index
    %250 = vector.load %arg20[%c16_78, %c0_79] : memref<64x128xbf16, #tpu.memory_space<vmem>>, vector<8x128xbf16>
    %251 = arith.extf %250 : vector<8x128xbf16> to vector<8x128xf32>
    %252 = arith.truncf %248 : vector<8x32xf32> to vector<8x32xbf16>
    %cst_80 = arith.constant dense<0.000000e+00> : vector<8x128xf32>
    %253 = tpu.matmul %252, %203, %cst_80 {dimension_numbers = #tpu.dot_dimension_numbers<[1], [0], [0], [1], [0, 0, 1, 1], [], []>} : vector<8x32xbf16>, vector<32x128xbf16>, vector<8x128xf32> -> vector<8x128xf32>
    %254 = arith.addf %251, %253 : vector<8x128xf32>
    %255 = math.tanh %254 : vector<8x128xf32>
    %256 = arith.negf %254 : vector<8x128xf32>
    %257 = math.exp %256 : vector<8x128xf32>
    %cst_81 = arith.constant 1.000000e+00 : f32
    %258 = vector.broadcast %cst_81 : f32 to vector<8x128xf32>
    %259 = arith.addf %258, %257 : vector<8x128xf32>
    %260 = arith.divf %258, %259 : vector<8x128xf32>
    %261 = arith.select %5, %255, %260 : vector<8x128xi1>, vector<8x128xf32>
    %262 = vector.extract_strided_slice %261 {offsets = [0, 0], sizes = [8, 32], strides = [1, 1]} : vector<8x128xf32> to vector<8x32xf32>
    %263 = vector.extract_strided_slice %261 {offsets = [0, 32], sizes = [8, 32], strides = [1, 1]} : vector<8x128xf32> to vector<8x32xf32>
    %264 = vector.extract_strided_slice %261 {offsets = [0, 64], sizes = [8, 32], strides = [1, 1]} : vector<8x128xf32> to vector<8x32xf32>
    %265 = vector.extract_strided_slice %261 {offsets = [0, 96], sizes = [8, 32], strides = [1, 1]} : vector<8x128xf32> to vector<8x32xf32>
    %266 = arith.mulf %263, %246 : vector<8x32xf32>
    %267 = arith.mulf %262, %264 : vector<8x32xf32>
    %268 = arith.addf %266, %267 : vector<8x32xf32>
    %269 = math.tanh %268 : vector<8x32xf32>
    %270 = arith.mulf %265, %269 : vector<8x32xf32>
    %c16_82 = arith.constant 16 : index
    %c0_83 = arith.constant 0 : index
    %271 = vector.load %arg21[%c16_82, %c0_83] : memref<64x32xf32, #tpu.memory_space<vmem>>, vector<8x32xf32>
    tpu.vector_store %arg21[%c16_82, %c0_83], %270 {strides = array<i32>} : memref<64x32xf32, #tpu.memory_space<vmem>>, vector<8x32xf32>,
    %c24_84 = arith.constant 24 : index
    %c0_85 = arith.constant 0 : index
    %272 = vector.load %arg20[%c24_84, %c0_85] : memref<64x128xbf16, #tpu.memory_space<vmem>>, vector<8x128xbf16>
    %273 = arith.extf %272 : vector<8x128xbf16> to vector<8x128xf32>
    %274 = arith.truncf %270 : vector<8x32xf32> to vector<8x32xbf16>
    %cst_86 = arith.constant dense<0.000000e+00> : vector<8x128xf32>
    %275 = tpu.matmul %274, %203, %cst_86 {dimension_numbers = #tpu.dot_dimension_numbers<[1], [0], [0], [1], [0, 0, 1, 1], [], []>} : vector<8x32xbf16>, vector<32x128xbf16>, vector<8x128xf32> -> vector<8x128xf32>
    %276 = arith.addf %273, %275 : vector<8x128xf32>
    %277 = math.tanh %276 : vector<8x128xf32>
    %278 = arith.negf %276 : vector<8x128xf32>
    %279 = math.exp %278 : vector<8x128xf32>
    %cst_87 = arith.constant 1.000000e+00 : f32
    %280 = vector.broadcast %cst_87 : f32 to vector<8x128xf32>
    %281 = arith.addf %280, %279 : vector<8x128xf32>
    %282 = arith.divf %280, %281 : vector<8x128xf32>
    %283 = arith.select %5, %277, %282 : vector<8x128xi1>, vector<8x128xf32>
    %284 = vector.extract_strided_slice %283 {offsets = [0, 0], sizes = [8, 32], strides = [1, 1]} : vector<8x128xf32> to vector<8x32xf32>
    %285 = vector.extract_strided_slice %283 {offsets = [0, 32], sizes = [8, 32], strides = [1, 1]} : vector<8x128xf32> to vector<8x32xf32>
    %286 = vector.extract_strided_slice %283 {offsets = [0, 64], sizes = [8, 32], strides = [1, 1]} : vector<8x128xf32> to vector<8x32xf32>
    %287 = vector.extract_strided_slice %283 {offsets = [0, 96], sizes = [8, 32], strides = [1, 1]} : vector<8x128xf32> to vector<8x32xf32>
    %288 = arith.mulf %285, %268 : vector<8x32xf32>
    %289 = arith.mulf %284, %286 : vector<8x32xf32>
    %290 = arith.addf %288, %289 : vector<8x32xf32>
    %291 = math.tanh %290 : vector<8x32xf32>
    %292 = arith.mulf %287, %291 : vector<8x32xf32>
    %c24_88 = arith.constant 24 : index
    %c0_89 = arith.constant 0 : index
    %293 = vector.load %arg21[%c24_88, %c0_89] : memref<64x32xf32, #tpu.memory_space<vmem>>, vector<8x32xf32>
    tpu.vector_store %arg21[%c24_88, %c0_89], %292 {strides = array<i32>} : memref<64x32xf32, #tpu.memory_space<vmem>>, vector<8x32xf32>,
    %c32_90 = arith.constant 32 : index
    %c0_91 = arith.constant 0 : index
    %294 = vector.load %arg20[%c32_90, %c0_91] : memref<64x128xbf16, #tpu.memory_space<vmem>>, vector<8x128xbf16>
    %295 = arith.extf %294 : vector<8x128xbf16> to vector<8x128xf32>
    %296 = arith.truncf %292 : vector<8x32xf32> to vector<8x32xbf16>
    %cst_92 = arith.constant dense<0.000000e+00> : vector<8x128xf32>
    %297 = tpu.matmul %296, %203, %cst_92 {dimension_numbers = #tpu.dot_dimension_numbers<[1], [0], [0], [1], [0, 0, 1, 1], [], []>} : vector<8x32xbf16>, vector<32x128xbf16>, vector<8x128xf32> -> vector<8x128xf32>
    %298 = arith.addf %295, %297 : vector<8x128xf32>
    %299 = math.tanh %298 : vector<8x128xf32>
    %300 = arith.negf %298 : vector<8x128xf32>
    %301 = math.exp %300 : vector<8x128xf32>
    %cst_93 = arith.constant 1.000000e+00 : f32
    %302 = vector.broadcast %cst_93 : f32 to vector<8x128xf32>
    %303 = arith.addf %302, %301 : vector<8x128xf32>
    %304 = arith.divf %302, %303 : vector<8x128xf32>
    %305 = arith.select %5, %299, %304 : vector<8x128xi1>, vector<8x128xf32>
    %306 = vector.extract_strided_slice %305 {offsets = [0, 0], sizes = [8, 32], strides = [1, 1]} : vector<8x128xf32> to vector<8x32xf32>
    %307 = vector.extract_strided_slice %305 {offsets = [0, 32], sizes = [8, 32], strides = [1, 1]} : vector<8x128xf32> to vector<8x32xf32>
    %308 = vector.extract_strided_slice %305 {offsets = [0, 64], sizes = [8, 32], strides = [1, 1]} : vector<8x128xf32> to vector<8x32xf32>
    %309 = vector.extract_strided_slice %305 {offsets = [0, 96], sizes = [8, 32], strides = [1, 1]} : vector<8x128xf32> to vector<8x32xf32>
    %310 = arith.mulf %307, %290 : vector<8x32xf32>
    %311 = arith.mulf %306, %308 : vector<8x32xf32>
    %312 = arith.addf %310, %311 : vector<8x32xf32>
    %313 = math.tanh %312 : vector<8x32xf32>
    %314 = arith.mulf %309, %313 : vector<8x32xf32>
    %c32_94 = arith.constant 32 : index
    %c0_95 = arith.constant 0 : index
    %315 = vector.load %arg21[%c32_94, %c0_95] : memref<64x32xf32, #tpu.memory_space<vmem>>, vector<8x32xf32>
    tpu.vector_store %arg21[%c32_94, %c0_95], %314 {strides = array<i32>} : memref<64x32xf32, #tpu.memory_space<vmem>>, vector<8x32xf32>,
    %c40_96 = arith.constant 40 : index
    %c0_97 = arith.constant 0 : index
    %316 = vector.load %arg20[%c40_96, %c0_97] : memref<64x128xbf16, #tpu.memory_space<vmem>>, vector<8x128xbf16>
    %317 = arith.extf %316 : vector<8x128xbf16> to vector<8x128xf32>
    %318 = arith.truncf %314 : vector<8x32xf32> to vector<8x32xbf16>
    %cst_98 = arith.constant dense<0.000000e+00> : vector<8x128xf32>
    %319 = tpu.matmul %318, %203, %cst_98 {dimension_numbers = #tpu.dot_dimension_numbers<[1], [0], [0], [1], [0, 0, 1, 1], [], []>} : vector<8x32xbf16>, vector<32x128xbf16>, vector<8x128xf32> -> vector<8x128xf32>
    %320 = arith.addf %317, %319 : vector<8x128xf32>
    %321 = math.tanh %320 : vector<8x128xf32>
    %322 = arith.negf %320 : vector<8x128xf32>
    %323 = math.exp %322 : vector<8x128xf32>
    %cst_99 = arith.constant 1.000000e+00 : f32
    %324 = vector.broadcast %cst_99 : f32 to vector<8x128xf32>
    %325 = arith.addf %324, %323 : vector<8x128xf32>
    %326 = arith.divf %324, %325 : vector<8x128xf32>
    %327 = arith.select %5, %321, %326 : vector<8x128xi1>, vector<8x128xf32>
    %328 = vector.extract_strided_slice %327 {offsets = [0, 0], sizes = [8, 32], strides = [1, 1]} : vector<8x128xf32> to vector<8x32xf32>
    %329 = vector.extract_strided_slice %327 {offsets = [0, 32], sizes = [8, 32], strides = [1, 1]} : vector<8x128xf32> to vector<8x32xf32>
    %330 = vector.extract_strided_slice %327 {offsets = [0, 64], sizes = [8, 32], strides = [1, 1]} : vector<8x128xf32> to vector<8x32xf32>
    %331 = vector.extract_strided_slice %327 {offsets = [0, 96], sizes = [8, 32], strides = [1, 1]} : vector<8x128xf32> to vector<8x32xf32>
    %332 = arith.mulf %329, %312 : vector<8x32xf32>
    %333 = arith.mulf %328, %330 : vector<8x32xf32>
    %334 = arith.addf %332, %333 : vector<8x32xf32>
    %335 = math.tanh %334 : vector<8x32xf32>
    %336 = arith.mulf %331, %335 : vector<8x32xf32>
    %c40_100 = arith.constant 40 : index
    %c0_101 = arith.constant 0 : index
    %337 = vector.load %arg21[%c40_100, %c0_101] : memref<64x32xf32, #tpu.memory_space<vmem>>, vector<8x32xf32>
    tpu.vector_store %arg21[%c40_100, %c0_101], %336 {strides = array<i32>} : memref<64x32xf32, #tpu.memory_space<vmem>>, vector<8x32xf32>,
    %c48_102 = arith.constant 48 : index
    %c0_103 = arith.constant 0 : index
    %338 = vector.load %arg20[%c48_102, %c0_103] : memref<64x128xbf16, #tpu.memory_space<vmem>>, vector<8x128xbf16>
    %339 = arith.extf %338 : vector<8x128xbf16> to vector<8x128xf32>
    %340 = arith.truncf %336 : vector<8x32xf32> to vector<8x32xbf16>
    %cst_104 = arith.constant dense<0.000000e+00> : vector<8x128xf32>
    %341 = tpu.matmul %340, %203, %cst_104 {dimension_numbers = #tpu.dot_dimension_numbers<[1], [0], [0], [1], [0, 0, 1, 1], [], []>} : vector<8x32xbf16>, vector<32x128xbf16>, vector<8x128xf32> -> vector<8x128xf32>
    %342 = arith.addf %339, %341 : vector<8x128xf32>
    %343 = math.tanh %342 : vector<8x128xf32>
    %344 = arith.negf %342 : vector<8x128xf32>
    %345 = math.exp %344 : vector<8x128xf32>
    %cst_105 = arith.constant 1.000000e+00 : f32
    %346 = vector.broadcast %cst_105 : f32 to vector<8x128xf32>
    %347 = arith.addf %346, %345 : vector<8x128xf32>
    %348 = arith.divf %346, %347 : vector<8x128xf32>
    %349 = arith.select %5, %343, %348 : vector<8x128xi1>, vector<8x128xf32>
    %350 = vector.extract_strided_slice %349 {offsets = [0, 0], sizes = [8, 32], strides = [1, 1]} : vector<8x128xf32> to vector<8x32xf32>
    %351 = vector.extract_strided_slice %349 {offsets = [0, 32], sizes = [8, 32], strides = [1, 1]} : vector<8x128xf32> to vector<8x32xf32>
    %352 = vector.extract_strided_slice %349 {offsets = [0, 64], sizes = [8, 32], strides = [1, 1]} : vector<8x128xf32> to vector<8x32xf32>
    %353 = vector.extract_strided_slice %349 {offsets = [0, 96], sizes = [8, 32], strides = [1, 1]} : vector<8x128xf32> to vector<8x32xf32>
    %354 = arith.mulf %351, %334 : vector<8x32xf32>
    %355 = arith.mulf %350, %352 : vector<8x32xf32>
    %356 = arith.addf %354, %355 : vector<8x32xf32>
    %357 = math.tanh %356 : vector<8x32xf32>
    %358 = arith.mulf %353, %357 : vector<8x32xf32>
    %c48_106 = arith.constant 48 : index
    %c0_107 = arith.constant 0 : index
    %359 = vector.load %arg21[%c48_106, %c0_107] : memref<64x32xf32, #tpu.memory_space<vmem>>, vector<8x32xf32>
    tpu.vector_store %arg21[%c48_106, %c0_107], %358 {strides = array<i32>} : memref<64x32xf32, #tpu.memory_space<vmem>>, vector<8x32xf32>,
    %c56_108 = arith.constant 56 : index
    %c0_109 = arith.constant 0 : index
    %360 = vector.load %arg20[%c56_108, %c0_109] : memref<64x128xbf16, #tpu.memory_space<vmem>>, vector<8x128xbf16>
    %361 = arith.extf %360 : vector<8x128xbf16> to vector<8x128xf32>
    %362 = arith.truncf %358 : vector<8x32xf32> to vector<8x32xbf16>
    %cst_110 = arith.constant dense<0.000000e+00> : vector<8x128xf32>
    %363 = tpu.matmul %362, %203, %cst_110 {dimension_numbers = #tpu.dot_dimension_numbers<[1], [0], [0], [1], [0, 0, 1, 1], [], []>} : vector<8x32xbf16>, vector<32x128xbf16>, vector<8x128xf32> -> vector<8x128xf32>
    %364 = arith.addf %361, %363 : vector<8x128xf32>
    %365 = math.tanh %364 : vector<8x128xf32>
    %366 = arith.negf %364 : vector<8x128xf32>
    %367 = math.exp %366 : vector<8x128xf32>
    %cst_111 = arith.constant 1.000000e+00 : f32
    %368 = vector.broadcast %cst_111 : f32 to vector<8x128xf32>
    %369 = arith.addf %368, %367 : vector<8x128xf32>
    %370 = arith.divf %368, %369 : vector<8x128xf32>
    %371 = arith.select %5, %365, %370 : vector<8x128xi1>, vector<8x128xf32>
    %372 = vector.extract_strided_slice %371 {offsets = [0, 0], sizes = [8, 32], strides = [1, 1]} : vector<8x128xf32> to vector<8x32xf32>
    %373 = vector.extract_strided_slice %371 {offsets = [0, 32], sizes = [8, 32], strides = [1, 1]} : vector<8x128xf32> to vector<8x32xf32>
    %374 = vector.extract_strided_slice %371 {offsets = [0, 64], sizes = [8, 32], strides = [1, 1]} : vector<8x128xf32> to vector<8x32xf32>
    %375 = vector.extract_strided_slice %371 {offsets = [0, 96], sizes = [8, 32], strides = [1, 1]} : vector<8x128xf32> to vector<8x32xf32>
    %376 = arith.mulf %373, %356 : vector<8x32xf32>
    %377 = arith.mulf %372, %374 : vector<8x32xf32>
    %378 = arith.addf %376, %377 : vector<8x32xf32>
    %379 = math.tanh %378 : vector<8x32xf32>
    %380 = arith.mulf %375, %379 : vector<8x32xf32>
    %c56_112 = arith.constant 56 : index
    %c0_113 = arith.constant 0 : index
    %381 = vector.load %arg21[%c56_112, %c0_113] : memref<64x32xf32, #tpu.memory_space<vmem>>, vector<8x32xf32>
    tpu.vector_store %arg21[%c56_112, %c0_113], %380 {strides = array<i32>} : memref<64x32xf32, #tpu.memory_space<vmem>>, vector<8x32xf32>,
    %c0_114 = arith.constant 0 : index
    %c0_115 = arith.constant 0 : index
    %382 = vector.load %arg21[%c0_114, %c0_115] : memref<64x32xf32, #tpu.memory_space<vmem>>, vector<64x32xf32>
    %383 = arith.truncf %382 : vector<64x32xf32> to vector<64x32xbf16>
    %c0_116 = arith.constant 0 : index
    %c0_117 = arith.constant 0 : index
    %384 = vector.load %arg8[%c0_116, %c0_117] : memref<32x128xbf16, #tpu.memory_space<vmem>>, vector<32x128xbf16>
    %cst_118 = arith.constant dense<0.000000e+00> : vector<64x128xf32>
    %385 = tpu.matmul %383, %384, %cst_118 {dimension_numbers = #tpu.dot_dimension_numbers<[1], [0], [0], [1], [0, 0, 1, 1], [], []>} : vector<64x32xbf16>, vector<32x128xbf16>, vector<64x128xf32> -> vector<64x128xf32>
    %c0_119 = arith.constant 0 : index
    %c0_120 = arith.constant 0 : index
    %386 = vector.load %arg10[%c0_119, %c0_120] : memref<1x128xf32, #tpu.memory_space<vmem>>, vector<1x128xf32>
    %387 = vector.broadcast %386 : vector<1x128xf32> to vector<64x128xf32>
    %388 = arith.addf %385, %387 : vector<64x128xf32>
    %389 = arith.truncf %388 : vector<64x128xf32> to vector<64x128xbf16>
    %c0_121 = arith.constant 0 : index
    %c0_122 = arith.constant 0 : index
    %390 = vector.load %arg20[%c0_121, %c0_122] : memref<64x128xbf16, #tpu.memory_space<vmem>>, vector<64x128xbf16>
    tpu.vector_store %arg20[%c0_121, %c0_122], %389 {strides = array<i32>} : memref<64x128xbf16, #tpu.memory_space<vmem>>, vector<64x128xbf16>,
    %c0_123 = arith.constant 0 : index
    %c0_124 = arith.constant 0 : index
    %391 = vector.load %arg9[%c0_123, %c0_124] : memref<32x128xbf16, #tpu.memory_space<vmem>>, vector<32x128xbf16>
    %cst_125 = arith.constant 0.000000e+00 : f32
    %392 = vector.broadcast %cst_125 : f32 to vector<8x32xf32>
    %cst_126 = arith.constant 0.000000e+00 : f32
    %393 = vector.broadcast %cst_126 : f32 to vector<8x32xf32>
    %c0_127 = arith.constant 0 : index
    %c0_128 = arith.constant 0 : index
    %394 = vector.load %arg11[%c0_127, %c0_128] : memref<32x1xbf16, #tpu.memory_space<vmem>>, vector<32x1xbf16>
    %c0_129 = arith.constant 0 : index
    %c0_130 = arith.constant 0 : index
    %395 = vector.load %arg12[%c0_129, %c0_130] : memref<1x1xf32, #tpu.memory_space<vmem>>, vector<1x1xf32>
    %cst_131 = arith.constant 0xFF800000 : f32
    %396 = vector.broadcast %cst_131 : f32 to vector<8x1xf32>
    %cst_132 = arith.constant 0.000000e+00 : f32
    %397 = vector.broadcast %cst_132 : f32 to vector<8x1xf32>
    %cst_133 = arith.constant 0.000000e+00 : f32
    %398 = vector.broadcast %cst_133 : f32 to vector<8x32xf32>
    %c0_134 = arith.constant 0 : index
    %c0_135 = arith.constant 0 : index
    %399 = vector.load %arg20[%c0_134, %c0_135] : memref<64x128xbf16, #tpu.memory_space<vmem>>, vector<8x128xbf16>
    %400 = arith.extf %399 : vector<8x128xbf16> to vector<8x128xf32>
    %401 = arith.truncf %392 : vector<8x32xf32> to vector<8x32xbf16>
    %cst_136 = arith.constant dense<0.000000e+00> : vector<8x128xf32>
    %402 = tpu.matmul %401, %391, %cst_136 {dimension_numbers = #tpu.dot_dimension_numbers<[1], [0], [0], [1], [0, 0, 1, 1], [], []>} : vector<8x32xbf16>, vector<32x128xbf16>, vector<8x128xf32> -> vector<8x128xf32>
    %403 = arith.addf %400, %402 : vector<8x128xf32>
    %404 = math.tanh %403 : vector<8x128xf32>
    %405 = arith.negf %403 : vector<8x128xf32>
    %406 = math.exp %405 : vector<8x128xf32>
    %cst_137 = arith.constant 1.000000e+00 : f32
    %407 = vector.broadcast %cst_137 : f32 to vector<8x128xf32>
    %408 = arith.addf %407, %406 : vector<8x128xf32>
    %409 = arith.divf %407, %408 : vector<8x128xf32>
    %410 = arith.select %5, %404, %409 : vector<8x128xi1>, vector<8x128xf32>
    %411 = vector.extract_strided_slice %410 {offsets = [0, 0], sizes = [8, 32], strides = [1, 1]} : vector<8x128xf32> to vector<8x32xf32>
    %412 = vector.extract_strided_slice %410 {offsets = [0, 32], sizes = [8, 32], strides = [1, 1]} : vector<8x128xf32> to vector<8x32xf32>
    %413 = vector.extract_strided_slice %410 {offsets = [0, 64], sizes = [8, 32], strides = [1, 1]} : vector<8x128xf32> to vector<8x32xf32>
    %414 = vector.extract_strided_slice %410 {offsets = [0, 96], sizes = [8, 32], strides = [1, 1]} : vector<8x128xf32> to vector<8x32xf32>
    %415 = arith.mulf %412, %393 : vector<8x32xf32>
    %416 = arith.mulf %411, %413 : vector<8x32xf32>
    %417 = arith.addf %415, %416 : vector<8x32xf32>
    %418 = math.tanh %417 : vector<8x32xf32>
    %419 = arith.mulf %414, %418 : vector<8x32xf32>
    %420 = arith.truncf %419 : vector<8x32xf32> to vector<8x32xbf16>
    %cst_138 = arith.constant dense<0.000000e+00> : vector<8x1xf32>
    %421 = tpu.matmul %420, %394, %cst_138 {dimension_numbers = #tpu.dot_dimension_numbers<[1], [0], [0], [1], [0, 0, 1, 1], [], []>} : vector<8x32xbf16>, vector<32x1xbf16>, vector<8x1xf32> -> vector<8x1xf32>
    %422 = vector.broadcast %395 : vector<1x1xf32> to vector<8x1xf32>
    %423 = arith.addf %421, %422 : vector<8x1xf32>
    %cst_139 = arith.constant 0.176776692 : f32
    %424 = vector.broadcast %cst_139 : f32 to vector<8x1xf32>
    %425 = arith.mulf %423, %424 : vector<8x1xf32>
    %426 = arith.maximumf %396, %425 : vector<8x1xf32>
    %427 = arith.subf %396, %426 : vector<8x1xf32>
    %428 = math.exp %427 : vector<8x1xf32>
    %429 = arith.subf %425, %426 : vector<8x1xf32>
    %430 = math.exp %429 : vector<8x1xf32>
    %431 = arith.mulf %428, %397 : vector<8x1xf32>
    %432 = arith.addf %431, %430 : vector<8x1xf32>
    %433 = vector.broadcast %428 : vector<8x1xf32> to vector<8x32xf32>
    %434 = arith.mulf %433, %398 : vector<8x32xf32>
    %435 = vector.broadcast %430 : vector<8x1xf32> to vector<8x32xf32>
    %436 = arith.mulf %435, %419 : vector<8x32xf32>
    %437 = arith.addf %434, %436 : vector<8x32xf32>
    %c8_140 = arith.constant 8 : index
    %c0_141 = arith.constant 0 : index
    %438 = vector.load %arg20[%c8_140, %c0_141] : memref<64x128xbf16, #tpu.memory_space<vmem>>, vector<8x128xbf16>
    %439 = arith.extf %438 : vector<8x128xbf16> to vector<8x128xf32>
    %440 = arith.truncf %419 : vector<8x32xf32> to vector<8x32xbf16>
    %cst_142 = arith.constant dense<0.000000e+00> : vector<8x128xf32>
    %441 = tpu.matmul %440, %391, %cst_142 {dimension_numbers = #tpu.dot_dimension_numbers<[1], [0], [0], [1], [0, 0, 1, 1], [], []>} : vector<8x32xbf16>, vector<32x128xbf16>, vector<8x128xf32> -> vector<8x128xf32>
    %442 = arith.addf %439, %441 : vector<8x128xf32>
    %443 = math.tanh %442 : vector<8x128xf32>
    %444 = arith.negf %442 : vector<8x128xf32>
    %445 = math.exp %444 : vector<8x128xf32>
    %cst_143 = arith.constant 1.000000e+00 : f32
    %446 = vector.broadcast %cst_143 : f32 to vector<8x128xf32>
    %447 = arith.addf %446, %445 : vector<8x128xf32>
    %448 = arith.divf %446, %447 : vector<8x128xf32>
    %449 = arith.select %5, %443, %448 : vector<8x128xi1>, vector<8x128xf32>
    %450 = vector.extract_strided_slice %449 {offsets = [0, 0], sizes = [8, 32], strides = [1, 1]} : vector<8x128xf32> to vector<8x32xf32>
    %451 = vector.extract_strided_slice %449 {offsets = [0, 32], sizes = [8, 32], strides = [1, 1]} : vector<8x128xf32> to vector<8x32xf32>
    %452 = vector.extract_strided_slice %449 {offsets = [0, 64], sizes = [8, 32], strides = [1, 1]} : vector<8x128xf32> to vector<8x32xf32>
    %453 = vector.extract_strided_slice %449 {offsets = [0, 96], sizes = [8, 32], strides = [1, 1]} : vector<8x128xf32> to vector<8x32xf32>
    %454 = arith.mulf %451, %417 : vector<8x32xf32>
    %455 = arith.mulf %450, %452 : vector<8x32xf32>
    %456 = arith.addf %454, %455 : vector<8x32xf32>
    %457 = math.tanh %456 : vector<8x32xf32>
    %458 = arith.mulf %453, %457 : vector<8x32xf32>
    %459 = arith.truncf %458 : vector<8x32xf32> to vector<8x32xbf16>
    %cst_144 = arith.constant dense<0.000000e+00> : vector<8x1xf32>
    %460 = tpu.matmul %459, %394, %cst_144 {dimension_numbers = #tpu.dot_dimension_numbers<[1], [0], [0], [1], [0, 0, 1, 1], [], []>} : vector<8x32xbf16>, vector<32x1xbf16>, vector<8x1xf32> -> vector<8x1xf32>
    %461 = vector.broadcast %395 : vector<1x1xf32> to vector<8x1xf32>
    %462 = arith.addf %460, %461 : vector<8x1xf32>
    %cst_145 = arith.constant 0.176776692 : f32
    %463 = vector.broadcast %cst_145 : f32 to vector<8x1xf32>
    %464 = arith.mulf %462, %463 : vector<8x1xf32>
    %465 = arith.maximumf %426, %464 : vector<8x1xf32>
    %466 = arith.subf %426, %465 : vector<8x1xf32>
    %467 = math.exp %466 : vector<8x1xf32>
    %468 = arith.subf %464, %465 : vector<8x1xf32>
    %469 = math.exp %468 : vector<8x1xf32>
    %470 = arith.mulf %467, %432 : vector<8x1xf32>
    %471 = arith.addf %470, %469 : vector<8x1xf32>
    %472 = vector.broadcast %467 : vector<8x1xf32> to vector<8x32xf32>
    %473 = arith.mulf %472, %437 : vector<8x32xf32>
    %474 = vector.broadcast %469 : vector<8x1xf32> to vector<8x32xf32>
    %475 = arith.mulf %474, %458 : vector<8x32xf32>
    %476 = arith.addf %473, %475 : vector<8x32xf32>
    %c16_146 = arith.constant 16 : index
    %c0_147 = arith.constant 0 : index
    %477 = vector.load %arg20[%c16_146, %c0_147] : memref<64x128xbf16, #tpu.memory_space<vmem>>, vector<8x128xbf16>
    %478 = arith.extf %477 : vector<8x128xbf16> to vector<8x128xf32>
    %479 = arith.truncf %458 : vector<8x32xf32> to vector<8x32xbf16>
    %cst_148 = arith.constant dense<0.000000e+00> : vector<8x128xf32>
    %480 = tpu.matmul %479, %391, %cst_148 {dimension_numbers = #tpu.dot_dimension_numbers<[1], [0], [0], [1], [0, 0, 1, 1], [], []>} : vector<8x32xbf16>, vector<32x128xbf16>, vector<8x128xf32> -> vector<8x128xf32>
    %481 = arith.addf %478, %480 : vector<8x128xf32>
    %482 = math.tanh %481 : vector<8x128xf32>
    %483 = arith.negf %481 : vector<8x128xf32>
    %484 = math.exp %483 : vector<8x128xf32>
    %cst_149 = arith.constant 1.000000e+00 : f32
    %485 = vector.broadcast %cst_149 : f32 to vector<8x128xf32>
    %486 = arith.addf %485, %484 : vector<8x128xf32>
    %487 = arith.divf %485, %486 : vector<8x128xf32>
    %488 = arith.select %5, %482, %487 : vector<8x128xi1>, vector<8x128xf32>
    %489 = vector.extract_strided_slice %488 {offsets = [0, 0], sizes = [8, 32], strides = [1, 1]} : vector<8x128xf32> to vector<8x32xf32>
    %490 = vector.extract_strided_slice %488 {offsets = [0, 32], sizes = [8, 32], strides = [1, 1]} : vector<8x128xf32> to vector<8x32xf32>
    %491 = vector.extract_strided_slice %488 {offsets = [0, 64], sizes = [8, 32], strides = [1, 1]} : vector<8x128xf32> to vector<8x32xf32>
    %492 = vector.extract_strided_slice %488 {offsets = [0, 96], sizes = [8, 32], strides = [1, 1]} : vector<8x128xf32> to vector<8x32xf32>
    %493 = arith.mulf %490, %456 : vector<8x32xf32>
    %494 = arith.mulf %489, %491 : vector<8x32xf32>
    %495 = arith.addf %493, %494 : vector<8x32xf32>
    %496 = math.tanh %495 : vector<8x32xf32>
    %497 = arith.mulf %492, %496 : vector<8x32xf32>
    %498 = arith.truncf %497 : vector<8x32xf32> to vector<8x32xbf16>
    %cst_150 = arith.constant dense<0.000000e+00> : vector<8x1xf32>
    %499 = tpu.matmul %498, %394, %cst_150 {dimension_numbers = #tpu.dot_dimension_numbers<[1], [0], [0], [1], [0, 0, 1, 1], [], []>} : vector<8x32xbf16>, vector<32x1xbf16>, vector<8x1xf32> -> vector<8x1xf32>
    %500 = vector.broadcast %395 : vector<1x1xf32> to vector<8x1xf32>
    %501 = arith.addf %499, %500 : vector<8x1xf32>
    %cst_151 = arith.constant 0.176776692 : f32
    %502 = vector.broadcast %cst_151 : f32 to vector<8x1xf32>
    %503 = arith.mulf %501, %502 : vector<8x1xf32>
    %504 = arith.maximumf %465, %503 : vector<8x1xf32>
    %505 = arith.subf %465, %504 : vector<8x1xf32>
    %506 = math.exp %505 : vector<8x1xf32>
    %507 = arith.subf %503, %504 : vector<8x1xf32>
    %508 = math.exp %507 : vector<8x1xf32>
    %509 = arith.mulf %506, %471 : vector<8x1xf32>
    %510 = arith.addf %509, %508 : vector<8x1xf32>
    %511 = vector.broadcast %506 : vector<8x1xf32> to vector<8x32xf32>
    %512 = arith.mulf %511, %476 : vector<8x32xf32>
    %513 = vector.broadcast %508 : vector<8x1xf32> to vector<8x32xf32>
    %514 = arith.mulf %513, %497 : vector<8x32xf32>
    %515 = arith.addf %512, %514 : vector<8x32xf32>
    %c24_152 = arith.constant 24 : index
    %c0_153 = arith.constant 0 : index
    %516 = vector.load %arg20[%c24_152, %c0_153] : memref<64x128xbf16, #tpu.memory_space<vmem>>, vector<8x128xbf16>
    %517 = arith.extf %516 : vector<8x128xbf16> to vector<8x128xf32>
    %518 = arith.truncf %497 : vector<8x32xf32> to vector<8x32xbf16>
    %cst_154 = arith.constant dense<0.000000e+00> : vector<8x128xf32>
    %519 = tpu.matmul %518, %391, %cst_154 {dimension_numbers = #tpu.dot_dimension_numbers<[1], [0], [0], [1], [0, 0, 1, 1], [], []>} : vector<8x32xbf16>, vector<32x128xbf16>, vector<8x128xf32> -> vector<8x128xf32>
    %520 = arith.addf %517, %519 : vector<8x128xf32>
    %521 = math.tanh %520 : vector<8x128xf32>
    %522 = arith.negf %520 : vector<8x128xf32>
    %523 = math.exp %522 : vector<8x128xf32>
    %cst_155 = arith.constant 1.000000e+00 : f32
    %524 = vector.broadcast %cst_155 : f32 to vector<8x128xf32>
    %525 = arith.addf %524, %523 : vector<8x128xf32>
    %526 = arith.divf %524, %525 : vector<8x128xf32>
    %527 = arith.select %5, %521, %526 : vector<8x128xi1>, vector<8x128xf32>
    %528 = vector.extract_strided_slice %527 {offsets = [0, 0], sizes = [8, 32], strides = [1, 1]} : vector<8x128xf32> to vector<8x32xf32>
    %529 = vector.extract_strided_slice %527 {offsets = [0, 32], sizes = [8, 32], strides = [1, 1]} : vector<8x128xf32> to vector<8x32xf32>
    %530 = vector.extract_strided_slice %527 {offsets = [0, 64], sizes = [8, 32], strides = [1, 1]} : vector<8x128xf32> to vector<8x32xf32>
    %531 = vector.extract_strided_slice %527 {offsets = [0, 96], sizes = [8, 32], strides = [1, 1]} : vector<8x128xf32> to vector<8x32xf32>
    %532 = arith.mulf %529, %495 : vector<8x32xf32>
    %533 = arith.mulf %528, %530 : vector<8x32xf32>
    %534 = arith.addf %532, %533 : vector<8x32xf32>
    %535 = math.tanh %534 : vector<8x32xf32>
    %536 = arith.mulf %531, %535 : vector<8x32xf32>
    %537 = arith.truncf %536 : vector<8x32xf32> to vector<8x32xbf16>
    %cst_156 = arith.constant dense<0.000000e+00> : vector<8x1xf32>
    %538 = tpu.matmul %537, %394, %cst_156 {dimension_numbers = #tpu.dot_dimension_numbers<[1], [0], [0], [1], [0, 0, 1, 1], [], []>} : vector<8x32xbf16>, vector<32x1xbf16>, vector<8x1xf32> -> vector<8x1xf32>
    %539 = vector.broadcast %395 : vector<1x1xf32> to vector<8x1xf32>
    %540 = arith.addf %538, %539 : vector<8x1xf32>
    %cst_157 = arith.constant 0.176776692 : f32
    %541 = vector.broadcast %cst_157 : f32 to vector<8x1xf32>
    %542 = arith.mulf %540, %541 : vector<8x1xf32>
    %543 = arith.maximumf %504, %542 : vector<8x1xf32>
    %544 = arith.subf %504, %543 : vector<8x1xf32>
    %545 = math.exp %544 : vector<8x1xf32>
    %546 = arith.subf %542, %543 : vector<8x1xf32>
    %547 = math.exp %546 : vector<8x1xf32>
    %548 = arith.mulf %545, %510 : vector<8x1xf32>
    %549 = arith.addf %548, %547 : vector<8x1xf32>
    %550 = vector.broadcast %545 : vector<8x1xf32> to vector<8x32xf32>
    %551 = arith.mulf %550, %515 : vector<8x32xf32>
    %552 = vector.broadcast %547 : vector<8x1xf32> to vector<8x32xf32>
    %553 = arith.mulf %552, %536 : vector<8x32xf32>
    %554 = arith.addf %551, %553 : vector<8x32xf32>
    %c32_158 = arith.constant 32 : index
    %c0_159 = arith.constant 0 : index
    %555 = vector.load %arg20[%c32_158, %c0_159] : memref<64x128xbf16, #tpu.memory_space<vmem>>, vector<8x128xbf16>
    %556 = arith.extf %555 : vector<8x128xbf16> to vector<8x128xf32>
    %557 = arith.truncf %536 : vector<8x32xf32> to vector<8x32xbf16>
    %cst_160 = arith.constant dense<0.000000e+00> : vector<8x128xf32>
    %558 = tpu.matmul %557, %391, %cst_160 {dimension_numbers = #tpu.dot_dimension_numbers<[1], [0], [0], [1], [0, 0, 1, 1], [], []>} : vector<8x32xbf16>, vector<32x128xbf16>, vector<8x128xf32> -> vector<8x128xf32>
    %559 = arith.addf %556, %558 : vector<8x128xf32>
    %560 = math.tanh %559 : vector<8x128xf32>
    %561 = arith.negf %559 : vector<8x128xf32>
    %562 = math.exp %561 : vector<8x128xf32>
    %cst_161 = arith.constant 1.000000e+00 : f32
    %563 = vector.broadcast %cst_161 : f32 to vector<8x128xf32>
    %564 = arith.addf %563, %562 : vector<8x128xf32>
    %565 = arith.divf %563, %564 : vector<8x128xf32>
    %566 = arith.select %5, %560, %565 : vector<8x128xi1>, vector<8x128xf32>
    %567 = vector.extract_strided_slice %566 {offsets = [0, 0], sizes = [8, 32], strides = [1, 1]} : vector<8x128xf32> to vector<8x32xf32>
    %568 = vector.extract_strided_slice %566 {offsets = [0, 32], sizes = [8, 32], strides = [1, 1]} : vector<8x128xf32> to vector<8x32xf32>
    %569 = vector.extract_strided_slice %566 {offsets = [0, 64], sizes = [8, 32], strides = [1, 1]} : vector<8x128xf32> to vector<8x32xf32>
    %570 = vector.extract_strided_slice %566 {offsets = [0, 96], sizes = [8, 32], strides = [1, 1]} : vector<8x128xf32> to vector<8x32xf32>
    %571 = arith.mulf %568, %534 : vector<8x32xf32>
    %572 = arith.mulf %567, %569 : vector<8x32xf32>
    %573 = arith.addf %571, %572 : vector<8x32xf32>
    %574 = math.tanh %573 : vector<8x32xf32>
    %575 = arith.mulf %570, %574 : vector<8x32xf32>
    %576 = arith.truncf %575 : vector<8x32xf32> to vector<8x32xbf16>
    %cst_162 = arith.constant dense<0.000000e+00> : vector<8x1xf32>
    %577 = tpu.matmul %576, %394, %cst_162 {dimension_numbers = #tpu.dot_dimension_numbers<[1], [0], [0], [1], [0, 0, 1, 1], [], []>} : vector<8x32xbf16>, vector<32x1xbf16>, vector<8x1xf32> -> vector<8x1xf32>
    %578 = vector.broadcast %395 : vector<1x1xf32> to vector<8x1xf32>
    %579 = arith.addf %577, %578 : vector<8x1xf32>
    %cst_163 = arith.constant 0.176776692 : f32
    %580 = vector.broadcast %cst_163 : f32 to vector<8x1xf32>
    %581 = arith.mulf %579, %580 : vector<8x1xf32>
    %582 = arith.maximumf %543, %581 : vector<8x1xf32>
    %583 = arith.subf %543, %582 : vector<8x1xf32>
    %584 = math.exp %583 : vector<8x1xf32>
    %585 = arith.subf %581, %582 : vector<8x1xf32>
    %586 = math.exp %585 : vector<8x1xf32>
    %587 = arith.mulf %584, %549 : vector<8x1xf32>
    %588 = arith.addf %587, %586 : vector<8x1xf32>
    %589 = vector.broadcast %584 : vector<8x1xf32> to vector<8x32xf32>
    %590 = arith.mulf %589, %554 : vector<8x32xf32>
    %591 = vector.broadcast %586 : vector<8x1xf32> to vector<8x32xf32>
    %592 = arith.mulf %591, %575 : vector<8x32xf32>
    %593 = arith.addf %590, %592 : vector<8x32xf32>
    %c40_164 = arith.constant 40 : index
    %c0_165 = arith.constant 0 : index
    %594 = vector.load %arg20[%c40_164, %c0_165] : memref<64x128xbf16, #tpu.memory_space<vmem>>, vector<8x128xbf16>
    %595 = arith.extf %594 : vector<8x128xbf16> to vector<8x128xf32>
    %596 = arith.truncf %575 : vector<8x32xf32> to vector<8x32xbf16>
    %cst_166 = arith.constant dense<0.000000e+00> : vector<8x128xf32>
    %597 = tpu.matmul %596, %391, %cst_166 {dimension_numbers = #tpu.dot_dimension_numbers<[1], [0], [0], [1], [0, 0, 1, 1], [], []>} : vector<8x32xbf16>, vector<32x128xbf16>, vector<8x128xf32> -> vector<8x128xf32>
    %598 = arith.addf %595, %597 : vector<8x128xf32>
    %599 = math.tanh %598 : vector<8x128xf32>
    %600 = arith.negf %598 : vector<8x128xf32>
    %601 = math.exp %600 : vector<8x128xf32>
    %cst_167 = arith.constant 1.000000e+00 : f32
    %602 = vector.broadcast %cst_167 : f32 to vector<8x128xf32>
    %603 = arith.addf %602, %601 : vector<8x128xf32>
    %604 = arith.divf %602, %603 : vector<8x128xf32>
    %605 = arith.select %5, %599, %604 : vector<8x128xi1>, vector<8x128xf32>
    %606 = vector.extract_strided_slice %605 {offsets = [0, 0], sizes = [8, 32], strides = [1, 1]} : vector<8x128xf32> to vector<8x32xf32>
    %607 = vector.extract_strided_slice %605 {offsets = [0, 32], sizes = [8, 32], strides = [1, 1]} : vector<8x128xf32> to vector<8x32xf32>
    %608 = vector.extract_strided_slice %605 {offsets = [0, 64], sizes = [8, 32], strides = [1, 1]} : vector<8x128xf32> to vector<8x32xf32>
    %609 = vector.extract_strided_slice %605 {offsets = [0, 96], sizes = [8, 32], strides = [1, 1]} : vector<8x128xf32> to vector<8x32xf32>
    %610 = arith.mulf %607, %573 : vector<8x32xf32>
    %611 = arith.mulf %606, %608 : vector<8x32xf32>
    %612 = arith.addf %610, %611 : vector<8x32xf32>
    %613 = math.tanh %612 : vector<8x32xf32>
    %614 = arith.mulf %609, %613 : vector<8x32xf32>
    %615 = arith.truncf %614 : vector<8x32xf32> to vector<8x32xbf16>
    %cst_168 = arith.constant dense<0.000000e+00> : vector<8x1xf32>
    %616 = tpu.matmul %615, %394, %cst_168 {dimension_numbers = #tpu.dot_dimension_numbers<[1], [0], [0], [1], [0, 0, 1, 1], [], []>} : vector<8x32xbf16>, vector<32x1xbf16>, vector<8x1xf32> -> vector<8x1xf32>
    %617 = vector.broadcast %395 : vector<1x1xf32> to vector<8x1xf32>
    %618 = arith.addf %616, %617 : vector<8x1xf32>
    %cst_169 = arith.constant 0.176776692 : f32
    %619 = vector.broadcast %cst_169 : f32 to vector<8x1xf32>
    %620 = arith.mulf %618, %619 : vector<8x1xf32>
    %621 = arith.maximumf %582, %620 : vector<8x1xf32>
    %622 = arith.subf %582, %621 : vector<8x1xf32>
    %623 = math.exp %622 : vector<8x1xf32>
    %624 = arith.subf %620, %621 : vector<8x1xf32>
    %625 = math.exp %624 : vector<8x1xf32>
    %626 = arith.mulf %623, %588 : vector<8x1xf32>
    %627 = arith.addf %626, %625 : vector<8x1xf32>
    %628 = vector.broadcast %623 : vector<8x1xf32> to vector<8x32xf32>
    %629 = arith.mulf %628, %593 : vector<8x32xf32>
    %630 = vector.broadcast %625 : vector<8x1xf32> to vector<8x32xf32>
    %631 = arith.mulf %630, %614 : vector<8x32xf32>
    %632 = arith.addf %629, %631 : vector<8x32xf32>
    %c48_170 = arith.constant 48 : index
    %c0_171 = arith.constant 0 : index
    %633 = vector.load %arg20[%c48_170, %c0_171] : memref<64x128xbf16, #tpu.memory_space<vmem>>, vector<8x128xbf16>
    %634 = arith.extf %633 : vector<8x128xbf16> to vector<8x128xf32>
    %635 = arith.truncf %614 : vector<8x32xf32> to vector<8x32xbf16>
    %cst_172 = arith.constant dense<0.000000e+00> : vector<8x128xf32>
    %636 = tpu.matmul %635, %391, %cst_172 {dimension_numbers = #tpu.dot_dimension_numbers<[1], [0], [0], [1], [0, 0, 1, 1], [], []>} : vector<8x32xbf16>, vector<32x128xbf16>, vector<8x128xf32> -> vector<8x128xf32>
    %637 = arith.addf %634, %636 : vector<8x128xf32>
    %638 = math.tanh %637 : vector<8x128xf32>
    %639 = arith.negf %637 : vector<8x128xf32>
    %640 = math.exp %639 : vector<8x128xf32>
    %cst_173 = arith.constant 1.000000e+00 : f32
    %641 = vector.broadcast %cst_173 : f32 to vector<8x128xf32>
    %642 = arith.addf %641, %640 : vector<8x128xf32>
    %643 = arith.divf %641, %642 : vector<8x128xf32>
    %644 = arith.select %5, %638, %643 : vector<8x128xi1>, vector<8x128xf32>
    %645 = vector.extract_strided_slice %644 {offsets = [0, 0], sizes = [8, 32], strides = [1, 1]} : vector<8x128xf32> to vector<8x32xf32>
    %646 = vector.extract_strided_slice %644 {offsets = [0, 32], sizes = [8, 32], strides = [1, 1]} : vector<8x128xf32> to vector<8x32xf32>
    %647 = vector.extract_strided_slice %644 {offsets = [0, 64], sizes = [8, 32], strides = [1, 1]} : vector<8x128xf32> to vector<8x32xf32>
    %648 = vector.extract_strided_slice %644 {offsets = [0, 96], sizes = [8, 32], strides = [1, 1]} : vector<8x128xf32> to vector<8x32xf32>
    %649 = arith.mulf %646, %612 : vector<8x32xf32>
    %650 = arith.mulf %645, %647 : vector<8x32xf32>
    %651 = arith.addf %649, %650 : vector<8x32xf32>
    %652 = math.tanh %651 : vector<8x32xf32>
    %653 = arith.mulf %648, %652 : vector<8x32xf32>
    %654 = arith.truncf %653 : vector<8x32xf32> to vector<8x32xbf16>
    %cst_174 = arith.constant dense<0.000000e+00> : vector<8x1xf32>
    %655 = tpu.matmul %654, %394, %cst_174 {dimension_numbers = #tpu.dot_dimension_numbers<[1], [0], [0], [1], [0, 0, 1, 1], [], []>} : vector<8x32xbf16>, vector<32x1xbf16>, vector<8x1xf32> -> vector<8x1xf32>
    %656 = vector.broadcast %395 : vector<1x1xf32> to vector<8x1xf32>
    %657 = arith.addf %655, %656 : vector<8x1xf32>
    %cst_175 = arith.constant 0.176776692 : f32
    %658 = vector.broadcast %cst_175 : f32 to vector<8x1xf32>
    %659 = arith.mulf %657, %658 : vector<8x1xf32>
    %660 = arith.maximumf %621, %659 : vector<8x1xf32>
    %661 = arith.subf %621, %660 : vector<8x1xf32>
    %662 = math.exp %661 : vector<8x1xf32>
    %663 = arith.subf %659, %660 : vector<8x1xf32>
    %664 = math.exp %663 : vector<8x1xf32>
    %665 = arith.mulf %662, %627 : vector<8x1xf32>
    %666 = arith.addf %665, %664 : vector<8x1xf32>
    %667 = vector.broadcast %662 : vector<8x1xf32> to vector<8x32xf32>
    %668 = arith.mulf %667, %632 : vector<8x32xf32>
    %669 = vector.broadcast %664 : vector<8x1xf32> to vector<8x32xf32>
    %670 = arith.mulf %669, %653 : vector<8x32xf32>
    %671 = arith.addf %668, %670 : vector<8x32xf32>
    %c56_176 = arith.constant 56 : index
    %c0_177 = arith.constant 0 : index
    %672 = vector.load %arg20[%c56_176, %c0_177] : memref<64x128xbf16, #tpu.memory_space<vmem>>, vector<8x128xbf16>
    %673 = arith.extf %672 : vector<8x128xbf16> to vector<8x128xf32>
    %674 = arith.truncf %653 : vector<8x32xf32> to vector<8x32xbf16>
    %cst_178 = arith.constant dense<0.000000e+00> : vector<8x128xf32>
    %675 = tpu.matmul %674, %391, %cst_178 {dimension_numbers = #tpu.dot_dimension_numbers<[1], [0], [0], [1], [0, 0, 1, 1], [], []>} : vector<8x32xbf16>, vector<32x128xbf16>, vector<8x128xf32> -> vector<8x128xf32>
    %676 = arith.addf %673, %675 : vector<8x128xf32>
    %677 = math.tanh %676 : vector<8x128xf32>
    %678 = arith.negf %676 : vector<8x128xf32>
    %679 = math.exp %678 : vector<8x128xf32>
    %cst_179 = arith.constant 1.000000e+00 : f32
    %680 = vector.broadcast %cst_179 : f32 to vector<8x128xf32>
    %681 = arith.addf %680, %679 : vector<8x128xf32>
    %682 = arith.divf %680, %681 : vector<8x128xf32>
    %683 = arith.select %5, %677, %682 : vector<8x128xi1>, vector<8x128xf32>
    %684 = vector.extract_strided_slice %683 {offsets = [0, 0], sizes = [8, 32], strides = [1, 1]} : vector<8x128xf32> to vector<8x32xf32>
    %685 = vector.extract_strided_slice %683 {offsets = [0, 32], sizes = [8, 32], strides = [1, 1]} : vector<8x128xf32> to vector<8x32xf32>
    %686 = vector.extract_strided_slice %683 {offsets = [0, 64], sizes = [8, 32], strides = [1, 1]} : vector<8x128xf32> to vector<8x32xf32>
    %687 = vector.extract_strided_slice %683 {offsets = [0, 96], sizes = [8, 32], strides = [1, 1]} : vector<8x128xf32> to vector<8x32xf32>
    %688 = arith.mulf %685, %651 : vector<8x32xf32>
    %689 = arith.mulf %684, %686 : vector<8x32xf32>
    %690 = arith.addf %688, %689 : vector<8x32xf32>
    %691 = math.tanh %690 : vector<8x32xf32>
    %692 = arith.mulf %687, %691 : vector<8x32xf32>
    %693 = arith.truncf %692 : vector<8x32xf32> to vector<8x32xbf16>
    %cst_180 = arith.constant dense<0.000000e+00> : vector<8x1xf32>
    %694 = tpu.matmul %693, %394, %cst_180 {dimension_numbers = #tpu.dot_dimension_numbers<[1], [0], [0], [1], [0, 0, 1, 1], [], []>} : vector<8x32xbf16>, vector<32x1xbf16>, vector<8x1xf32> -> vector<8x1xf32>
    %695 = vector.broadcast %395 : vector<1x1xf32> to vector<8x1xf32>
    %696 = arith.addf %694, %695 : vector<8x1xf32>
    %cst_181 = arith.constant 0.176776692 : f32
    %697 = vector.broadcast %cst_181 : f32 to vector<8x1xf32>
    %698 = arith.mulf %696, %697 : vector<8x1xf32>
    %699 = arith.maximumf %660, %698 : vector<8x1xf32>
    %700 = arith.subf %660, %699 : vector<8x1xf32>
    %701 = math.exp %700 : vector<8x1xf32>
    %702 = arith.subf %698, %699 : vector<8x1xf32>
    %703 = math.exp %702 : vector<8x1xf32>
    %704 = arith.mulf %701, %666 : vector<8x1xf32>
    %705 = arith.addf %704, %703 : vector<8x1xf32>
    %706 = vector.broadcast %701 : vector<8x1xf32> to vector<8x32xf32>
    %707 = arith.mulf %706, %671 : vector<8x32xf32>
    %708 = vector.broadcast %703 : vector<8x1xf32> to vector<8x32xf32>
    %709 = arith.mulf %708, %692 : vector<8x32xf32>
    %710 = arith.addf %707, %709 : vector<8x32xf32>
    %711 = tpu.reciprocal %705 {approx = true} : vector<8x1xf32> -> vector<8x1xf32>
    %712 = vector.broadcast %711 : vector<8x1xf32> to vector<8x32xf32>
    %713 = arith.mulf %710, %712 : vector<8x32xf32>
    %714 = arith.truncf %713 : vector<8x32xf32> to vector<8x32xbf16>
    %c0_182 = arith.constant 0 : index
    %c0_183 = arith.constant 0 : index
    %715 = vector.load %arg13[%c0_182, %c0_183] : memref<32x32xbf16, #tpu.memory_space<vmem>>, vector<32x32xbf16>
    %cst_184 = arith.constant dense<0.000000e+00> : vector<8x32xf32>
    %716 = tpu.matmul %714, %715, %cst_184 {dimension_numbers = #tpu.dot_dimension_numbers<[1], [0], [0], [1], [0, 0, 1, 1], [], []>} : vector<8x32xbf16>, vector<32x32xbf16>, vector<8x32xf32> -> vector<8x32xf32>
    %c0_185 = arith.constant 0 : index
    %c0_186 = arith.constant 0 : index
    %717 = vector.load %arg14[%c0_185, %c0_186] : memref<1x32xf32, #tpu.memory_space<vmem>>, vector<1x32xf32>
    %718 = vector.broadcast %717 : vector<1x32xf32> to vector<8x32xf32>
    %719 = arith.addf %716, %718 : vector<8x32xf32>
    %720 = math.tanh %719 : vector<8x32xf32>
    %721 = arith.truncf %720 : vector<8x32xf32> to vector<8x32xbf16>
    %c0_187 = arith.constant 0 : index
    %c0_188 = arith.constant 0 : index
    %722 = vector.load %arg15[%c0_187, %c0_188] : memref<32x32xbf16, #tpu.memory_space<vmem>>, vector<32x32xbf16>
    %cst_189 = arith.constant dense<0.000000e+00> : vector<8x32xf32>
    %723 = tpu.matmul %721, %722, %cst_189 {dimension_numbers = #tpu.dot_dimension_numbers<[1], [0], [0], [1], [0, 0, 1, 1], [], []>} : vector<8x32xbf16>, vector<32x32xbf16>, vector<8x32xf32> -> vector<8x32xf32>
    %c0_190 = arith.constant 0 : index
    %c0_191 = arith.constant 0 : index
    %724 = vector.load %arg16[%c0_190, %c0_191] : memref<1x32xf32, #tpu.memory_space<vmem>>, vector<1x32xf32>
    %725 = vector.broadcast %724 : vector<1x32xf32> to vector<8x32xf32>
    %726 = arith.addf %723, %725 : vector<8x32xf32>
    %727 = vector.shape_cast %726 : vector<8x32xf32> to vector<2x4x32xf32>
    %cst_192 = arith.constant 0.176776692 : f32
    %728 = vector.broadcast %cst_192 : f32 to vector<2x4x32xf32>
    %729 = arith.mulf %727, %728 : vector<2x4x32xf32>
    %cst_193 = arith.constant dense<0xFF800000> : vector<2x32xf32>
    %730 = vector.multi_reduction <maximumf>, %729, %cst_193 [1] : vector<2x4x32xf32> to vector<2x32xf32>
    %731 = vector.shape_cast %730 : vector<2x32xf32> to vector<2x1x32xf32>
    %732 = vector.broadcast %731 : vector<2x1x32xf32> to vector<2x4x32xf32>
    %733 = arith.subf %729, %732 : vector<2x4x32xf32>
    %734 = math.exp %733 : vector<2x4x32xf32>
    %cst_194 = arith.constant dense<0.000000e+00> : vector<2x32xf32>
    %735 = vector.multi_reduction <add>, %734, %cst_194 [1] : vector<2x4x32xf32> to vector<2x32xf32>
    %736 = vector.shape_cast %735 : vector<2x32xf32> to vector<2x1x32xf32>
    %737 = tpu.reciprocal %736 {approx = true} : vector<2x1x32xf32> -> vector<2x1x32xf32>
    %738 = vector.broadcast %737 : vector<2x1x32xf32> to vector<2x4x32xf32>
    %739 = arith.mulf %734, %738 : vector<2x4x32xf32>
    %740 = vector.shape_cast %713 : vector<8x32xf32> to vector<2x4x32xf32>
    %741 = arith.mulf %740, %739 : vector<2x4x32xf32>
    %742 = vector.shape_cast %741 : vector<2x4x32xf32> to vector<2x128xf32>
    %743 = arith.truncf %742 : vector<2x128xf32> to vector<2x128xbf16>
    %c0_195 = arith.constant 0 : index
    %c0_196 = arith.constant 0 : index
    %744 = vector.load %arg17[%c0_195, %c0_196] : memref<128x128xbf16, #tpu.memory_space<vmem>>, vector<128x128xbf16>
    %cst_197 = arith.constant dense<0.000000e+00> : vector<2x128xf32>
    %745 = tpu.matmul %743, %744, %cst_197 {dimension_numbers = #tpu.dot_dimension_numbers<[1], [0], [0], [1], [0, 0, 1, 1], [], []>} : vector<2x128xbf16>, vector<128x128xbf16>, vector<2x128xf32> -> vector<2x128xf32>
    %c0_198 = arith.constant 0 : index
    %c0_199 = arith.constant 0 : index
    %746 = vector.load %arg18[%c0_198, %c0_199] : memref<1x128xf32, #tpu.memory_space<vmem>>, vector<1x128xf32>
    %747 = vector.broadcast %746 : vector<1x128xf32> to vector<2x128xf32>
    %748 = arith.addf %745, %747 : vector<2x128xf32>
    %c0_200 = arith.constant 0 : index
    %c0_201 = arith.constant 0 : index
    %c0_202 = arith.constant 0 : index
    %749 = vector.load %arg19[%c0_200, %c0_201, %c0_202] : memref<1x2x128xf32, #tpu.memory_space<vmem>>, vector<1x2x128xf32>
    %750 = vector.shape_cast %749 : vector<1x2x128xf32> to vector<2x128xf32>
    %751 = vector.shape_cast %748 : vector<2x128xf32> to vector<1x2x128xf32>
    tpu.vector_store %arg19[%c0_200, %c0_201, %c0_202], %751 {strides = array<i32>} : memref<1x2x128xf32, #tpu.memory_space<vmem>>, vector<1x2x128xf32>,
    return
  }
  func.func @transform_0(%arg0: i32) -> (i32, i32, i32) {
    %c0_i32 = arith.constant 0 : i32
    %c0_i32_0 = arith.constant 0 : i32
    %c0_i32_1 = arith.constant 0 : i32
    return %arg0, %c0_i32, %c0_i32_0 : i32, i32, i32
  }
  func.func @transform_1(%arg0: i32) -> (i32, i32) {
    %c0_i32 = arith.constant 0 : i32
    %c0_i32_0 = arith.constant 0 : i32
    %c0_i32_1 = arith.constant 0 : i32
    return %c0_i32, %c0_i32_0 : i32, i32
  }
  func.func @transform_2(%arg0: i32) -> (i32, i32) {
    %c0_i32 = arith.constant 0 : i32
    %c0_i32_0 = arith.constant 0 : i32
    %c0_i32_1 = arith.constant 0 : i32
    return %c0_i32, %c0_i32_0 : i32, i32
  }
  func.func @transform_3(%arg0: i32) -> (i32, i32) {
    %c0_i32 = arith.constant 0 : i32
    %c0_i32_0 = arith.constant 0 : i32
    %c0_i32_1 = arith.constant 0 : i32
    return %c0_i32, %c0_i32_0 : i32, i32
  }
  func.func @transform_4(%arg0: i32) -> (i32, i32) {
    %c0_i32 = arith.constant 0 : i32
    %c0_i32_0 = arith.constant 0 : i32
    %c0_i32_1 = arith.constant 0 : i32
    return %c0_i32, %c0_i32_0 : i32, i32
  }
  func.func @transform_5(%arg0: i32) -> (i32, i32) {
    %c0_i32 = arith.constant 0 : i32
    %c0_i32_0 = arith.constant 0 : i32
    %c0_i32_1 = arith.constant 0 : i32
    return %c0_i32, %c0_i32_0 : i32, i32
  }
  func.func @transform_6(%arg0: i32) -> (i32, i32) {
    %c0_i32 = arith.constant 0 : i32
    %c0_i32_0 = arith.constant 0 : i32
    %c0_i32_1 = arith.constant 0 : i32
    return %c0_i32, %c0_i32_0 : i32, i32
  }
  func.func @transform_7(%arg0: i32) -> (i32, i32) {
    %c0_i32 = arith.constant 0 : i32
    %c0_i32_0 = arith.constant 0 : i32
    %c0_i32_1 = arith.constant 0 : i32
    return %c0_i32, %c0_i32_0 : i32, i32
  }
  func.func @transform_8(%arg0: i32) -> (i32, i32) {
    %c0_i32 = arith.constant 0 : i32
    %c0_i32_0 = arith.constant 0 : i32
    %c0_i32_1 = arith.constant 0 : i32
    return %c0_i32, %c0_i32_0 : i32, i32
  }
  func.func @transform_9(%arg0: i32) -> (i32, i32) {
    %c0_i32 = arith.constant 0 : i32
    %c0_i32_0 = arith.constant 0 : i32
    %c0_i32_1 = arith.constant 0 : i32
    return %c0_i32, %c0_i32_0 : i32, i32
  }
  func.func @transform_10(%arg0: i32) -> (i32, i32) {
    %c0_i32 = arith.constant 0 : i32
    %c0_i32_0 = arith.constant 0 : i32
    %c0_i32_1 = arith.constant 0 : i32
    return %c0_i32, %c0_i32_0 : i32, i32
  }
  func.func @transform_11(%arg0: i32) -> (i32, i32) {
    %c0_i32 = arith.constant 0 : i32
    %c0_i32_0 = arith.constant 0 : i32
    %c0_i32_1 = arith.constant 0 : i32
    return %c0_i32, %c0_i32_0 : i32, i32
  }
  func.func @transform_12(%arg0: i32) -> (i32, i32) {
    %c0_i32 = arith.constant 0 : i32
    %c0_i32_0 = arith.constant 0 : i32
    %c0_i32_1 = arith.constant 0 : i32
    return %c0_i32, %c0_i32_0 : i32, i32
  }
  func.func @transform_13(%arg0: i32) -> (i32, i32) {
    %c0_i32 = arith.constant 0 : i32
    %c0_i32_0 = arith.constant 0 : i32
    %c0_i32_1 = arith.constant 0 : i32
    return %c0_i32, %c0_i32_0 : i32, i32
  }
  func.func @transform_14(%arg0: i32) -> (i32, i32) {
    %c0_i32 = arith.constant 0 : i32
    %c0_i32_0 = arith.constant 0 : i32
    %c0_i32_1 = arith.constant 0 : i32
    return %c0_i32, %c0_i32_0 : i32, i32
  }
  func.func @transform_15(%arg0: i32) -> (i32, i32) {
    %c0_i32 = arith.constant 0 : i32
    %c0_i32_0 = arith.constant 0 : i32
    %c0_i32_1 = arith.constant 0 : i32
    return %c0_i32, %c0_i32_0 : i32, i32
  }
  func.func @transform_16(%arg0: i32) -> (i32, i32) {
    %c0_i32 = arith.constant 0 : i32
    %c0_i32_0 = arith.constant 0 : i32
    %c0_i32_1 = arith.constant 0 : i32
    return %c0_i32, %c0_i32_0 : i32, i32
  }
  func.func @transform_17(%arg0: i32) -> (i32, i32) {
    %c0_i32 = arith.constant 0 : i32
    %c0_i32_0 = arith.constant 0 : i32
    %c0_i32_1 = arith.constant 0 : i32
    return %c0_i32, %c0_i32_0 : i32, i32
  }
  func.func @transform_18(%arg0: i32) -> (i32, i32, i32) {
    %c0_i32 = arith.constant 0 : i32
    %c0_i32_0 = arith.constant 0 : i32
    %c0_i32_1 = arith.constant 0 : i32
    return %arg0, %c0_i32, %c0_i32_0 : i32, i32, i32
  }
}

</mosaic_0001>

<llo_original>
// kernel: tpu_custom_call.1
$region0: #{tpu_custom_call.1}
  #allocation0 [shape = 'u32[]', space=smem, size = 0x4, offset = 0x4, fixed_abs, tag = 'smem constant byte address 0x4 - core index']
  #allocation1 [shape = 'u32[72,128]{1,0:T(1,128)}', space=vmem, size = 0x9000, scoped, tag = 'internal scratch']
  #allocation2 [shape = 'bf16[64,128]{1,0:T(8,128)(2,1)}', space=vmem, size = 0x4000, scoped, tag = 'scratch operand']
  #allocation3 [shape = 'f32[64,32]{1,0:T(8,128)}', space=vmem, size = 0x8000, scoped, tag = 'scratch operand']
  #allocation4 [shape = 'f32[1,1]{1,0:T(1,128)S(1)}', space=vmem, size = 0x200, scoped, tag = 'scoped memory for tpu_custom_call.1']
  %s0 = inlined_call_operand.vmem [shape: bf16[2,64,8], index: 0, kind: input, shape index: {}]
  %s1 = inlined_call_operand.hbm [shape: bf16[8,128], index: 1, kind: input, shape index: {}]
  %s2 = inlined_call_operand.vmem [shape: bf16[32,128], index: 2, kind: input, shape index: {}]
  %s3 = inlined_call_operand.vmem [shape: f32[1,128], index: 3, kind: input, shape index: {}]
  %s4 = inlined_call_operand.hbm [shape: bf16[32,128], index: 4, kind: input, shape index: {}]
  %s5 = inlined_call_operand.hbm [shape: bf16[32,128], index: 5, kind: input, shape index: {}]
  %s6 = inlined_call_operand.vmem [shape: f32[1,128], index: 6, kind: input, shape index: {}]
  %s7 = inlined_call_operand.hbm [shape: bf16[32,128], index: 7, kind: input, shape index: {}]
  %s8 = inlined_call_operand.hbm [shape: bf16[32,128], index: 8, kind: input, shape index: {}]
  %s9 = inlined_call_operand.vmem [shape: f32[1,128], index: 9, kind: input, shape index: {}]
  %s10 = inlined_call_operand.vmem [shape: bf16[32,1], index: 10, kind: input, shape index: {}]
  %s11 = inlined_call_operand.<no memory space> [shape: f32[1,1], index: 11, kind: input, shape index: {}]
  %s12 = inlined_call_operand.hbm [shape: bf16[32,32], index: 12, kind: input, shape index: {}]
  %s13 = inlined_call_operand.vmem [shape: f32[1,32], index: 13, kind: input, shape index: {}]
  %s14 = inlined_call_operand.hbm [shape: bf16[32,32], index: 14, kind: input, shape index: {}]
  %s15 = inlined_call_operand.vmem [shape: f32[1,32], index: 15, kind: input, shape index: {}]
  %s16 = inlined_call_operand.vmem [shape: bf16[128,128], index: 16, kind: input, shape index: {}]
  %s17 = inlined_call_operand.vmem [shape: f32[1,128], index: 17, kind: input, shape index: {}]
  %s18 = inlined_call_operand.hbm [shape: f32[2,2,128], index: 18, kind: output, shape index: {}]
  %s19 = sld [smem:[#allocation0]]
  $region133: #{tpu_custom_call.1} parent=0
    _
  %s21 = ssub.s32 1, %s19
  %s22 = scalar_select 0, %s21, %s19
  %v23 = vstv %s11
  %24 = vst [vmem:[#allocation4] sm:$0x1] %v23
  $region1: #{tpu_custom_call.1} parent=0
    #allocation5 [shape = 'u8[2048]{0}', space=vmem, size = 0x800, scoped, tag = 'input window, operand 1, single buffered']
    #allocation6 [shape = 's32[2]{0}', space=sflag, size = 0x8, scoped, tag = 'scoped memory for tpu_custom_call.1']
    #allocation7 [shape = 's32[2]{0}', space=sflag, size = 0x8, scoped, tag = 'scoped memory for tpu_custom_call.1']
    #allocation8 [shape = 'u8[8192]{0}', space=vmem, size = 0x2000, scoped, tag = 'input window, operand 4, single buffered']
    #allocation9 [shape = 's32[1]{0}', space=sflag, size = 0x4, scoped, tag = 'scoped memory for tpu_custom_call.1']
    #allocation10 [shape = 'u8[8192]{0}', space=vmem, size = 0x2000, scoped, tag = 'input window, operand 5, single buffered']
    #allocation11 [shape = 'u8[8192]{0}', space=vmem, size = 0x2000, scoped, tag = 'input window, operand 7, single buffered']
    #allocation12 [shape = 's32[1]{0}', space=sflag, size = 0x4, scoped, tag = 'scoped memory for tpu_custom_call.1']
    #allocation13 [shape = 'u8[8192]{0}', space=vmem, size = 0x2000, scoped, tag = 'input window, operand 8, single buffered']
    #allocation14 [shape = 'u8[8192]{0}', space=vmem, size = 0x2000, scoped, tag = 'input window, operand 12, single buffered']
    #allocation15 [shape = 's32[1]{0}', space=sflag, size = 0x4, scoped, tag = 'scoped memory for tpu_custom_call.1']
    #allocation16 [shape = 'u8[8192]{0}', space=vmem, size = 0x2000, scoped, tag = 'input window, operand 14, single buffered']
    #allocation17 [shape = 'u8[2048]{0}', space=vmem, size = 0x800, scoped, tag = 'output window, operand 0']
    %25 = vsyncpa [#allocation6], 0
    %26 = vsyncpa [#allocation9], 0
    %27 = vsyncpa [#allocation12], 0
    %28 = vsyncpa [#allocation15], 0
    %29 = vsyncpa [#allocation7], 0
    %s30 = scalar_lea.sflag [#allocation7], 1
    %31 = vsyncpa %s30, 0
    loop: start=0, step=1, limit=4
    $region2: #{tpu_custom_call.1} parent=1 // loop_pre_header
      _
    $region3: #{tpu_custom_call.1} parent=1 // loop_header
      %s33 = sphi 0, %s37
      %p34 = scmp.ge.s32.totalorder %s33, 4
      %s43 = sphi 0, %s45
      %s46 = sphi 0, %s43
      %s47 = sphi 0, %s46
      %s63 = sphi 0, %s47
      %s67 = sphi 0, %s67
      %s69 = sphi 0, %s67
      %s70 = sphi 0, %s69
      %s84 = sphi 0, %s70
      %s88 = sphi 0, %s88
      %s90 = sphi 0, %s88
      %s91 = sphi 0, %s90
      %s105 = sphi 0, %s91
      %s109 = sphi 0, %s109
      %s111 = sphi 0, %s109
      %s112 = sphi 0, %s111
      %s126 = sphi 0, %s112
      %s130 = sphi 0, %s130
      %s132 = sphi 0, %s130
      %s133 = sphi 0, %s132
      %s147 = sphi 0, %s133
      %s151 = sphi 0, %s151
      %s153 = sphi 0, %s151
      %s154 = sphi 0, %s153
      %s168 = sphi 0, %s154
      %s172 = sphi 0, %s172
      %s174 = sphi 0, %s172
      %s175 = sphi 0, %s174
      %s189 = sphi 0, %s175
      %s193 = sphi 0, %s193
      %s195 = sphi 0, %s193
      %s196 = sphi 0, %s195
      %s210 = sphi 0, %s196
      %s214 = sphi 0, %s214
      %s216 = sphi 0, %s214
      %s217 = sphi 0, %s216
      %s231 = sphi 0, %s217
      %s235 = sphi 0, %s235
      %s237 = sphi 0, %s235
      %s238 = sphi 0, %s237
      %s252 = sphi 0, %s238
      %s256 = sphi 0, %s256
      %s258 = sphi 0, %s256
      %s259 = sphi 0, %s258
      %s273 = sphi 0, %s259
      %s277 = sphi 0, %s277
      %s279 = sphi 0, %s277
      %s280 = sphi 0, %s279
      %s294 = sphi 0, %s280
      %s298 = sphi 0, %s298
      %s300 = sphi 0, %s298
      %s301 = sphi 0, %s300
      %s315 = sphi 0, %s301
      %s319 = sphi 0, %s319
      %s321 = sphi 0, %s319
      %s322 = sphi 0, %s321
      %s336 = sphi 0, %s322
      %s340 = sphi 0, %s340
      %s342 = sphi 0, %s340
      %s343 = sphi 0, %s342
      %s357 = sphi 0, %s343
      %s361 = sphi 0, %s361
      %s363 = sphi 0, %s361
      %s364 = sphi 0, %s363
      %s378 = sphi 0, %s364
      %s382 = sphi 0, %s382
      %s384 = sphi 0, %s382
      %s385 = sphi 0, %s384
      %s399 = sphi 0, %s385
      %s403 = sphi 0, %s403
      %s405 = sphi 0, %s403
      %s406 = sphi 0, %s405
      %s420 = sphi 0, %s406
      %s426 = sphi 0, %s428
      %s429 = sphi 0, %s426
      %s430 = sphi 0, %s429
      %s446 = sphi 0, %s430
    $region4: #{tpu_custom_call.1} parent=1 // loop_header_branch
      %36 = sbr.rel (%p34) target = $region8
    $region5: #{tpu_custom_call.1} parent=1 // loop_body
      %s38 = ssub.s32 %s33, 1
      %s39 = ssub.s32 %s33, 2
      %s40 = sadd.s32 %s33, 1
      %s41 = ssub.s32 %s33, %s40
      %p42 = scmp.eq.s32.totalorder %s41, 0
      %s44 = sadd.s32 %s43, 1
      %s45 = scalar_select %p42, %s43, %s44
      %p48 = pneg %p42
      %p49 = scmp.eq.s32.totalorder %s33, 1
      %p50 = por %p48, %p49
      %p51 = scmp.ne.s32.totalorder %s43, %s46
      %p52 = scmp.eq.s32.totalorder %s33, 0
      %p53 = por %p51, %p52
      %p54 = scmp.ne.s32.totalorder %s43, %s46
      %p55 = scmp.eq.s32.totalorder %s38, 1
      %p56 = por %p54, %p55
      %p57 = scmp.ne.s32.totalorder %s46, %s47
      %p58 = scmp.eq.s32.totalorder %s38, 0
      %p59 = por %p57, %p58
      %p60 = scmp.ne.s32.totalorder %s46, %s47
      %p61 = scmp.eq.s32.totalorder %s39, 1
      %p62 = por %p60, %p61
      %p64 = scmp.ne.s32.totalorder %s47, %s63
      %p65 = scmp.eq.s32.totalorder %s39, 0
      %p66 = por %p64, %p65
      %s68 = sadd.s32 %s67, 1
      %p71 = scmp.eq.s32.totalorder %s33, 1
      %p72 = scmp.ne.s32.totalorder %s67, %s69
      %p73 = scmp.eq.s32.totalorder %s33, 0
      %p74 = por %p72, %p73
      %p75 = scmp.ne.s32.totalorder %s67, %s69
      %p76 = scmp.eq.s32.totalorder %s38, 1
      %p77 = por %p75, %p76
      %p78 = scmp.ne.s32.totalorder %s69, %s70
      %p79 = scmp.eq.s32.totalorder %s38, 0
      %p80 = por %p78, %p79
      %p81 = scmp.ne.s32.totalorder %s69, %s70
      %p82 = scmp.eq.s32.totalorder %s39, 1
      %p83 = por %p81, %p82
      %p85 = scmp.ne.s32.totalorder %s70, %s84
      %p86 = scmp.eq.s32.totalorder %s39, 0
      %p87 = por %p85, %p86
      %s89 = sadd.s32 %s88, 1
      %p92 = scmp.eq.s32.totalorder %s33, 1
      %p93 = scmp.ne.s32.totalorder %s88, %s90
      %p94 = scmp.eq.s32.totalorder %s33, 0
      %p95 = por %p93, %p94
      %p96 = scmp.ne.s32.totalorder %s88, %s90
      %p97 = scmp.eq.s32.totalorder %s38, 1
      %p98 = por %p96, %p97
      %p99 = scmp.ne.s32.totalorder %s90, %s91
      %p100 = scmp.eq.s32.totalorder %s38, 0
      %p101 = por %p99, %p100
      %p102 = scmp.ne.s32.totalorder %s90, %s91
      %p103 = scmp.eq.s32.totalorder %s39, 1
      %p104 = por %p102, %p103
      %p106 = scmp.ne.s32.totalorder %s91, %s105
      %p107 = scmp.eq.s32.totalorder %s39, 0
      %p108 = por %p106, %p107
      %s110 = sadd.s32 %s109, 1
      %p113 = scmp.eq.s32.totalorder %s33, 1
      %p114 = scmp.ne.s32.totalorder %s109, %s111
      %p115 = scmp.eq.s32.totalorder %s33, 0
      %p116 = por %p114, %p115
      %p117 = scmp.ne.s32.totalorder %s109, %s111
      %p118 = scmp.eq.s32.totalorder %s38, 1
      %p119 = por %p117, %p118
      %p120 = scmp.ne.s32.totalorder %s111, %s112
      %p121 = scmp.eq.s32.totalorder %s38, 0
      %p122 = por %p120, %p121
      %p123 = scmp.ne.s32.totalorder %s111, %s112
      %p124 = scmp.eq.s32.totalorder %s39, 1
      %p125 = por %p123, %p124
      %p127 = scmp.ne.s32.totalorder %s112, %s126
      %p128 = scmp.eq.s32.totalorder %s39, 0
      %p129 = por %p127, %p128
      %s131 = sadd.s32 %s130, 1
      %p134 = scmp.eq.s32.totalorder %s33, 1
      %p135 = scmp.ne.s32.totalorder %s130, %s132
      %p136 = scmp.eq.s32.totalorder %s33, 0
      %p137 = por %p135, %p136
      %p138 = scmp.ne.s32.totalorder %s130, %s132
      %p139 = scmp.eq.s32.totalorder %s38, 1
      %p140 = por %p138, %p139
      %p141 = scmp.ne.s32.totalorder %s132, %s133
      %p142 = scmp.eq.s32.totalorder %s38, 0
      %p143 = por %p141, %p142
      %p144 = scmp.ne.s32.totalorder %s132, %s133
      %p145 = scmp.eq.s32.totalorder %s39, 1
      %p146 = por %p144, %p145
      %p148 = scmp.ne.s32.totalorder %s133, %s147
      %p149 = scmp.eq.s32.totalorder %s39, 0
      %p150 = por %p148, %p149
      %s152 = sadd.s32 %s151, 1
      %p155 = scmp.eq.s32.totalorder %s33, 1
      %p156 = scmp.ne.s32.totalorder %s151, %s153
      %p157 = scmp.eq.s32.totalorder %s33, 0
      %p158 = por %p156, %p157
      %p159 = scmp.ne.s32.totalorder %s151, %s153
      %p160 = scmp.eq.s32.totalorder %s38, 1
      %p161 = por %p159, %p160
      %p162 = scmp.ne.s32.totalorder %s153, %s154
      %p163 = scmp.eq.s32.totalorder %s38, 0
      %p164 = por %p162, %p163
      %p165 = scmp.ne.s32.totalorder %s153, %s154
      %p166 = scmp.eq.s32.totalorder %s39, 1
      %p167 = por %p165, %p166
      %p169 = scmp.ne.s32.totalorder %s154, %s168
      %p170 = scmp.eq.s32.totalorder %s39, 0
      %p171 = por %p169, %p170
      %s173 = sadd.s32 %s172, 1
      %p176 = scmp.eq.s32.totalorder %s33, 1
      %p177 = scmp.ne.s32.totalorder %s172, %s174
      %p178 = scmp.eq.s32.totalorder %s33, 0
      %p179 = por %p177, %p178
      %p180 = scmp.ne.s32.totalorder %s172, %s174
      %p181 = scmp.eq.s32.totalorder %s38, 1
      %p182 = por %p180, %p181
      %p183 = scmp.ne.s32.totalorder %s174, %s175
      %p184 = scmp.eq.s32.totalorder %s38, 0
      %p185 = por %p183, %p184
      %p186 = scmp.ne.s32.totalorder %s174, %s175
      %p187 = scmp.eq.s32.totalorder %s39, 1
      %p188 = por %p186, %p187
      %p190 = scmp.ne.s32.totalorder %s175, %s189
      %p191 = scmp.eq.s32.totalorder %s39, 0
      %p192 = por %p190, %p191
      %s194 = sadd.s32 %s193, 1
      %p197 = scmp.eq.s32.totalorder %s33, 1
      %p198 = scmp.ne.s32.totalorder %s193, %s195
      %p199 = scmp.eq.s32.totalorder %s33, 0
      %p200 = por %p198, %p199
      %p201 = scmp.ne.s32.totalorder %s193, %s195
      %p202 = scmp.eq.s32.totalorder %s38, 1
      %p203 = por %p201, %p202
      %p204 = scmp.ne.s32.totalorder %s195, %s196
      %p205 = scmp.eq.s32.totalorder %s38, 0
      %p206 = por %p204, %p205
      %p207 = scmp.ne.s32.totalorder %s195, %s196
      %p208 = scmp.eq.s32.totalorder %s39, 1
      %p209 = por %p207, %p208
      %p211 = scmp.ne.s32.totalorder %s196, %s210
      %p212 = scmp.eq.s32.totalorder %s39, 0
      %p213 = por %p211, %p212
      %s215 = sadd.s32 %s214, 1
      %p218 = scmp.eq.s32.totalorder %s33, 1
      %p219 = scmp.ne.s32.totalorder %s214, %s216
      %p220 = scmp.eq.s32.totalorder %s33, 0
      %p221 = por %p219, %p220
      %p222 = scmp.ne.s32.totalorder %s214, %s216
      %p223 = scmp.eq.s32.totalorder %s38, 1
      %p224 = por %p222, %p223
      %p225 = scmp.ne.s32.totalorder %s216, %s217
      %p226 = scmp.eq.s32.totalorder %s38, 0
      %p227 = por %p225, %p226
      %p228 = scmp.ne.s32.totalorder %s216, %s217
      %p229 = scmp.eq.s32.totalorder %s39, 1
      %p230 = por %p228, %p229
      %p232 = scmp.ne.s32.totalorder %s217, %s231
      %p233 = scmp.eq.s32.totalorder %s39, 0
      %p234 = por %p232, %p233
      %s236 = sadd.s32 %s235, 1
      %p239 = scmp.eq.s32.totalorder %s33, 1
      %p240 = scmp.ne.s32.totalorder %s235, %s237
      %p241 = scmp.eq.s32.totalorder %s33, 0
      %p242 = por %p240, %p241
      %p243 = scmp.ne.s32.totalorder %s235, %s237
      %p244 = scmp.eq.s32.totalorder %s38, 1
      %p245 = por %p243, %p244
      %p246 = scmp.ne.s32.totalorder %s237, %s238
      %p247 = scmp.eq.s32.totalorder %s38, 0
      %p248 = por %p246, %p247
      %p249 = scmp.ne.s32.totalorder %s237, %s238
      %p250 = scmp.eq.s32.totalorder %s39, 1
      %p251 = por %p249, %p250
      %p253 = scmp.ne.s32.totalorder %s238, %s252
      %p254 = scmp.eq.s32.totalorder %s39, 0
      %p255 = por %p253, %p254
      %s257 = sadd.s32 %s256, 1
      %p260 = scmp.eq.s32.totalorder %s33, 1
      %p261 = scmp.ne.s32.totalorder %s256, %s258
      %p262 = scmp.eq.s32.totalorder %s33, 0
      %p263 = por %p261, %p262
      %p264 = scmp.ne.s32.totalorder %s256, %s258
      %p265 = scmp.eq.s32.totalorder %s38, 1
      %p266 = por %p264, %p265
      %p267 = scmp.ne.s32.totalorder %s258, %s259
      %p268 = scmp.eq.s32.totalorder %s38, 0
      %p269 = por %p267, %p268
      %p270 = scmp.ne.s32.totalorder %s258, %s259
      %p271 = scmp.eq.s32.totalorder %s39, 1
      %p272 = por %p270, %p271
      %p274 = scmp.ne.s32.totalorder %s259, %s273
      %p275 = scmp.eq.s32.totalorder %s39, 0
      %p276 = por %p274, %p275
      %s278 = sadd.s32 %s277, 1
      %p281 = scmp.eq.s32.totalorder %s33, 1
      %p282 = scmp.ne.s32.totalorder %s277, %s279
      %p283 = scmp.eq.s32.totalorder %s33, 0
      %p284 = por %p282, %p283
      %p285 = scmp.ne.s32.totalorder %s277, %s279
      %p286 = scmp.eq.s32.totalorder %s38, 1
      %p287 = por %p285, %p286
      %p288 = scmp.ne.s32.totalorder %s279, %s280
      %p289 = scmp.eq.s32.totalorder %s38, 0
      %p290 = por %p288, %p289
      %p291 = scmp.ne.s32.totalorder %s279, %s280
      %p292 = scmp.eq.s32.totalorder %s39, 1
      %p293 = por %p291, %p292
      %p295 = scmp.ne.s32.totalorder %s280, %s294
      %p296 = scmp.eq.s32.totalorder %s39, 0
      %p297 = por %p295, %p296
      %s299 = sadd.s32 %s298, 1
      %p302 = scmp.eq.s32.totalorder %s33, 1
      %p303 = scmp.ne.s32.totalorder %s298, %s300
      %p304 = scmp.eq.s32.totalorder %s33, 0
      %p305 = por %p303, %p304
      %p306 = scmp.ne.s32.totalorder %s298, %s300
      %p307 = scmp.eq.s32.totalorder %s38, 1
      %p308 = por %p306, %p307
      %p309 = scmp.ne.s32.totalorder %s300, %s301
      %p310 = scmp.eq.s32.totalorder %s38, 0
      %p311 = por %p309, %p310
      %p312 = scmp.ne.s32.totalorder %s300, %s301
      %p313 = scmp.eq.s32.totalorder %s39, 1
      %p314 = por %p312, %p313
      %p316 = scmp.ne.s32.totalorder %s301, %s315
      %p317 = scmp.eq.s32.totalorder %s39, 0
      %p318 = por %p316, %p317
      %s320 = sadd.s32 %s319, 1
      %p323 = scmp.eq.s32.totalorder %s33, 1
      %p324 = scmp.ne.s32.totalorder %s319, %s321
      %p325 = scmp.eq.s32.totalorder %s33, 0
      %p326 = por %p324, %p325
      %p327 = scmp.ne.s32.totalorder %s319, %s321
      %p328 = scmp.eq.s32.totalorder %s38, 1
      %p329 = por %p327, %p328
      %p330 = scmp.ne.s32.totalorder %s321, %s322
      %p331 = scmp.eq.s32.totalorder %s38, 0
      %p332 = por %p330, %p331
      %p333 = scmp.ne.s32.totalorder %s321, %s322
      %p334 = scmp.eq.s32.totalorder %s39, 1
      %p335 = por %p333, %p334
      %p337 = scmp.ne.s32.totalorder %s322, %s336
      %p338 = scmp.eq.s32.totalorder %s39, 0
      %p339 = por %p337, %p338
      %s341 = sadd.s32 %s340, 1
      %p344 = scmp.eq.s32.totalorder %s33, 1
      %p345 = scmp.ne.s32.totalorder %s340, %s342
      %p346 = scmp.eq.s32.totalorder %s33, 0
      %p347 = por %p345, %p346
      %p348 = scmp.ne.s32.totalorder %s340, %s342
      %p349 = scmp.eq.s32.totalorder %s38, 1
      %p350 = por %p348, %p349
      %p351 = scmp.ne.s32.totalorder %s342, %s343
      %p352 = scmp.eq.s32.totalorder %s38, 0
      %p353 = por %p351, %p352
      %p354 = scmp.ne.s32.totalorder %s342, %s343
      %p355 = scmp.eq.s32.totalorder %s39, 1
      %p356 = por %p354, %p355
      %p358 = scmp.ne.s32.totalorder %s343, %s357
      %p359 = scmp.eq.s32.totalorder %s39, 0
      %p360 = por %p358, %p359
      %s362 = sadd.s32 %s361, 1
      %p365 = scmp.eq.s32.totalorder %s33, 1
      %p366 = scmp.ne.s32.totalorder %s361, %s363
      %p367 = scmp.eq.s32.totalorder %s33, 0
      %p368 = por %p366, %p367
      %p369 = scmp.ne.s32.totalorder %s361, %s363
      %p370 = scmp.eq.s32.totalorder %s38, 1
      %p371 = por %p369, %p370
      %p372 = scmp.ne.s32.totalorder %s363, %s364
      %p373 = scmp.eq.s32.totalorder %s38, 0
      %p374 = por %p372, %p373
      %p375 = scmp.ne.s32.totalorder %s363, %s364
      %p376 = scmp.eq.s32.totalorder %s39, 1
      %p377 = por %p375, %p376
      %p379 = scmp.ne.s32.totalorder %s364, %s378
      %p380 = scmp.eq.s32.totalorder %s39, 0
      %p381 = por %p379, %p380
      %s383 = sadd.s32 %s382, 1
      %p386 = scmp.eq.s32.totalorder %s33, 1
      %p387 = scmp.ne.s32.totalorder %s382, %s384
      %p388 = scmp.eq.s32.totalorder %s33, 0
      %p389 = por %p387, %p388
      %p390 = scmp.ne.s32.totalorder %s382, %s384
      %p391 = scmp.eq.s32.totalorder %s38, 1
      %p392 = por %p390, %p391
      %p393 = scmp.ne.s32.totalorder %s384, %s385
      %p394 = scmp.eq.s32.totalorder %s38, 0
      %p395 = por %p393, %p394
      %p396 = scmp.ne.s32.totalorder %s384, %s385
      %p397 = scmp.eq.s32.totalorder %s39, 1
      %p398 = por %p396, %p397
      %p400 = scmp.ne.s32.totalorder %s385, %s399
      %p401 = scmp.eq.s32.totalorder %s39, 0
      %p402 = por %p400, %p401
      %s404 = sadd.s32 %s403, 1
      %p407 = scmp.eq.s32.totalorder %s33, 1
      %p408 = scmp.ne.s32.totalorder %s403, %s405
      %p409 = scmp.eq.s32.totalorder %s33, 0
      %p410 = por %p408, %p409
      %p411 = scmp.ne.s32.totalorder %s403, %s405
      %p412 = scmp.eq.s32.totalorder %s38, 1
      %p413 = por %p411, %p412
      %p414 = scmp.ne.s32.totalorder %s405, %s406
      %p415 = scmp.eq.s32.totalorder %s38, 0
      %p416 = por %p414, %p415
      %p417 = scmp.ne.s32.totalorder %s405, %s406
      %p418 = scmp.eq.s32.totalorder %s39, 1
      %p419 = por %p417, %p418
      %p421 = scmp.ne.s32.totalorder %s406, %s420
      %p422 = scmp.eq.s32.totalorder %s39, 0
      %p423 = por %p421, %p422
      %s424 = ssub.s32 %s33, %s40
      %p425 = scmp.eq.s32.totalorder %s424, 0
      %s427 = sadd.s32 %s426, 1
      %s428 = scalar_select %p425, %s426, %s427
      %p431 = pneg %p425
      %p432 = scmp.eq.s32.totalorder %s33, 1
      %p433 = por %p431, %p432
      %p434 = scmp.ne.s32.totalorder %s426, %s429
      %p435 = scmp.eq.s32.totalorder %s33, 0
      %p436 = por %p434, %p435
      %p437 = scmp.ne.s32.totalorder %s426, %s429
      %p438 = scmp.eq.s32.totalorder %s38, 1
      %p439 = por %p437, %p438
      %p440 = scmp.ne.s32.totalorder %s429, %s430
      %p441 = scmp.eq.s32.totalorder %s38, 0
      %p442 = por %p440, %p441
      %p443 = scmp.ne.s32.totalorder %s429, %s430
      %p444 = scmp.eq.s32.totalorder %s39, 1
      %p445 = por %p443, %p444
      %p447 = scmp.ne.s32.totalorder %s430, %s446
      %p448 = scmp.eq.s32.totalorder %s39, 0
      %p449 = por %p447, %p448
      %p450 = scmp.le.s32.totalorder 1, %s33
      %p451 = scmp.lt.s32.totalorder %s33, 3
      %p452 = pnand %p450, %p451
      %p453 = pneg %p452
      // Predicated region
      $region9: #{tpu_custom_call.1} parent=5 // pred_check
        _
      $region10: #{tpu_custom_call.1} parent=5 // pred_check_branch
        %455 = sbr.rel (%p452) target = $region12
      $region11: #{tpu_custom_call.1} parent=5 // pred_region
        %s456 = ssub.s32 %s33, 1
        // Predicated region
        $region13: #{tpu_custom_call.1} parent=11 // pred_check
          %p457 = pneg %p80
        $region14: #{tpu_custom_call.1} parent=11 // pred_check_branch
          %459 = sbr.rel (%p457) target = $region16
        $region15: #{tpu_custom_call.1} parent=11 // pred_region
          %461 = vsyncadd [#allocation6], 0
          %s463 = sshll.u32 %s1, 4
          %s464 = int_to_ptr.hbm [resolvable:$true] %s463
          %s465 = sshll.u32 [#allocation5], 4
          %s466 = int_to_ptr.vmem [resolvable:$true] %s465
          %468 = dma.hbm_to_vmem [thread:$0]  %s464, 64, %s466, [#allocation6]
        $region16: #{tpu_custom_call.1} parent=11 // pred_fallthru
          _
        // Predicated region
        $region17: #{tpu_custom_call.1} parent=11 // pred_check
          %p469 = pneg %p101
        $region18: #{tpu_custom_call.1} parent=11 // pred_check_branch
          %471 = sbr.rel (%p469) target = $region20
        $region19: #{tpu_custom_call.1} parent=11 // pred_region
          _
        $region20: #{tpu_custom_call.1} parent=11 // pred_fallthru
          _
        // Predicated region
        $region21: #{tpu_custom_call.1} parent=11 // pred_check
          %p472 = pneg %p122
        $region22: #{tpu_custom_call.1} parent=11 // pred_check_branch
          %474 = sbr.rel (%p472) target = $region24
        $region23: #{tpu_custom_call.1} parent=11 // pred_region
          _
        $region24: #{tpu_custom_call.1} parent=11 // pred_fallthru
          _
        // Predicated region
        $region25: #{tpu_custom_call.1} parent=11 // pred_check
          %p475 = pneg %p143
        $region26: #{tpu_custom_call.1} parent=11 // pred_check_branch
          %477 = sbr.rel (%p475) target = $region28
        $region27: #{tpu_custom_call.1} parent=11 // pred_region
          %479 = vsyncadd [#allocation9], 0
          %s480 = sshll.u32 %s4, 4
          %s481 = int_to_ptr.hbm [resolvable:$true] %s480
          %s482 = sshll.u32 [#allocation8], 4
          %s483 = int_to_ptr.vmem [resolvable:$true] %s482
          %488 = dma.hbm_to_vmem [thread:$0]  %s481, 256, %s483, [#allocation9], 64, 64, 4
        $region28: #{tpu_custom_call.1} parent=11 // pred_fallthru
          _
        // Predicated region
        $region29: #{tpu_custom_call.1} parent=11 // pred_check
          %p489 = pneg %p164
        $region30: #{tpu_custom_call.1} parent=11 // pred_check_branch
          %491 = sbr.rel (%p489) target = $region32
        $region31: #{tpu_custom_call.1} parent=11 // pred_region
          %493 = vsyncadd [#allocation9], 0
          %s494 = sshll.u32 %s5, 4
          %s495 = int_to_ptr.hbm [resolvable:$true] %s494
          %s496 = sshll.u32 [#allocation10], 4
          %s497 = int_to_ptr.vmem [resolvable:$true] %s496
          %502 = dma.hbm_to_vmem [thread:$0]  %s495, 256, %s497, [#allocation9], 64, 64, 4
        $region32: #{tpu_custom_call.1} parent=11 // pred_fallthru
          _
        // Predicated region
        $region33: #{tpu_custom_call.1} parent=11 // pred_check
          %p503 = pneg %p185
        $region34: #{tpu_custom_call.1} parent=11 // pred_check_branch
          %505 = sbr.rel (%p503) target = $region36
        $region35: #{tpu_custom_call.1} parent=11 // pred_region
          _
        $region36: #{tpu_custom_call.1} parent=11 // pred_fallthru
          _
        // Predicated region
        $region37: #{tpu_custom_call.1} parent=11 // pred_check
          %p506 = pneg %p206
        $region38: #{tpu_custom_call.1} parent=11 // pred_check_branch
          %508 = sbr.rel (%p506) target = $region40
        $region39: #{tpu_custom_call.1} parent=11 // pred_region
          %510 = vsyncadd [#allocation12], 0
          %s511 = sshll.u32 %s7, 4
          %s512 = int_to_ptr.hbm [resolvable:$true] %s511
          %s513 = sshll.u32 [#allocation11], 4
          %s514 = int_to_ptr.vmem [resolvable:$true] %s513
          %519 = dma.hbm_to_vmem [thread:$0]  %s512, 256, %s514, [#allocation12], 64, 64, 4
        $region40: #{tpu_custom_call.1} parent=11 // pred_fallthru
          _
        // Predicated region
        $region41: #{tpu_custom_call.1} parent=11 // pred_check
          %p520 = pneg %p227
        $region42: #{tpu_custom_call.1} parent=11 // pred_check_branch
          %522 = sbr.rel (%p520) target = $region44
        $region43: #{tpu_custom_call.1} parent=11 // pred_region
          %524 = vsyncadd [#allocation12], 0
          %s525 = sshll.u32 %s8, 4
          %s526 = int_to_ptr.hbm [resolvable:$true] %s525
          %s527 = sshll.u32 [#allocation13], 4
          %s528 = int_to_ptr.vmem [resolvable:$true] %s527
          %533 = dma.hbm_to_vmem [thread:$0]  %s526, 256, %s528, [#allocation12], 64, 64, 4
        $region44: #{tpu_custom_call.1} parent=11 // pred_fallthru
          _
        // Predicated region
        $region45: #{tpu_custom_call.1} parent=11 // pred_check
          %p534 = pneg %p248
        $region46: #{tpu_custom_call.1} parent=11 // pred_check_branch
          %536 = sbr.rel (%p534) target = $region48
        $region47: #{tpu_custom_call.1} parent=11 // pred_region
          _
        $region48: #{tpu_custom_call.1} parent=11 // pred_fallthru
          _
        // Predicated region
        $region49: #{tpu_custom_call.1} parent=11 // pred_check
          %p537 = pneg %p269
        $region50: #{tpu_custom_call.1} parent=11 // pred_check_branch
          %539 = sbr.rel (%p537) target = $region52
        $region51: #{tpu_custom_call.1} parent=11 // pred_region
          _
        $region52: #{tpu_custom_call.1} parent=11 // pred_fallthru
          _
        // Predicated region
        $region53: #{tpu_custom_call.1} parent=11 // pred_check
          %p540 = pneg %p290
        $region54: #{tpu_custom_call.1} parent=11 // pred_check_branch
          %542 = sbr.rel (%p540) target = $region56
        $region55: #{tpu_custom_call.1} parent=11 // pred_region
          _
        $region56: #{tpu_custom_call.1} parent=11 // pred_fallthru
          _
        // Predicated region
        $region57: #{tpu_custom_call.1} parent=11 // pred_check
          %p543 = pneg %p311
        $region58: #{tpu_custom_call.1} parent=11 // pred_check_branch
          %545 = sbr.rel (%p543) target = $region60
        $region59: #{tpu_custom_call.1} parent=11 // pred_region
          %547 = vsyncadd [#allocation15], 0
          %s548 = sshll.u32 %s12, 4
          %s549 = int_to_ptr.hbm [resolvable:$true] %s548
          %s550 = sshll.u32 [#allocation14], 4
          %s551 = int_to_ptr.vmem [resolvable:$true] %s550
          %556 = dma.hbm_to_vmem [thread:$0]  %s549, 256, %s551, [#allocation15], 64, 64, 4
        $region60: #{tpu_custom_call.1} parent=11 // pred_fallthru
          _
        // Predicated region
        $region61: #{tpu_custom_call.1} parent=11 // pred_check
          %p557 = pneg %p332
        $region62: #{tpu_custom_call.1} parent=11 // pred_check_branch
          %559 = sbr.rel (%p557) target = $region64
        $region63: #{tpu_custom_call.1} parent=11 // pred_region
          _
        $region64: #{tpu_custom_call.1} parent=11 // pred_fallthru
          _
        // Predicated region
        $region65: #{tpu_custom_call.1} parent=11 // pred_check
          %p560 = pneg %p353
        $region66: #{tpu_custom_call.1} parent=11 // pred_check_branch
          %562 = sbr.rel (%p560) target = $region68
        $region67: #{tpu_custom_call.1} parent=11 // pred_region
          %564 = vsyncadd [#allocation15], 0
          %s565 = sshll.u32 %s14, 4
          %s566 = int_to_ptr.hbm [resolvable:$true] %s565
          %s567 = sshll.u32 [#allocation16], 4
          %s568 = int_to_ptr.vmem [resolvable:$true] %s567
          %573 = dma.hbm_to_vmem [thread:$0]  %s566, 256, %s568, [#allocation15], 64, 64, 4
        $region68: #{tpu_custom_call.1} parent=11 // pred_fallthru
          _
        // Predicated region
        $region69: #{tpu_custom_call.1} parent=11 // pred_check
          %p574 = pneg %p374
        $region70: #{tpu_custom_call.1} parent=11 // pred_check_branch
          %576 = sbr.rel (%p574) target = $region72
        $region71: #{tpu_custom_call.1} parent=11 // pred_region
          _
        $region72: #{tpu_custom_call.1} parent=11 // pred_fallthru
          _
        // Predicated region
        $region73: #{tpu_custom_call.1} parent=11 // pred_check
          %p577 = pneg %p395
        $region74: #{tpu_custom_call.1} parent=11 // pred_check_branch
          %579 = sbr.rel (%p577) target = $region76
        $region75: #{tpu_custom_call.1} parent=11 // pred_region
          _
        $region76: #{tpu_custom_call.1} parent=11 // pred_fallthru
          _
        // Predicated region
        $region77: #{tpu_custom_call.1} parent=11 // pred_check
          %p580 = pneg %p416
        $region78: #{tpu_custom_call.1} parent=11 // pred_check_branch
          %582 = sbr.rel (%p580) target = $region80
        $region79: #{tpu_custom_call.1} parent=11 // pred_region
          _
        $region80: #{tpu_custom_call.1} parent=11 // pred_fallthru
          _
      $region12: #{tpu_custom_call.1} parent=5 // pred_fallthru
        _
      %p583 = scmp.lt.s32.totalorder %s33, 2
      // Predicated region
      $region81: #{tpu_custom_call.1} parent=5 // pred_check
        %p584 = pneg %p583
      $region82: #{tpu_custom_call.1} parent=5 // pred_check_branch
        %586 = sbr.rel (%p584) target = $region84
      $region83: #{tpu_custom_call.1} parent=5 // pred_region
        // Predicated region
        $region85: #{tpu_custom_call.1} parent=83 // pred_check
          %p587 = pneg %p53
        $region86: #{tpu_custom_call.1} parent=83 // pred_check_branch
          %589 = sbr.rel (%p587) target = $region88
        $region87: #{tpu_custom_call.1} parent=83 // pred_region
          %p590 = scmp.lt.s32.totalorder %s33, 1
          %s591 = scalar_select %p590, %s33, 1
          %s592 = smul.addr %s591, 8
          %s593 = smul.addr %s592, 4
          %s594 = scalar_lea.vmem %s0, %s593
        $region88: #{tpu_custom_call.1} parent=83 // pred_fallthru
          _
      $region84: #{tpu_custom_call.1} parent=5 // pred_fallthru
        _
      %p595 = scmp.le.s32.totalorder 1, %s33
      %p596 = scmp.lt.s32.totalorder %s33, 3
      %p597 = pnand %p595, %p596
      %p598 = pneg %p597
      // Predicated region
      $region89: #{tpu_custom_call.1} parent=5 // pred_check
        _
      $region90: #{tpu_custom_call.1} parent=5 // pred_check_branch
        %600 = sbr.rel (%p597) target = $region92
      $region91: #{tpu_custom_call.1} parent=5 // pred_region
        %s601 = ssub.s32 %s33, 1
        // Predicated region
        $region93: #{tpu_custom_call.1} parent=91 // pred_check
          %p602 = pneg %p80
        $region94: #{tpu_custom_call.1} parent=91 // pred_check_branch
          %604 = sbr.rel (%p602) target = $region96
        $region95: #{tpu_custom_call.1} parent=91 // pred_region
          %606 = dma.done [#allocation6], 64
        $region96: #{tpu_custom_call.1} parent=91 // pred_fallthru
          _
        // Predicated region
        $region97: #{tpu_custom_call.1} parent=91 // pred_check
          %p607 = pneg %p143
        $region98: #{tpu_custom_call.1} parent=91 // pred_check_branch
          %609 = sbr.rel (%p607) target = $region100
        $region99: #{tpu_custom_call.1} parent=91 // pred_region
          %611 = dma.done [#allocation9], 256
        $region100: #{tpu_custom_call.1} parent=91 // pred_fallthru
          _
        // Predicated region
        $region101: #{tpu_custom_call.1} parent=91 // pred_check
          %p612 = pneg %p164
        $region102: #{tpu_custom_call.1} parent=91 // pred_check_branch
          %614 = sbr.rel (%p612) target = $region104
        $region103: #{tpu_custom_call.1} parent=91 // pred_region
          %616 = dma.done [#allocation9], 256
        $region104: #{tpu_custom_call.1} parent=91 // pred_fallthru
          _
        // Predicated region
        $region105: #{tpu_custom_call.1} parent=91 // pred_check
          %p617 = pneg %p206
        $region106: #{tpu_custom_call.1} parent=91 // pred_check_branch
          %619 = sbr.rel (%p617) target = $region108
        $region107: #{tpu_custom_call.1} parent=91 // pred_region
          %621 = dma.done [#allocation12], 256
        $region108: #{tpu_custom_call.1} parent=91 // pred_fallthru
          _
        // Predicated region
        $region109: #{tpu_custom_call.1} parent=91 // pred_check
          %p622 = pneg %p227
        $region110: #{tpu_custom_call.1} parent=91 // pred_check_branch
          %624 = sbr.rel (%p622) target = $region112
        $region111: #{tpu_custom_call.1} parent=91 // pred_region
          %626 = dma.done [#allocation12], 256
        $region112: #{tpu_custom_call.1} parent=91 // pred_fallthru
          _
        // Predicated region
        $region113: #{tpu_custom_call.1} parent=91 // pred_check
          %p627 = pneg %p311
        $region114: #{tpu_custom_call.1} parent=91 // pred_check_branch
          %629 = sbr.rel (%p627) target = $region116
        $region115: #{tpu_custom_call.1} parent=91 // pred_region
          %631 = dma.done [#allocation15], 256
        $region116: #{tpu_custom_call.1} parent=91 // pred_fallthru
          _
        // Predicated region
        $region117: #{tpu_custom_call.1} parent=91 // pred_check
          %p632 = pneg %p353
        $region118: #{tpu_custom_call.1} parent=91 // pred_check_branch
          %634 = sbr.rel (%p632) target = $region120
        $region119: #{tpu_custom_call.1} parent=91 // pred_region
          %636 = dma.done [#allocation15], 256
        $region120: #{tpu_custom_call.1} parent=91 // pred_fallthru
          _
        %p637 = scmp.lt.s32.totalorder %s38, 1
        %s638 = scalar_select %p637, %s38, 1
        %s639 = smul.addr %s638, 8
        %s640 = smul.addr %s639, 4
        %s641 = scalar_lea.vmem %s0, %s640
        %p642 = pneg %p59
        %p643 = pneg %p56
        %p644 = pneg %p80
        %p645 = pneg %p77
        %p646 = pneg %p101
        %p647 = pneg %p98
        %p648 = pneg %p122
        %p649 = pneg %p119
        %p650 = pneg %p143
        %p651 = pneg %p140
        %p652 = pneg %p164
        %p653 = pneg %p161
        %p654 = pneg %p185
        %p655 = pneg %p182
        %p656 = pneg %p206
        %p657 = pneg %p203
        %p658 = pneg %p227
        %p659 = pneg %p224
        %p660 = pneg %p248
        %p661 = pneg %p245
        %p662 = pneg %p269
        %p663 = pneg %p266
        %p664 = pneg %p290
        %p665 = pneg %p287
        %p666 = pneg %p311
        %p667 = pneg %p308
        %p668 = pneg %p332
        %p669 = pneg %p329
        %p670 = pneg %p353
        %p671 = pneg %p350
        %p672 = pneg %p374
        %p673 = pneg %p371
        %p674 = pneg %p395
        %p675 = pneg %p392
        %p676 = pneg %p416
        %p677 = pneg %p413
        %p678 = pneg %p442
        %p679 = pneg %p439
        %s680 = sand.u32 %s429, 1
        %s681 = scalar_lea.sflag [#allocation7], %s680
        %s682 = sand.u32 %s429, 1
        %s683 = smul.addr %s682, 2
        %s684 = scalar_lea.vmem [#allocation17], %s683
        %p685 = scmp.lt.s32.totalorder %s38, 1
        %s686 = scalar_select %p685, %s38, 1
        %s687 = smul.addr %s686, 8
        %s688 = smul.addr %s687, 4
        %s689 = scalar_lea.vmem %s0, %s688
        %v691 = vlaneseq
        %v692 = vand.u32 %v691, 127
        %vm693 = vcmp.ge.s32.totalorder %v692, 64
        %vm694 = vcmp.lt.s32.totalorder %v692, 96
        %vm695 = vmand %vm693, %vm694
        %v696 = vld [vmem:[%s689] sm:$0xf]
        %v697 = vld [vmem:[%s689 + $0x4] sm:$0xf]
        %v698 = vld [vmem:[%s689 + $0x8] sm:$0xf]
        %v699 = vld [vmem:[%s689 + $0xc] sm:$0xf]
        %v700 = vld [vmem:[%s689 + $0x10] sm:$0xf]
        %v701 = vld [vmem:[%s689 + $0x14] sm:$0xf]
        %v702 = vld [vmem:[%s689 + $0x18] sm:$0xf]
        %v703 = vld [vmem:[%s689 + $0x1c] sm:$0xf]
        %v704 = vld [vmem:[#allocation5] sm:$0xf]
        %v705 = vld [vmem:[%s3] sm:$0x1]
        %v707 = vperm.slane %v705, 0
        %v717 = vunpack.c.l.b16 %v696
        %v718 = vunpack.c.l.b16 %v697
        %v719 = vunpack.c.l.b16 %v698
        %v720 = vunpack.c.l.b16 %v699
        %v721 = vunpack.c.l.b16 %v700
        %v722 = vunpack.c.l.b16 %v701
        %v723 = vunpack.c.l.b16 %v702
        %v724 = vunpack.c.l.b16 %v703
        %v725 = vpack.c.b16 %v718, %v717
        %v726 = vpack.c.b16 %v720, %v719
        %v727 = vpack.c.b16 %v722, %v721
        %v728 = vpack.c.b16 %v724, %v723
        %vm729 = vcmask 64512
        %v731 = vsel %vm729, %v725, 0
        %v734 = vsel %vm729, %v726, 0
        %v737 = vsel %vm729, %v727, 0
        %v740 = vsel %vm729, %v728, 0
        %vm742 = vcmask 1043456
        %v744 = vsel %vm742, %v704, 0
        %746 = vmatpush.bf16.msra.mxu0 0
        %747 = vmatpush.bf16.msra.mxu0 0
        %748 = vmatpush.bf16.msra.mxu0 0
        %749 = vmatpush.bf16.msra.mxu0 0
        %750 = vmatpush.bf16.msra.mxu0 0
        %751 = vmatpush.bf16.msra.mxu0 0
        %752 = vmatpush.bf16.msra.mxu0 0
        %753 = vmatpush.bf16.msra.mxu0 %v744
        %754 = vmatmul.bf16.gmra.mxu0 %v731
        %v755 = vpop.f32.mrf.mxu0
        %v756 = vadd.f32 %v707, %v755
        %v757 = vpop.f32.mrf.mxu0
        %v758 = vadd.f32 %v707, %v757
        %759 = vmatmul.bf16.gmra.mxu0 %v734
        %v760 = vpop.f32.mrf.mxu0
        %v761 = vadd.f32 %v707, %v760
        %v762 = vpop.f32.mrf.mxu0
        %v763 = vadd.f32 %v707, %v762
        %764 = vmatmul.bf16.gmra.mxu0 %v737
        %v765 = vpop.f32.mrf.mxu0
        %v766 = vadd.f32 %v707, %v765
        %v767 = vpop.f32.mrf.mxu0
        %v768 = vadd.f32 %v707, %v767
        %769 = vmatmul.bf16.gmra.mxu0 %v740
        %v770 = vpop.f32.mrf.mxu0
        %v771 = vadd.f32 %v707, %v770
        %v772 = vpop.f32.mrf.mxu0
        %v773 = vadd.f32 %v707, %v772
        %774 = vdwg.mxu0
        %v775 = vpack.c.bf16 %v756, %v756
        %v776 = vpack.c.bf16 %v758, %v758
        %v777 = vpack.c.bf16 %v761, %v761
        %v778 = vpack.c.bf16 %v763, %v763
        %v779 = vpack.c.bf16 %v766, %v766
        %v780 = vpack.c.bf16 %v768, %v768
        %v781 = vpack.c.bf16 %v771, %v771
        %v782 = vpack.c.bf16 %v773, %v773
        %783 = vst [vmem:[#allocation2] sm:$0xf] %v775
        %784 = vst [vmem:[#allocation2 + $0x4] sm:$0xf] %v776
        %785 = vst [vmem:[#allocation2 + $0x8] sm:$0xf] %v777
        %786 = vst [vmem:[#allocation2 + $0xc] sm:$0xf] %v778
        %787 = vst [vmem:[#allocation2 + $0x10] sm:$0xf] %v779
        %788 = vst [vmem:[#allocation2 + $0x14] sm:$0xf] %v780
        %789 = vst [vmem:[#allocation2 + $0x18] sm:$0xf] %v781
        %790 = vst [vmem:[#allocation2 + $0x1c] sm:$0xf] %v782
        %v791 = vld [vmem:[%s2] sm:$0xf]
        %v792 = vld [vmem:[%s2 + $0x4] sm:$0xf]
        %v793 = vld [vmem:[%s2 + $0x8] sm:$0xf]
        %v794 = vld [vmem:[%s2 + $0xc] sm:$0xf]
        %v795 = vld [vmem:[#allocation2] sm:$0xf]
        %v796 = vunpack.c.l.bf16 %v795
        %v801 = vunpack.c.l.b16 %v791
        %v802 = vunpack.c.l.b16 %v792
        %v803 = vunpack.c.l.b16 %v793
        %v804 = vunpack.c.l.b16 %v794
        %v805 = vpack.c.b16 %v802, %v801
        %v806 = vpack.c.b16 %v804, %v803
        %vm809 = vcmask 261120
        %v811 = vsel %vm809, 0, 0
        %813 = vmatpush.bf16.msra.mxu0 0
        %814 = vmatpush.bf16.msra.mxu0 0
        %815 = vmatpush.bf16.msra.mxu0 0
        %816 = vmatpush.bf16.msra.mxu0 0
        %817 = vmatpush.bf16.msra.mxu0 0
        %818 = vmatpush.bf16.msra.mxu0 0
        %819 = vmatpush.bf16.msra.mxu0 %v806
        %820 = vmatpush.bf16.msra.mxu0 %v805
        %821 = vmatmul.bf16.gmra.mxu0 %v811
        %v822 = vpop.f32.mrf.mxu0
        %v823 = vadd.f32 0.0, %v822
        %v824 = vpop.f32.mrf.mxu0
        %825 = vdwg.mxu0
        %v826 = vadd.f32 %v796, %v823
        %v827 = vtanh.pop %v826
        %v828 = vxor.u32 %v826, 2147483648
        %v829 = vmul.f32 %v828, 1.442695
        %v830 = vpow.pop %v829
        %v831 = vadd.f32 %v830, 1.0
        %v832 = vrcp.pop %v831
        %v833 = vmul.f32 %v831, %v832
        %v834 = vsub.f32 1.0, %v833
        %v835 = vmul.f32 %v832, %v834
        %v836 = vadd.f32 %v832, %v835
        %vm837 = vweird.f32 %v831
        %vm838 = vweird.f32 %v832
        %vm839 = vmor %vm837, %vm838
        %v840 = vsel %vm839, %v832, %v836
        %v841 = vand.u32 2147483647, %v831
        %vm842 = vcmp.eq.f32.partialorder %v841, 8.507059e+37
        %v843 = vand.u32 %v831, 2147483648
        %v844 = vor.u32 1.1754944e-38, %v843
        %v845 = vsel %vm842, %v844, %v840
        %v846 = vmul.f32 1.0, %v845
        %v847 = vsel %vm695, %v827, %v846
        %v848 = vmul.f32 %v847, 0.0
        %850 = vrot.lane.b32.xlu0 %v847, 64
        %v851 = vpop.permute.xlu0 %850
        %v853 = vmul.f32 %v847, %v851
        %855 = vrot.lane.b32.xlu0 %v853, 32
        %v856 = vpop.permute.xlu0 %855
        %v858 = vadd.f32 %v848, %v856
        %v859 = vtanh.pop %v858
        %861 = vrot.lane.b32.xlu0 %v859, 64
        %v862 = vpop.permute.xlu0 %861
        %v864 = vmul.f32 %v847, %v862
        %866 = vrot.lane.b32.xlu0 %v864, 32
        %v867 = vpop.permute.xlu0 %866
        %869 = vst.msk [vmem:[#allocation3] sm:$0xff] %vm809, %v867
        %v870 = vld [vmem:[#allocation2 + $0x4] sm:$0xf]
        %v871 = vunpack.c.l.bf16 %v870
        %v872 = vpack.c.bf16 %v864, %v864
        %874 = vrot.lane.b32.xlu0 %v872, 32
        %v875 = vpop.permute.xlu0 %874
        %v877 = vsel %vm809, %v875, 0
        %879 = vmatpush.bf16.msra.mxu0 0
        %880 = vmatpush.bf16.msra.mxu0 0
        %881 = vmatpush.bf16.msra.mxu0 0
        %882 = vmatpush.bf16.msra.mxu0 0
        %883 = vmatpush.bf16.msra.mxu0 0
        %884 = vmatpush.bf16.msra.mxu0 0
        %885 = vmatpush.bf16.msra.mxu0 %v806
        %886 = vmatpush.bf16.msra.mxu0 %v805
        %887 = vmatmul.bf16.gmra.mxu0 %v877
        %v888 = vpop.f32.mrf.mxu0
        %v889 = vadd.f32 0.0, %v888
        %v890 = vpop.f32.mrf.mxu0
        %891 = vdwg.mxu0
        %v892 = vadd.f32 %v871, %v889
        %v893 = vtanh.pop %v892
        %v894 = vxor.u32 %v892, 2147483648
        %v895 = vmul.f32 %v894, 1.442695
        %v896 = vpow.pop %v895
        %v897 = vadd.f32 %v896, 1.0
        %v898 = vrcp.pop %v897
        %v899 = vmul.f32 %v897, %v898
        %v900 = vsub.f32 1.0, %v899
        %v901 = vmul.f32 %v898, %v900
        %v902 = vadd.f32 %v898, %v901
        %vm903 = vweird.f32 %v897
        %vm904 = vweird.f32 %v898
        %vm905 = vmor %vm903, %vm904
        %v906 = vsel %vm905, %v898, %v902
        %v907 = vand.u32 2147483647, %v897
        %vm908 = vcmp.eq.f32.partialorder %v907, 8.507059e+37
        %v909 = vand.u32 %v897, 2147483648
        %v910 = vor.u32 1.1754944e-38, %v909
        %v911 = vsel %vm908, %v910, %v906
        %v912 = vmul.f32 1.0, %v911
        %v913 = vsel %vm695, %v893, %v912
        %v914 = vmul.f32 %v913, %v858
        %916 = vrot.lane.b32.xlu0 %v913, 64
        %v917 = vpop.permute.xlu0 %916
        %v919 = vmul.f32 %v913, %v917
        %921 = vrot.lane.b32.xlu0 %v919, 32
        %v922 = vpop.permute.xlu0 %921
        %v924 = vadd.f32 %v914, %v922
        %v925 = vtanh.pop %v924
        %927 = vrot.lane.b32.xlu0 %v925, 64
        %v928 = vpop.permute.xlu0 %927
        %v930 = vmul.f32 %v913, %v928
        %932 = vrot.lane.b32.xlu0 %v930, 32
        %v933 = vpop.permute.xlu0 %932
        %935 = vst.msk [vmem:[#allocation3 + $0x8] sm:$0xff] %vm809, %v933
        %v936 = vld [vmem:[#allocation2 + $0x8] sm:$0xf]
        %v937 = vunpack.c.l.bf16 %v936
        %v938 = vpack.c.bf16 %v930, %v930
        %940 = vrot.lane.b32.xlu0 %v938, 32
        %v941 = vpop.permute.xlu0 %940
        %v943 = vsel %vm809, %v941, 0
        %945 = vmatpush.bf16.msra.mxu0 0
        %946 = vmatpush.bf16.msra.mxu0 0
        %947 = vmatpush.bf16.msra.mxu0 0
        %948 = vmatpush.bf16.msra.mxu0 0
        %949 = vmatpush.bf16.msra.mxu0 0
        %950 = vmatpush.bf16.msra.mxu0 0
        %951 = vmatpush.bf16.msra.mxu0 %v806
        %952 = vmatpush.bf16.msra.mxu0 %v805
        %953 = vmatmul.bf16.gmra.mxu0 %v943
        %v954 = vpop.f32.mrf.mxu0
        %v955 = vadd.f32 0.0, %v954
        %v956 = vpop.f32.mrf.mxu0
        %957 = vdwg.mxu0
        %v958 = vadd.f32 %v937, %v955
        %v959 = vtanh.pop %v958
        %v960 = vxor.u32 %v958, 2147483648
        %v961 = vmul.f32 %v960, 1.442695
        %v962 = vpow.pop %v961
        %v963 = vadd.f32 %v962, 1.0
        %v964 = vrcp.pop %v963
        %v965 = vmul.f32 %v963, %v964
        %v966 = vsub.f32 1.0, %v965
        %v967 = vmul.f32 %v964, %v966
        %v968 = vadd.f32 %v964, %v967
        %vm969 = vweird.f32 %v963
        %vm970 = vweird.f32 %v964
        %vm971 = vmor %vm969, %vm970
        %v972 = vsel %vm971, %v964, %v968
        %v973 = vand.u32 2147483647, %v963
        %vm974 = vcmp.eq.f32.partialorder %v973, 8.507059e+37
        %v975 = vand.u32 %v963, 2147483648
        %v976 = vor.u32 1.1754944e-38, %v975
        %v977 = vsel %vm974, %v976, %v972
        %v978 = vmul.f32 1.0, %v977
        %v979 = vsel %vm695, %v959, %v978
        %v980 = vmul.f32 %v979, %v924
        %982 = vrot.lane.b32.xlu0 %v979, 64
        %v983 = vpop.permute.xlu0 %982
        %v985 = vmul.f32 %v979, %v983
        %987 = vrot.lane.b32.xlu0 %v985, 32
        %v988 = vpop.permute.xlu0 %987
        %v990 = vadd.f32 %v980, %v988
        %v991 = vtanh.pop %v990
        %993 = vrot.lane.b32.xlu0 %v991, 64
        %v994 = vpop.permute.xlu0 %993
        %v996 = vmul.f32 %v979, %v994
        %998 = vrot.lane.b32.xlu0 %v996, 32
        %v999 = vpop.permute.xlu0 %998
        %1001 = vst.msk [vmem:[#allocation3 + $0x10] sm:$0xff] %vm809, %v999
        %v1002 = vld [vmem:[#allocation2 + $0xc] sm:$0xf]
        %v1003 = vunpack.c.l.bf16 %v1002
        %v1004 = vpack.c.bf16 %v996, %v996
        %1006 = vrot.lane.b32.xlu0 %v1004, 32
        %v1007 = vpop.permute.xlu0 %1006
        %v1009 = vsel %vm809, %v1007, 0
        %1011 = vmatpush.bf16.msra.mxu0 0
        %1012 = vmatpush.bf16.msra.mxu0 0
        %1013 = vmatpush.bf16.msra.mxu0 0
        %1014 = vmatpush.bf16.msra.mxu0 0
        %1015 = vmatpush.bf16.msra.mxu0 0
        %1016 = vmatpush.bf16.msra.mxu0 0
        %1017 = vmatpush.bf16.msra.mxu0 %v806
        %1018 = vmatpush.bf16.msra.mxu0 %v805
        %1019 = vmatmul.bf16.gmra.mxu0 %v1009
        %v1020 = vpop.f32.mrf.mxu0
        %v1021 = vadd.f32 0.0, %v1020
        %v1022 = vpop.f32.mrf.mxu0
        %1023 = vdwg.mxu0
        %v1024 = vadd.f32 %v1003, %v1021
        %v1025 = vtanh.pop %v1024
        %v1026 = vxor.u32 %v1024, 2147483648
        %v1027 = vmul.f32 %v1026, 1.442695
        %v1028 = vpow.pop %v1027
        %v1029 = vadd.f32 %v1028, 1.0
        %v1030 = vrcp.pop %v1029
        %v1031 = vmul.f32 %v1029, %v1030
        %v1032 = vsub.f32 1.0, %v1031
        %v1033 = vmul.f32 %v1030, %v1032
        %v1034 = vadd.f32 %v1030, %v1033
        %vm1035 = vweird.f32 %v1029
        %vm1036 = vweird.f32 %v1030
        %vm1037 = vmor %vm1035, %vm1036
        %v1038 = vsel %vm1037, %v1030, %v1034
        %v1039 = vand.u32 2147483647, %v1029
        %vm1040 = vcmp.eq.f32.partialorder %v1039, 8.507059e+37
        %v1041 = vand.u32 %v1029, 2147483648
        %v1042 = vor.u32 1.1754944e-38, %v1041
        %v1043 = vsel %vm1040, %v1042, %v1038
        %v1044 = vmul.f32 1.0, %v1043
        %v1045 = vsel %vm695, %v1025, %v1044
        %v1046 = vmul.f32 %v1045, %v990
        %1048 = vrot.lane.b32.xlu0 %v1045, 64
        %v1049 = vpop.permute.xlu0 %1048
        %v1051 = vmul.f32 %v1045, %v1049
        %1053 = vrot.lane.b32.xlu0 %v1051, 32
        %v1054 = vpop.permute.xlu0 %1053
        %v1056 = vadd.f32 %v1046, %v1054
        %v1057 = vtanh.pop %v1056
        %1059 = vrot.lane.b32.xlu0 %v1057, 64
        %v1060 = vpop.permute.xlu0 %1059
        %v1062 = vmul.f32 %v1045, %v1060
        %1064 = vrot.lane.b32.xlu0 %v1062, 32
        %v1065 = vpop.permute.xlu0 %1064
        %1067 = vst.msk [vmem:[#allocation3 + $0x18] sm:$0xff] %vm809, %v1065
        %v1068 = vld [vmem:[#allocation2 + $0x10] sm:$0xf]
        %v1069 = vunpack.c.l.bf16 %v1068
        %v1070 = vpack.c.bf16 %v1062, %v1062
        %1072 = vrot.lane.b32.xlu0 %v1070, 32
        %v1073 = vpop.permute.xlu0 %1072
        %v1075 = vsel %vm809, %v1073, 0
        %1077 = vmatpush.bf16.msra.mxu0 0
        %1078 = vmatpush.bf16.msra.mxu0 0
        %1079 = vmatpush.bf16.msra.mxu0 0
        %1080 = vmatpush.bf16.msra.mxu0 0
        %1081 = vmatpush.bf16.msra.mxu0 0
        %1082 = vmatpush.bf16.msra.mxu0 0
        %1083 = vmatpush.bf16.msra.mxu0 %v806
        %1084 = vmatpush.bf16.msra.mxu0 %v805
        %1085 = vmatmul.bf16.gmra.mxu0 %v1075
        %v1086 = vpop.f32.mrf.mxu0
        %v1087 = vadd.f32 0.0, %v1086
        %v1088 = vpop.f32.mrf.mxu0
        %1089 = vdwg.mxu0
        %v1090 = vadd.f32 %v1069, %v1087
        %v1091 = vtanh.pop %v1090
        %v1092 = vxor.u32 %v1090, 2147483648
        %v1093 = vmul.f32 %v1092, 1.442695
        %v1094 = vpow.pop %v1093
        %v1095 = vadd.f32 %v1094, 1.0
        %v1096 = vrcp.pop %v1095
        %v1097 = vmul.f32 %v1095, %v1096
        %v1098 = vsub.f32 1.0, %v1097
        %v1099 = vmul.f32 %v1096, %v1098
        %v1100 = vadd.f32 %v1096, %v1099
        %vm1101 = vweird.f32 %v1095
        %vm1102 = vweird.f32 %v1096
        %vm1103 = vmor %vm1101, %vm1102
        %v1104 = vsel %vm1103, %v1096, %v1100
        %v1105 = vand.u32 2147483647, %v1095
        %vm1106 = vcmp.eq.f32.partialorder %v1105, 8.507059e+37
        %v1107 = vand.u32 %v1095, 2147483648
        %v1108 = vor.u32 1.1754944e-38, %v1107
        %v1109 = vsel %vm1106, %v1108, %v1104
        %v1110 = vmul.f32 1.0, %v1109
        %v1111 = vsel %vm695, %v1091, %v1110
        %v1112 = vmul.f32 %v1111, %v1056
        %1114 = vrot.lane.b32.xlu0 %v1111, 64
        %v1115 = vpop.permute.xlu0 %1114
        %v1117 = vmul.f32 %v1111, %v1115
        %1119 = vrot.lane.b32.xlu0 %v1117, 32
        %v1120 = vpop.permute.xlu0 %1119
        %v1122 = vadd.f32 %v1112, %v1120
        %v1123 = vtanh.pop %v1122
        %1125 = vrot.lane.b32.xlu0 %v1123, 64
        %v1126 = vpop.permute.xlu0 %1125
        %v1128 = vmul.f32 %v1111, %v1126
        %1130 = vrot.lane.b32.xlu0 %v1128, 32
        %v1131 = vpop.permute.xlu0 %1130
        %1133 = vst.msk [vmem:[#allocation3 + $0x20] sm:$0xff] %vm809, %v1131
        %v1134 = vld [vmem:[#allocation2 + $0x14] sm:$0xf]
        %v1135 = vunpack.c.l.bf16 %v1134
        %v1136 = vpack.c.bf16 %v1128, %v1128
        %1138 = vrot.lane.b32.xlu0 %v1136, 32
        %v1139 = vpop.permute.xlu0 %1138
        %v1141 = vsel %vm809, %v1139, 0
        %1143 = vmatpush.bf16.msra.mxu0 0
        %1144 = vmatpush.bf16.msra.mxu0 0
        %1145 = vmatpush.bf16.msra.mxu0 0
        %1146 = vmatpush.bf16.msra.mxu0 0
        %1147 = vmatpush.bf16.msra.mxu0 0
        %1148 = vmatpush.bf16.msra.mxu0 0
        %1149 = vmatpush.bf16.msra.mxu0 %v806
        %1150 = vmatpush.bf16.msra.mxu0 %v805
        %1151 = vmatmul.bf16.gmra.mxu0 %v1141
        %v1152 = vpop.f32.mrf.mxu0
        %v1153 = vadd.f32 0.0, %v1152
        %v1154 = vpop.f32.mrf.mxu0
        %1155 = vdwg.mxu0
        %v1156 = vadd.f32 %v1135, %v1153
        %v1157 = vtanh.pop %v1156
        %v1158 = vxor.u32 %v1156, 2147483648
        %v1159 = vmul.f32 %v1158, 1.442695
        %v1160 = vpow.pop %v1159
        %v1161 = vadd.f32 %v1160, 1.0
        %v1162 = vrcp.pop %v1161
        %v1163 = vmul.f32 %v1161, %v1162
        %v1164 = vsub.f32 1.0, %v1163
        %v1165 = vmul.f32 %v1162, %v1164
        %v1166 = vadd.f32 %v1162, %v1165
        %vm1167 = vweird.f32 %v1161
        %vm1168 = vweird.f32 %v1162
        %vm1169 = vmor %vm1167, %vm1168
        %v1170 = vsel %vm1169, %v1162, %v1166
        %v1171 = vand.u32 2147483647, %v1161
        %vm1172 = vcmp.eq.f32.partialorder %v1171, 8.507059e+37
        %v1173 = vand.u32 %v1161, 2147483648
        %v1174 = vor.u32 1.1754944e-38, %v1173
        %v1175 = vsel %vm1172, %v1174, %v1170
        %v1176 = vmul.f32 1.0, %v1175
        %v1177 = vsel %vm695, %v1157, %v1176
        %v1178 = vmul.f32 %v1177, %v1122
        %1180 = vrot.lane.b32.xlu0 %v1177, 64
        %v1181 = vpop.permute.xlu0 %1180
        %v1183 = vmul.f32 %v1177, %v1181
        %1185 = vrot.lane.b32.xlu0 %v1183, 32
        %v1186 = vpop.permute.xlu0 %1185
        %v1188 = vadd.f32 %v1178, %v1186
        %v1189 = vtanh.pop %v1188
        %1191 = vrot.lane.b32.xlu0 %v1189, 64
        %v1192 = vpop.permute.xlu0 %1191
        %v1194 = vmul.f32 %v1177, %v1192
        %1196 = vrot.lane.b32.xlu0 %v1194, 32
        %v1197 = vpop.permute.xlu0 %1196
        %1199 = vst.msk [vmem:[#allocation3 + $0x28] sm:$0xff] %vm809, %v1197
        %v1200 = vld [vmem:[#allocation2 + $0x18] sm:$0xf]
        %v1201 = vunpack.c.l.bf16 %v1200
        %v1202 = vpack.c.bf16 %v1194, %v1194
        %1204 = vrot.lane.b32.xlu0 %v1202, 32
        %v1205 = vpop.permute.xlu0 %1204
        %v1207 = vsel %vm809, %v1205, 0
        %1209 = vmatpush.bf16.msra.mxu0 0
        %1210 = vmatpush.bf16.msra.mxu0 0
        %1211 = vmatpush.bf16.msra.mxu0 0
        %1212 = vmatpush.bf16.msra.mxu0 0
        %1213 = vmatpush.bf16.msra.mxu0 0
        %1214 = vmatpush.bf16.msra.mxu0 0
        %1215 = vmatpush.bf16.msra.mxu0 %v806
        %1216 = vmatpush.bf16.msra.mxu0 %v805
        %1217 = vmatmul.bf16.gmra.mxu0 %v1207
        %v1218 = vpop.f32.mrf.mxu0
        %v1219 = vadd.f32 0.0, %v1218
        %v1220 = vpop.f32.mrf.mxu0
        %1221 = vdwg.mxu0
        %v1222 = vadd.f32 %v1201, %v1219
        %v1223 = vtanh.pop %v1222
        %v1224 = vxor.u32 %v1222, 2147483648
        %v1225 = vmul.f32 %v1224, 1.442695
        %v1226 = vpow.pop %v1225
        %v1227 = vadd.f32 %v1226, 1.0
        %v1228 = vrcp.pop %v1227
        %v1229 = vmul.f32 %v1227, %v1228
        %v1230 = vsub.f32 1.0, %v1229
        %v1231 = vmul.f32 %v1228, %v1230
        %v1232 = vadd.f32 %v1228, %v1231
        %vm1233 = vweird.f32 %v1227
        %vm1234 = vweird.f32 %v1228
        %vm1235 = vmor %vm1233, %vm1234
        %v1236 = vsel %vm1235, %v1228, %v1232
        %v1237 = vand.u32 2147483647, %v1227
        %vm1238 = vcmp.eq.f32.partialorder %v1237, 8.507059e+37
        %v1239 = vand.u32 %v1227, 2147483648
        %v1240 = vor.u32 1.1754944e-38, %v1239
        %v1241 = vsel %vm1238, %v1240, %v1236
        %v1242 = vmul.f32 1.0, %v1241
        %v1243 = vsel %vm695, %v1223, %v1242
        %v1244 = vmul.f32 %v1243, %v1188
        %1246 = vrot.lane.b32.xlu0 %v1243, 64
        %v1247 = vpop.permute.xlu0 %1246
        %v1249 = vmul.f32 %v1243, %v1247
        %1251 = vrot.lane.b32.xlu0 %v1249, 32
        %v1252 = vpop.permute.xlu0 %1251
        %v1254 = vadd.f32 %v1244, %v1252
        %v1255 = vtanh.pop %v1254
        %1257 = vrot.lane.b32.xlu0 %v1255, 64
        %v1258 = vpop.permute.xlu0 %1257
        %v1260 = vmul.f32 %v1243, %v1258
        %1262 = vrot.lane.b32.xlu0 %v1260, 32
        %v1263 = vpop.permute.xlu0 %1262
        %1265 = vst.msk [vmem:[#allocation3 + $0x30] sm:$0xff] %vm809, %v1263
        %v1266 = vld [vmem:[#allocation2 + $0x1c] sm:$0xf]
        %v1267 = vunpack.c.l.bf16 %v1266
        %v1268 = vpack.c.bf16 %v1260, %v1260
        %1270 = vrot.lane.b32.xlu0 %v1268, 32
        %v1271 = vpop.permute.xlu0 %1270
        %v1273 = vsel %vm809, %v1271, 0
        %1275 = vmatpush.bf16.msra.mxu0 0
        %1276 = vmatpush.bf16.msra.mxu0 0
        %1277 = vmatpush.bf16.msra.mxu0 0
        %1278 = vmatpush.bf16.msra.mxu0 0
        %1279 = vmatpush.bf16.msra.mxu0 0
        %1280 = vmatpush.bf16.msra.mxu0 0
        %1281 = vmatpush.bf16.msra.mxu0 %v806
        %1282 = vmatpush.bf16.msra.mxu0 %v805
        %1283 = vmatmul.bf16.gmra.mxu0 %v1273
        %v1284 = vpop.f32.mrf.mxu0
        %v1285 = vadd.f32 0.0, %v1284
        %v1286 = vpop.f32.mrf.mxu0
        %1287 = vdwg.mxu0
        %v1288 = vadd.f32 %v1267, %v1285
        %v1289 = vtanh.pop %v1288
        %v1290 = vxor.u32 %v1288, 2147483648
        %v1291 = vmul.f32 %v1290, 1.442695
        %v1292 = vpow.pop %v1291
        %v1293 = vadd.f32 %v1292, 1.0
        %v1294 = vrcp.pop %v1293
        %v1295 = vmul.f32 %v1293, %v1294
        %v1296 = vsub.f32 1.0, %v1295
        %v1297 = vmul.f32 %v1294, %v1296
        %v1298 = vadd.f32 %v1294, %v1297
        %vm1299 = vweird.f32 %v1293
        %vm1300 = vweird.f32 %v1294
        %vm1301 = vmor %vm1299, %vm1300
        %v1302 = vsel %vm1301, %v1294, %v1298
        %v1303 = vand.u32 2147483647, %v1293
        %vm1304 = vcmp.eq.f32.partialorder %v1303, 8.507059e+37
        %v1305 = vand.u32 %v1293, 2147483648
        %v1306 = vor.u32 1.1754944e-38, %v1305
        %v1307 = vsel %vm1304, %v1306, %v1302
        %v1308 = vmul.f32 1.0, %v1307
        %v1309 = vsel %vm695, %v1289, %v1308
        %v1310 = vmul.f32 %v1309, %v1254
        %1312 = vrot.lane.b32.xlu0 %v1309, 64
        %v1313 = vpop.permute.xlu0 %1312
        %v1315 = vmul.f32 %v1309, %v1313
        %1317 = vrot.lane.b32.xlu0 %v1315, 32
        %v1318 = vpop.permute.xlu0 %1317
        %v1320 = vadd.f32 %v1310, %v1318
        %v1321 = vtanh.pop %v1320
        %1323 = vrot.lane.b32.xlu0 %v1321, 64
        %v1324 = vpop.permute.xlu0 %1323
        %v1326 = vmul.f32 %v1309, %v1324
        %1328 = vrot.lane.b32.xlu0 %v1326, 32
        %v1329 = vpop.permute.xlu0 %1328
        %1331 = vst.msk [vmem:[#allocation3 + $0x38] sm:$0xff] %vm809, %v1329
        %v1332 = vld [vmem:[#allocation3] sm:$0xff]
        %v1333 = vld [vmem:[#allocation3 + $0x8] sm:$0xff]
        %v1334 = vld [vmem:[#allocation3 + $0x10] sm:$0xff]
        %v1335 = vld [vmem:[#allocation3 + $0x18] sm:$0xff]
        %v1336 = vld [vmem:[#allocation3 + $0x20] sm:$0xff]
        %v1337 = vld [vmem:[#allocation3 + $0x28] sm:$0xff]
        %v1338 = vld [vmem:[#allocation3 + $0x30] sm:$0xff]
        %v1339 = vld [vmem:[#allocation3 + $0x38] sm:$0xff]
        %v1340 = vpack.c.bf16 %v1333, %v1332
        %v1341 = vpack.c.bf16 %v1335, %v1334
        %v1342 = vpack.c.bf16 %v1337, %v1336
        %v1343 = vpack.c.bf16 %v1339, %v1338
        %v1344 = vld [vmem:[#allocation8] sm:$0xf]
        %v1345 = vld [vmem:[#allocation8 + $0x4] sm:$0xf]
        %v1346 = vld [vmem:[#allocation8 + $0x8] sm:$0xf]
        %v1347 = vld [vmem:[#allocation8 + $0xc] sm:$0xf]
        %v1348 = vld [vmem:[%s6] sm:$0x1]
        %v1350 = vperm.slane %v1348, 0
        %v1356 = vunpack.c.l.b16 %v1344
        %v1357 = vunpack.c.l.b16 %v1345
        %v1358 = vunpack.c.l.b16 %v1346
        %v1359 = vunpack.c.l.b16 %v1347
        %v1360 = vpack.c.b16 %v1357, %v1356
        %v1361 = vpack.c.b16 %v1359, %v1358
        %v1365 = vsel %vm809, %v1340, 0
        %v1368 = vsel %vm809, %v1341, 0
        %v1371 = vsel %vm809, %v1342, 0
        %v1374 = vsel %vm809, %v1343, 0
        %1376 = vmatpush.bf16.msra.mxu0 0
        %1377 = vmatpush.bf16.msra.mxu0 0
        %1378 = vmatpush.bf16.msra.mxu0 0
        %1379 = vmatpush.bf16.msra.mxu0 0
        %1380 = vmatpush.bf16.msra.mxu0 0
        %1381 = vmatpush.bf16.msra.mxu0 0
        %1382 = vmatpush.bf16.msra.mxu0 %v1361
        %1383 = vmatpush.bf16.msra.mxu0 %v1360
        %1384 = vmatmul.bf16.gmra.mxu0 %v1365
        %v1385 = vpop.f32.mrf.mxu0
        %v1386 = vadd.f32 %v1350, %v1385
        %v1387 = vpop.f32.mrf.mxu0
        %v1388 = vadd.f32 %v1350, %v1387
        %1389 = vmatmul.bf16.gmra.mxu0 %v1368
        %v1390 = vpop.f32.mrf.mxu0
        %v1391 = vadd.f32 %v1350, %v1390
        %v1392 = vpop.f32.mrf.mxu0
        %v1393 = vadd.f32 %v1350, %v1392
        %1394 = vmatmul.bf16.gmra.mxu0 %v1371
        %v1395 = vpop.f32.mrf.mxu0
        %v1396 = vadd.f32 %v1350, %v1395
        %v1397 = vpop.f32.mrf.mxu0
        %v1398 = vadd.f32 %v1350, %v1397
        %1399 = vmatmul.bf16.gmra.mxu0 %v1374
        %v1400 = vpop.f32.mrf.mxu0
        %v1401 = vadd.f32 %v1350, %v1400
        %v1402 = vpop.f32.mrf.mxu0
        %v1403 = vadd.f32 %v1350, %v1402
        %1404 = vdwg.mxu0
        %v1405 = vpack.c.bf16 %v1386, %v1386
        %v1406 = vpack.c.bf16 %v1388, %v1388
        %v1407 = vpack.c.bf16 %v1391, %v1391
        %v1408 = vpack.c.bf16 %v1393, %v1393
        %v1409 = vpack.c.bf16 %v1396, %v1396
        %v1410 = vpack.c.bf16 %v1398, %v1398
        %v1411 = vpack.c.bf16 %v1401, %v1401
        %v1412 = vpack.c.bf16 %v1403, %v1403
        %1413 = vst [vmem:[#allocation2] sm:$0xf] %v1405
        %1414 = vst [vmem:[#allocation2 + $0x4] sm:$0xf] %v1406
        %1415 = vst [vmem:[#allocation2 + $0x8] sm:$0xf] %v1407
        %1416 = vst [vmem:[#allocation2 + $0xc] sm:$0xf] %v1408
        %1417 = vst [vmem:[#allocation2 + $0x10] sm:$0xf] %v1409
        %1418 = vst [vmem:[#allocation2 + $0x14] sm:$0xf] %v1410
        %1419 = vst [vmem:[#allocation2 + $0x18] sm:$0xf] %v1411
        %1420 = vst [vmem:[#allocation2 + $0x1c] sm:$0xf] %v1412
        %v1421 = vld [vmem:[#allocation10] sm:$0xf]
        %v1422 = vld [vmem:[#allocation10 + $0x4] sm:$0xf]
        %v1423 = vld [vmem:[#allocation10 + $0x8] sm:$0xf]
        %v1424 = vld [vmem:[#allocation10 + $0xc] sm:$0xf]
        %v1425 = vld [vmem:[#allocation2] sm:$0xf]
        %v1426 = vunpack.c.l.bf16 %v1425
        %v1431 = vunpack.c.l.b16 %v1421
        %v1432 = vunpack.c.l.b16 %v1422
        %v1433 = vunpack.c.l.b16 %v1423
        %v1434 = vunpack.c.l.b16 %v1424
        %v1435 = vpack.c.b16 %v1432, %v1431
        %v1436 = vpack.c.b16 %v1434, %v1433
        %1439 = vmatpush.bf16.msra.mxu0 0
        %1440 = vmatpush.bf16.msra.mxu0 0
        %1441 = vmatpush.bf16.msra.mxu0 0
        %1442 = vmatpush.bf16.msra.mxu0 0
        %1443 = vmatpush.bf16.msra.mxu0 0
        %1444 = vmatpush.bf16.msra.mxu0 0
        %1445 = vmatpush.bf16.msra.mxu0 %v1436
        %1446 = vmatpush.bf16.msra.mxu0 %v1435
        %1447 = vmatmul.bf16.gmra.mxu0 %v811
        %v1448 = vpop.f32.mrf.mxu0
        %v1449 = vadd.f32 0.0, %v1448
        %v1450 = vpop.f32.mrf.mxu0
        %1451 = vdwg.mxu0
        %v1452 = vadd.f32 %v1426, %v1449
        %v1453 = vtanh.pop %v1452
        %v1454 = vxor.u32 %v1452, 2147483648
        %v1455 = vmul.f32 %v1454, 1.442695
        %v1456 = vpow.pop %v1455
        %v1457 = vadd.f32 %v1456, 1.0
        %v1458 = vrcp.pop %v1457
        %v1459 = vmul.f32 %v1457, %v1458
        %v1460 = vsub.f32 1.0, %v1459
        %v1461 = vmul.f32 %v1458, %v1460
        %v1462 = vadd.f32 %v1458, %v1461
        %vm1463 = vweird.f32 %v1457
        %vm1464 = vweird.f32 %v1458
        %vm1465 = vmor %vm1463, %vm1464
        %v1466 = vsel %vm1465, %v1458, %v1462
        %v1467 = vand.u32 2147483647, %v1457
        %vm1468 = vcmp.eq.f32.partialorder %v1467, 8.507059e+37
        %v1469 = vand.u32 %v1457, 2147483648
        %v1470 = vor.u32 1.1754944e-38, %v1469
        %v1471 = vsel %vm1468, %v1470, %v1466
        %v1472 = vmul.f32 1.0, %v1471
        %v1473 = vsel %vm695, %v1453, %v1472
        %v1474 = vmul.f32 %v1473, 0.0
        %1476 = vrot.lane.b32.xlu0 %v1473, 64
        %v1477 = vpop.permute.xlu0 %1476
        %v1479 = vmul.f32 %v1473, %v1477
        %1481 = vrot.lane.b32.xlu0 %v1479, 32
        %v1482 = vpop.permute.xlu0 %1481
        %v1484 = vadd.f32 %v1474, %v1482
        %v1485 = vtanh.pop %v1484
        %1487 = vrot.lane.b32.xlu0 %v1485, 64
        %v1488 = vpop.permute.xlu0 %1487
        %v1490 = vmul.f32 %v1473, %v1488
        %1492 = vrot.lane.b32.xlu0 %v1490, 32
        %v1493 = vpop.permute.xlu0 %1492
        %1495 = vst.msk [vmem:[#allocation3] sm:$0xff] %vm809, %v1493
        %v1496 = vld [vmem:[#allocation2 + $0x4] sm:$0xf]
        %v1497 = vunpack.c.l.bf16 %v1496
        %v1498 = vpack.c.bf16 %v1490, %v1490
        %1500 = vrot.lane.b32.xlu0 %v1498, 32
        %v1501 = vpop.permute.xlu0 %1500
        %v1503 = vsel %vm809, %v1501, 0
        %1505 = vmatpush.bf16.msra.mxu0 0
        %1506 = vmatpush.bf16.msra.mxu0 0
        %1507 = vmatpush.bf16.msra.mxu0 0
        %1508 = vmatpush.bf16.msra.mxu0 0
        %1509 = vmatpush.bf16.msra.mxu0 0
        %1510 = vmatpush.bf16.msra.mxu0 0
        %1511 = vmatpush.bf16.msra.mxu0 %v1436
        %1512 = vmatpush.bf16.msra.mxu0 %v1435
        %1513 = vmatmul.bf16.gmra.mxu0 %v1503
        %v1514 = vpop.f32.mrf.mxu0
        %v1515 = vadd.f32 0.0, %v1514
        %v1516 = vpop.f32.mrf.mxu0
        %1517 = vdwg.mxu0
        %v1518 = vadd.f32 %v1497, %v1515
        %v1519 = vtanh.pop %v1518
        %v1520 = vxor.u32 %v1518, 2147483648
        %v1521 = vmul.f32 %v1520, 1.442695
        %v1522 = vpow.pop %v1521
        %v1523 = vadd.f32 %v1522, 1.0
        %v1524 = vrcp.pop %v1523
        %v1525 = vmul.f32 %v1523, %v1524
        %v1526 = vsub.f32 1.0, %v1525
        %v1527 = vmul.f32 %v1524, %v1526
        %v1528 = vadd.f32 %v1524, %v1527
        %vm1529 = vweird.f32 %v1523
        %vm1530 = vweird.f32 %v1524
        %vm1531 = vmor %vm1529, %vm1530
        %v1532 = vsel %vm1531, %v1524, %v1528
        %v1533 = vand.u32 2147483647, %v1523
        %vm1534 = vcmp.eq.f32.partialorder %v1533, 8.507059e+37
        %v1535 = vand.u32 %v1523, 2147483648
        %v1536 = vor.u32 1.1754944e-38, %v1535
        %v1537 = vsel %vm1534, %v1536, %v1532
        %v1538 = vmul.f32 1.0, %v1537
        %v1539 = vsel %vm695, %v1519, %v1538
        %v1540 = vmul.f32 %v1539, %v1484
        %1542 = vrot.lane.b32.xlu0 %v1539, 64
        %v1543 = vpop.permute.xlu0 %1542
        %v1545 = vmul.f32 %v1539, %v1543
        %1547 = vrot.lane.b32.xlu0 %v1545, 32
        %v1548 = vpop.permute.xlu0 %1547
        %v1550 = vadd.f32 %v1540, %v1548
        %v1551 = vtanh.pop %v1550
        %1553 = vrot.lane.b32.xlu0 %v1551, 64
        %v1554 = vpop.permute.xlu0 %1553
        %v1556 = vmul.f32 %v1539, %v1554
        %1558 = vrot.lane.b32.xlu0 %v1556, 32
        %v1559 = vpop.permute.xlu0 %1558
        %1561 = vst.msk [vmem:[#allocation3 + $0x8] sm:$0xff] %vm809, %v1559
        %v1562 = vld [vmem:[#allocation2 + $0x8] sm:$0xf]
        %v1563 = vunpack.c.l.bf16 %v1562
        %v1564 = vpack.c.bf16 %v1556, %v1556
        %1566 = vrot.lane.b32.xlu0 %v1564, 32
        %v1567 = vpop.permute.xlu0 %1566
        %v1569 = vsel %vm809, %v1567, 0
        %1571 = vmatpush.bf16.msra.mxu0 0
        %1572 = vmatpush.bf16.msra.mxu0 0
        %1573 = vmatpush.bf16.msra.mxu0 0
        %1574 = vmatpush.bf16.msra.mxu0 0
        %1575 = vmatpush.bf16.msra.mxu0 0
        %1576 = vmatpush.bf16.msra.mxu0 0
        %1577 = vmatpush.bf16.msra.mxu0 %v1436
        %1578 = vmatpush.bf16.msra.mxu0 %v1435
        %1579 = vmatmul.bf16.gmra.mxu0 %v1569
        %v1580 = vpop.f32.mrf.mxu0
        %v1581 = vadd.f32 0.0, %v1580
        %v1582 = vpop.f32.mrf.mxu0
        %1583 = vdwg.mxu0
        %v1584 = vadd.f32 %v1563, %v1581
        %v1585 = vtanh.pop %v1584
        %v1586 = vxor.u32 %v1584, 2147483648
        %v1587 = vmul.f32 %v1586, 1.442695
        %v1588 = vpow.pop %v1587
        %v1589 = vadd.f32 %v1588, 1.0
        %v1590 = vrcp.pop %v1589
        %v1591 = vmul.f32 %v1589, %v1590
        %v1592 = vsub.f32 1.0, %v1591
        %v1593 = vmul.f32 %v1590, %v1592
        %v1594 = vadd.f32 %v1590, %v1593
        %vm1595 = vweird.f32 %v1589
        %vm1596 = vweird.f32 %v1590
        %vm1597 = vmor %vm1595, %vm1596
        %v1598 = vsel %vm1597, %v1590, %v1594
        %v1599 = vand.u32 2147483647, %v1589
        %vm1600 = vcmp.eq.f32.partialorder %v1599, 8.507059e+37
        %v1601 = vand.u32 %v1589, 2147483648
        %v1602 = vor.u32 1.1754944e-38, %v1601
        %v1603 = vsel %vm1600, %v1602, %v1598
        %v1604 = vmul.f32 1.0, %v1603
        %v1605 = vsel %vm695, %v1585, %v1604
        %v1606 = vmul.f32 %v1605, %v1550
        %1608 = vrot.lane.b32.xlu0 %v1605, 64
        %v1609 = vpop.permute.xlu0 %1608
        %v1611 = vmul.f32 %v1605, %v1609
        %1613 = vrot.lane.b32.xlu0 %v1611, 32
        %v1614 = vpop.permute.xlu0 %1613
        %v1616 = vadd.f32 %v1606, %v1614
        %v1617 = vtanh.pop %v1616
        %1619 = vrot.lane.b32.xlu0 %v1617, 64
        %v1620 = vpop.permute.xlu0 %1619
        %v1622 = vmul.f32 %v1605, %v1620
        %1624 = vrot.lane.b32.xlu0 %v1622, 32
        %v1625 = vpop.permute.xlu0 %1624
        %1627 = vst.msk [vmem:[#allocation3 + $0x10] sm:$0xff] %vm809, %v1625
        %v1628 = vld [vmem:[#allocation2 + $0xc] sm:$0xf]
        %v1629 = vunpack.c.l.bf16 %v1628
        %v1630 = vpack.c.bf16 %v1622, %v1622
        %1632 = vrot.lane.b32.xlu0 %v1630, 32
        %v1633 = vpop.permute.xlu0 %1632
        %v1635 = vsel %vm809, %v1633, 0
        %1637 = vmatpush.bf16.msra.mxu0 0
        %1638 = vmatpush.bf16.msra.mxu0 0
        %1639 = vmatpush.bf16.msra.mxu0 0
        %1640 = vmatpush.bf16.msra.mxu0 0
        %1641 = vmatpush.bf16.msra.mxu0 0
        %1642 = vmatpush.bf16.msra.mxu0 0
        %1643 = vmatpush.bf16.msra.mxu0 %v1436
        %1644 = vmatpush.bf16.msra.mxu0 %v1435
        %1645 = vmatmul.bf16.gmra.mxu0 %v1635
        %v1646 = vpop.f32.mrf.mxu0
        %v1647 = vadd.f32 0.0, %v1646
        %v1648 = vpop.f32.mrf.mxu0
        %1649 = vdwg.mxu0
        %v1650 = vadd.f32 %v1629, %v1647
        %v1651 = vtanh.pop %v1650
        %v1652 = vxor.u32 %v1650, 2147483648
        %v1653 = vmul.f32 %v1652, 1.442695
        %v1654 = vpow.pop %v1653
        %v1655 = vadd.f32 %v1654, 1.0
        %v1656 = vrcp.pop %v1655
        %v1657 = vmul.f32 %v1655, %v1656
        %v1658 = vsub.f32 1.0, %v1657
        %v1659 = vmul.f32 %v1656, %v1658
        %v1660 = vadd.f32 %v1656, %v1659
        %vm1661 = vweird.f32 %v1655
        %vm1662 = vweird.f32 %v1656
        %vm1663 = vmor %vm1661, %vm1662
        %v1664 = vsel %vm1663, %v1656, %v1660
        %v1665 = vand.u32 2147483647, %v1655
        %vm1666 = vcmp.eq.f32.partialorder %v1665, 8.507059e+37
        %v1667 = vand.u32 %v1655, 2147483648
        %v1668 = vor.u32 1.1754944e-38, %v1667
        %v1669 = vsel %vm1666, %v1668, %v1664
        %v1670 = vmul.f32 1.0, %v1669
        %v1671 = vsel %vm695, %v1651, %v1670
        %v1672 = vmul.f32 %v1671, %v1616
        %1674 = vrot.lane.b32.xlu0 %v1671, 64
        %v1675 = vpop.permute.xlu0 %1674
        %v1677 = vmul.f32 %v1671, %v1675
        %1679 = vrot.lane.b32.xlu0 %v1677, 32
        %v1680 = vpop.permute.xlu0 %1679
        %v1682 = vadd.f32 %v1672, %v1680
        %v1683 = vtanh.pop %v1682
        %1685 = vrot.lane.b32.xlu0 %v1683, 64
        %v1686 = vpop.permute.xlu0 %1685
        %v1688 = vmul.f32 %v1671, %v1686
        %1690 = vrot.lane.b32.xlu0 %v1688, 32
        %v1691 = vpop.permute.xlu0 %1690
        %1693 = vst.msk [vmem:[#allocation3 + $0x18] sm:$0xff] %vm809, %v1691
        %v1694 = vld [vmem:[#allocation2 + $0x10] sm:$0xf]
        %v1695 = vunpack.c.l.bf16 %v1694
        %v1696 = vpack.c.bf16 %v1688, %v1688
        %1698 = vrot.lane.b32.xlu0 %v1696, 32
        %v1699 = vpop.permute.xlu0 %1698
        %v1701 = vsel %vm809, %v1699, 0
        %1703 = vmatpush.bf16.msra.mxu0 0
        %1704 = vmatpush.bf16.msra.mxu0 0
        %1705 = vmatpush.bf16.msra.mxu0 0
        %1706 = vmatpush.bf16.msra.mxu0 0
        %1707 = vmatpush.bf16.msra.mxu0 0
        %1708 = vmatpush.bf16.msra.mxu0 0
        %1709 = vmatpush.bf16.msra.mxu0 %v1436
        %1710 = vmatpush.bf16.msra.mxu0 %v1435
        %1711 = vmatmul.bf16.gmra.mxu0 %v1701
        %v1712 = vpop.f32.mrf.mxu0
        %v1713 = vadd.f32 0.0, %v1712
        %v1714 = vpop.f32.mrf.mxu0
        %1715 = vdwg.mxu0
        %v1716 = vadd.f32 %v1695, %v1713
        %v1717 = vtanh.pop %v1716
        %v1718 = vxor.u32 %v1716, 2147483648
        %v1719 = vmul.f32 %v1718, 1.442695
        %v1720 = vpow.pop %v1719
        %v1721 = vadd.f32 %v1720, 1.0
        %v1722 = vrcp.pop %v1721
        %v1723 = vmul.f32 %v1721, %v1722
        %v1724 = vsub.f32 1.0, %v1723
        %v1725 = vmul.f32 %v1722, %v1724
        %v1726 = vadd.f32 %v1722, %v1725
        %vm1727 = vweird.f32 %v1721
        %vm1728 = vweird.f32 %v1722
        %vm1729 = vmor %vm1727, %vm1728
        %v1730 = vsel %vm1729, %v1722, %v1726
        %v1731 = vand.u32 2147483647, %v1721
        %vm1732 = vcmp.eq.f32.partialorder %v1731, 8.507059e+37
        %v1733 = vand.u32 %v1721, 2147483648
        %v1734 = vor.u32 1.1754944e-38, %v1733
        %v1735 = vsel %vm1732, %v1734, %v1730
        %v1736 = vmul.f32 1.0, %v1735
        %v1737 = vsel %vm695, %v1717, %v1736
        %v1738 = vmul.f32 %v1737, %v1682
        %1740 = vrot.lane.b32.xlu0 %v1737, 64
        %v1741 = vpop.permute.xlu0 %1740
        %v1743 = vmul.f32 %v1737, %v1741
        %1745 = vrot.lane.b32.xlu0 %v1743, 32
        %v1746 = vpop.permute.xlu0 %1745
        %v1748 = vadd.f32 %v1738, %v1746
        %v1749 = vtanh.pop %v1748
        %1751 = vrot.lane.b32.xlu0 %v1749, 64
        %v1752 = vpop.permute.xlu0 %1751
        %v1754 = vmul.f32 %v1737, %v1752
        %1756 = vrot.lane.b32.xlu0 %v1754, 32
        %v1757 = vpop.permute.xlu0 %1756
        %1759 = vst.msk [vmem:[#allocation3 + $0x20] sm:$0xff] %vm809, %v1757
        %v1760 = vld [vmem:[#allocation2 + $0x14] sm:$0xf]
        %v1761 = vunpack.c.l.bf16 %v1760
        %v1762 = vpack.c.bf16 %v1754, %v1754
        %1764 = vrot.lane.b32.xlu0 %v1762, 32
        %v1765 = vpop.permute.xlu0 %1764
        %v1767 = vsel %vm809, %v1765, 0
        %1769 = vmatpush.bf16.msra.mxu0 0
        %1770 = vmatpush.bf16.msra.mxu0 0
        %1771 = vmatpush.bf16.msra.mxu0 0
        %1772 = vmatpush.bf16.msra.mxu0 0
        %1773 = vmatpush.bf16.msra.mxu0 0
        %1774 = vmatpush.bf16.msra.mxu0 0
        %1775 = vmatpush.bf16.msra.mxu0 %v1436
        %1776 = vmatpush.bf16.msra.mxu0 %v1435
        %1777 = vmatmul.bf16.gmra.mxu0 %v1767
        %v1778 = vpop.f32.mrf.mxu0
        %v1779 = vadd.f32 0.0, %v1778
        %v1780 = vpop.f32.mrf.mxu0
        %1781 = vdwg.mxu0
        %v1782 = vadd.f32 %v1761, %v1779
        %v1783 = vtanh.pop %v1782
        %v1784 = vxor.u32 %v1782, 2147483648
        %v1785 = vmul.f32 %v1784, 1.442695
        %v1786 = vpow.pop %v1785
        %v1787 = vadd.f32 %v1786, 1.0
        %v1788 = vrcp.pop %v1787
        %v1789 = vmul.f32 %v1787, %v1788
        %v1790 = vsub.f32 1.0, %v1789
        %v1791 = vmul.f32 %v1788, %v1790
        %v1792 = vadd.f32 %v1788, %v1791
        %vm1793 = vweird.f32 %v1787
        %vm1794 = vweird.f32 %v1788
        %vm1795 = vmor %vm1793, %vm1794
        %v1796 = vsel %vm1795, %v1788, %v1792
        %v1797 = vand.u32 2147483647, %v1787
        %vm1798 = vcmp.eq.f32.partialorder %v1797, 8.507059e+37
        %v1799 = vand.u32 %v1787, 2147483648
        %v1800 = vor.u32 1.1754944e-38, %v1799
        %v1801 = vsel %vm1798, %v1800, %v1796
        %v1802 = vmul.f32 1.0, %v1801
        %v1803 = vsel %vm695, %v1783, %v1802
        %v1804 = vmul.f32 %v1803, %v1748
        %1806 = vrot.lane.b32.xlu0 %v1803, 64
        %v1807 = vpop.permute.xlu0 %1806
        %v1809 = vmul.f32 %v1803, %v1807
        %1811 = vrot.lane.b32.xlu0 %v1809, 32
        %v1812 = vpop.permute.xlu0 %1811
        %v1814 = vadd.f32 %v1804, %v1812
        %v1815 = vtanh.pop %v1814
        %1817 = vrot.lane.b32.xlu0 %v1815, 64
        %v1818 = vpop.permute.xlu0 %1817
        %v1820 = vmul.f32 %v1803, %v1818
        %1822 = vrot.lane.b32.xlu0 %v1820, 32
        %v1823 = vpop.permute.xlu0 %1822
        %1825 = vst.msk [vmem:[#allocation3 + $0x28] sm:$0xff] %vm809, %v1823
        %v1826 = vld [vmem:[#allocation2 + $0x18] sm:$0xf]
        %v1827 = vunpack.c.l.bf16 %v1826
        %v1828 = vpack.c.bf16 %v1820, %v1820
        %1830 = vrot.lane.b32.xlu0 %v1828, 32
        %v1831 = vpop.permute.xlu0 %1830
        %v1833 = vsel %vm809, %v1831, 0
        %1835 = vmatpush.bf16.msra.mxu0 0
        %1836 = vmatpush.bf16.msra.mxu0 0
        %1837 = vmatpush.bf16.msra.mxu0 0
        %1838 = vmatpush.bf16.msra.mxu0 0
        %1839 = vmatpush.bf16.msra.mxu0 0
        %1840 = vmatpush.bf16.msra.mxu0 0
        %1841 = vmatpush.bf16.msra.mxu0 %v1436
        %1842 = vmatpush.bf16.msra.mxu0 %v1435
        %1843 = vmatmul.bf16.gmra.mxu0 %v1833
        %v1844 = vpop.f32.mrf.mxu0
        %v1845 = vadd.f32 0.0, %v1844
        %v1846 = vpop.f32.mrf.mxu0
        %1847 = vdwg.mxu0
        %v1848 = vadd.f32 %v1827, %v1845
        %v1849 = vtanh.pop %v1848
        %v1850 = vxor.u32 %v1848, 2147483648
        %v1851 = vmul.f32 %v1850, 1.442695
        %v1852 = vpow.pop %v1851
        %v1853 = vadd.f32 %v1852, 1.0
        %v1854 = vrcp.pop %v1853
        %v1855 = vmul.f32 %v1853, %v1854
        %v1856 = vsub.f32 1.0, %v1855
        %v1857 = vmul.f32 %v1854, %v1856
        %v1858 = vadd.f32 %v1854, %v1857
        %vm1859 = vweird.f32 %v1853
        %vm1860 = vweird.f32 %v1854
        %vm1861 = vmor %vm1859, %vm1860
        %v1862 = vsel %vm1861, %v1854, %v1858
        %v1863 = vand.u32 2147483647, %v1853
        %vm1864 = vcmp.eq.f32.partialorder %v1863, 8.507059e+37
        %v1865 = vand.u32 %v1853, 2147483648
        %v1866 = vor.u32 1.1754944e-38, %v1865
        %v1867 = vsel %vm1864, %v1866, %v1862
        %v1868 = vmul.f32 1.0, %v1867
        %v1869 = vsel %vm695, %v1849, %v1868
        %v1870 = vmul.f32 %v1869, %v1814
        %1872 = vrot.lane.b32.xlu0 %v1869, 64
        %v1873 = vpop.permute.xlu0 %1872
        %v1875 = vmul.f32 %v1869, %v1873
        %1877 = vrot.lane.b32.xlu0 %v1875, 32
        %v1878 = vpop.permute.xlu0 %1877
        %v1880 = vadd.f32 %v1870, %v1878
        %v1881 = vtanh.pop %v1880
        %1883 = vrot.lane.b32.xlu0 %v1881, 64
        %v1884 = vpop.permute.xlu0 %1883
        %v1886 = vmul.f32 %v1869, %v1884
        %1888 = vrot.lane.b32.xlu0 %v1886, 32
        %v1889 = vpop.permute.xlu0 %1888
        %1891 = vst.msk [vmem:[#allocation3 + $0x30] sm:$0xff] %vm809, %v1889
        %v1892 = vld [vmem:[#allocation2 + $0x1c] sm:$0xf]
        %v1893 = vunpack.c.l.bf16 %v1892
        %v1894 = vpack.c.bf16 %v1886, %v1886
        %1896 = vrot.lane.b32.xlu0 %v1894, 32
        %v1897 = vpop.permute.xlu0 %1896
        %v1899 = vsel %vm809, %v1897, 0
        %1901 = vmatpush.bf16.msra.mxu0 0
        %1902 = vmatpush.bf16.msra.mxu0 0
        %1903 = vmatpush.bf16.msra.mxu0 0
        %1904 = vmatpush.bf16.msra.mxu0 0
        %1905 = vmatpush.bf16.msra.mxu0 0
        %1906 = vmatpush.bf16.msra.mxu0 0
        %1907 = vmatpush.bf16.msra.mxu0 %v1436
        %1908 = vmatpush.bf16.msra.mxu0 %v1435
        %1909 = vmatmul.bf16.gmra.mxu0 %v1899
        %v1910 = vpop.f32.mrf.mxu0
        %v1911 = vadd.f32 0.0, %v1910
        %v1912 = vpop.f32.mrf.mxu0
        %1913 = vdwg.mxu0
        %v1914 = vadd.f32 %v1893, %v1911
        %v1915 = vtanh.pop %v1914
        %v1916 = vxor.u32 %v1914, 2147483648
        %v1917 = vmul.f32 %v1916, 1.442695
        %v1918 = vpow.pop %v1917
        %v1919 = vadd.f32 %v1918, 1.0
        %v1920 = vrcp.pop %v1919
        %v1921 = vmul.f32 %v1919, %v1920
        %v1922 = vsub.f32 1.0, %v1921
        %v1923 = vmul.f32 %v1920, %v1922
        %v1924 = vadd.f32 %v1920, %v1923
        %vm1925 = vweird.f32 %v1919
        %vm1926 = vweird.f32 %v1920
        %vm1927 = vmor %vm1925, %vm1926
        %v1928 = vsel %vm1927, %v1920, %v1924
        %v1929 = vand.u32 2147483647, %v1919
        %vm1930 = vcmp.eq.f32.partialorder %v1929, 8.507059e+37
        %v1931 = vand.u32 %v1919, 2147483648
        %v1932 = vor.u32 1.1754944e-38, %v1931
        %v1933 = vsel %vm1930, %v1932, %v1928
        %v1934 = vmul.f32 1.0, %v1933
        %v1935 = vsel %vm695, %v1915, %v1934
        %v1936 = vmul.f32 %v1935, %v1880
        %1938 = vrot.lane.b32.xlu0 %v1935, 64
        %v1939 = vpop.permute.xlu0 %1938
        %v1941 = vmul.f32 %v1935, %v1939
        %1943 = vrot.lane.b32.xlu0 %v1941, 32
        %v1944 = vpop.permute.xlu0 %1943
        %v1946 = vadd.f32 %v1936, %v1944
        %v1947 = vtanh.pop %v1946
        %1949 = vrot.lane.b32.xlu0 %v1947, 64
        %v1950 = vpop.permute.xlu0 %1949
        %v1952 = vmul.f32 %v1935, %v1950
        %1954 = vrot.lane.b32.xlu0 %v1952, 32
        %v1955 = vpop.permute.xlu0 %1954
        %1957 = vst.msk [vmem:[#allocation3 + $0x38] sm:$0xff] %vm809, %v1955
        %v1958 = vld [vmem:[#allocation3] sm:$0xff]
        %v1959 = vld [vmem:[#allocation3 + $0x8] sm:$0xff]
        %v1960 = vld [vmem:[#allocation3 + $0x10] sm:$0xff]
        %v1961 = vld [vmem:[#allocation3 + $0x18] sm:$0xff]
        %v1962 = vld [vmem:[#allocation3 + $0x20] sm:$0xff]
        %v1963 = vld [vmem:[#allocation3 + $0x28] sm:$0xff]
        %v1964 = vld [vmem:[#allocation3 + $0x30] sm:$0xff]
        %v1965 = vld [vmem:[#allocation3 + $0x38] sm:$0xff]
        %v1966 = vpack.c.bf16 %v1959, %v1958
        %v1967 = vpack.c.bf16 %v1961, %v1960
        %v1968 = vpack.c.bf16 %v1963, %v1962
        %v1969 = vpack.c.bf16 %v1965, %v1964
        %v1970 = vld [vmem:[#allocation11] sm:$0xf]
        %v1971 = vld [vmem:[#allocation11 + $0x4] sm:$0xf]
        %v1972 = vld [vmem:[#allocation11 + $0x8] sm:$0xf]
        %v1973 = vld [vmem:[#allocation11 + $0xc] sm:$0xf]
        %v1974 = vld [vmem:[%s9] sm:$0x1]
        %v1976 = vperm.slane %v1974, 0
        %v1982 = vunpack.c.l.b16 %v1970
        %v1983 = vunpack.c.l.b16 %v1971
        %v1984 = vunpack.c.l.b16 %v1972
        %v1985 = vunpack.c.l.b16 %v1973
        %v1986 = vpack.c.b16 %v1983, %v1982
        %v1987 = vpack.c.b16 %v1985, %v1984
        %v1991 = vsel %vm809, %v1966, 0
        %v1994 = vsel %vm809, %v1967, 0
        %v1997 = vsel %vm809, %v1968, 0
        %v2000 = vsel %vm809, %v1969, 0
        %2002 = vmatpush.bf16.msra.mxu0 0
        %2003 = vmatpush.bf16.msra.mxu0 0
        %2004 = vmatpush.bf16.msra.mxu0 0
        %2005 = vmatpush.bf16.msra.mxu0 0
        %2006 = vmatpush.bf16.msra.mxu0 0
        %2007 = vmatpush.bf16.msra.mxu0 0
        %2008 = vmatpush.bf16.msra.mxu0 %v1987
        %2009 = vmatpush.bf16.msra.mxu0 %v1986
        %2010 = vmatmul.bf16.gmra.mxu0 %v1991
        %v2011 = vpop.f32.mrf.mxu0
        %v2012 = vadd.f32 %v1976, %v2011
        %v2013 = vpop.f32.mrf.mxu0
        %v2014 = vadd.f32 %v1976, %v2013
        %2015 = vmatmul.bf16.gmra.mxu0 %v1994
        %v2016 = vpop.f32.mrf.mxu0
        %v2017 = vadd.f32 %v1976, %v2016
        %v2018 = vpop.f32.mrf.mxu0
        %v2019 = vadd.f32 %v1976, %v2018
        %2020 = vmatmul.bf16.gmra.mxu0 %v1997
        %v2021 = vpop.f32.mrf.mxu0
        %v2022 = vadd.f32 %v1976, %v2021
        %v2023 = vpop.f32.mrf.mxu0
        %v2024 = vadd.f32 %v1976, %v2023
        %2025 = vmatmul.bf16.gmra.mxu0 %v2000
        %v2026 = vpop.f32.mrf.mxu0
        %v2027 = vadd.f32 %v1976, %v2026
        %v2028 = vpop.f32.mrf.mxu0
        %v2029 = vadd.f32 %v1976, %v2028
        %2030 = vdwg.mxu0
        %v2031 = vpack.c.bf16 %v2012, %v2012
        %v2032 = vpack.c.bf16 %v2014, %v2014
        %v2033 = vpack.c.bf16 %v2017, %v2017
        %v2034 = vpack.c.bf16 %v2019, %v2019
        %v2035 = vpack.c.bf16 %v2022, %v2022
        %v2036 = vpack.c.bf16 %v2024, %v2024
        %v2037 = vpack.c.bf16 %v2027, %v2027
        %v2038 = vpack.c.bf16 %v2029, %v2029
        %2039 = vst [vmem:[#allocation2] sm:$0xf] %v2031
        %2040 = vst [vmem:[#allocation2 + $0x4] sm:$0xf] %v2032
        %2041 = vst [vmem:[#allocation2 + $0x8] sm:$0xf] %v2033
        %2042 = vst [vmem:[#allocation2 + $0xc] sm:$0xf] %v2034
        %2043 = vst [vmem:[#allocation2 + $0x10] sm:$0xf] %v2035
        %2044 = vst [vmem:[#allocation2 + $0x14] sm:$0xf] %v2036
        %2045 = vst [vmem:[#allocation2 + $0x18] sm:$0xf] %v2037
        %2046 = vst [vmem:[#allocation2 + $0x1c] sm:$0xf] %v2038
        %v2047 = vld [vmem:[#allocation13] sm:$0xf]
        %v2048 = vld [vmem:[#allocation13 + $0x4] sm:$0xf]
        %v2049 = vld [vmem:[#allocation13 + $0x8] sm:$0xf]
        %v2050 = vld [vmem:[#allocation13 + $0xc] sm:$0xf]
        %v2051 = vld [vmem:[%s10] sm:$0xf]
        %v2052 = vld [vmem:[%s10 + $0x4] sm:$0xf]
        %v2053 = vld [vmem:[%s10 + $0x8] sm:$0xf]
        %v2054 = vld [vmem:[%s10 + $0xc] sm:$0xf]
        %v2055 = vld [vmem:[#allocation4] sm:$0x1]
        %v2056 = vld [vmem:[#allocation2] sm:$0xf]
        %v2057 = vunpack.c.l.bf16 %v2056
        %v2062 = vunpack.c.l.b16 %v2047
        %v2063 = vunpack.c.l.b16 %v2048
        %v2064 = vunpack.c.l.b16 %v2049
        %v2065 = vunpack.c.l.b16 %v2050
        %v2066 = vpack.c.b16 %v2063, %v2062
        %v2067 = vpack.c.b16 %v2065, %v2064
        %2070 = vmatpush.bf16.msra.mxu0 0
        %2071 = vmatpush.bf16.msra.mxu0 0
        %2072 = vmatpush.bf16.msra.mxu0 0
        %2073 = vmatpush.bf16.msra.mxu0 0
        %2074 = vmatpush.bf16.msra.mxu0 0
        %2075 = vmatpush.bf16.msra.mxu0 0
        %2076 = vmatpush.bf16.msra.mxu0 %v2067
        %2077 = vmatpush.bf16.msra.mxu0 %v2066
        %2078 = vmatmul.bf16.gmra.mxu0 %v811
        %v2079 = vpop.f32.mrf.mxu0
        %v2080 = vadd.f32 0.0, %v2079
        %v2081 = vpop.f32.mrf.mxu0
        %2082 = vdwg.mxu0
        %v2083 = vadd.f32 %v2057, %v2080
        %v2084 = vtanh.pop %v2083
        %v2085 = vxor.u32 %v2083, 2147483648
        %v2086 = vmul.f32 %v2085, 1.442695
        %v2087 = vpow.pop %v2086
        %v2088 = vadd.f32 %v2087, 1.0
        %v2089 = vrcp.pop %v2088
        %v2090 = vmul.f32 %v2088, %v2089
        %v2091 = vsub.f32 1.0, %v2090
        %v2092 = vmul.f32 %v2089, %v2091
        %v2093 = vadd.f32 %v2089, %v2092
        %vm2094 = vweird.f32 %v2088
        %vm2095 = vweird.f32 %v2089
        %vm2096 = vmor %vm2094, %vm2095
        %v2097 = vsel %vm2096, %v2089, %v2093
        %v2098 = vand.u32 2147483647, %v2088
        %vm2099 = vcmp.eq.f32.partialorder %v2098, 8.507059e+37
        %v2100 = vand.u32 %v2088, 2147483648
        %v2101 = vor.u32 1.1754944e-38, %v2100
        %v2102 = vsel %vm2099, %v2101, %v2097
        %v2103 = vmul.f32 1.0, %v2102
        %v2104 = vsel %vm695, %v2084, %v2103
        %v2105 = vmul.f32 %v2104, 0.0
        %2107 = vrot.lane.b32.xlu0 %v2104, 64
        %v2108 = vpop.permute.xlu0 %2107
        %v2110 = vmul.f32 %v2104, %v2108
        %2112 = vrot.lane.b32.xlu0 %v2110, 32
        %v2113 = vpop.permute.xlu0 %2112
        %v2115 = vadd.f32 %v2105, %v2113
        %v2116 = vtanh.pop %v2115
        %2118 = vrot.lane.b32.xlu0 %v2116, 64
        %v2119 = vpop.permute.xlu0 %2118
        %v2121 = vmul.f32 %v2104, %v2119
        %v2122 = vpack.c.bf16 %v2121, %v2121
        %v2124 = vperm.slane %v2055, 0
        %2127 = vrot.lane.b32.xlu0 %v2122, 32
        %v2128 = vpop.permute.xlu0 %2127
        %v2133 = vunpack.c.l.b16 %v2051
        %v2134 = vunpack.c.l.b16 %v2052
        %v2135 = vunpack.c.l.b16 %v2053
        %v2136 = vunpack.c.l.b16 %v2054
        %v2137 = vpack.c.b16 %v2134, %v2133
        %v2138 = vpack.c.b16 %v2136, %v2135
        %v2142 = vsel %vm809, %v2128, 0
        %2144 = vmatpush.bf16.msra.mxu0 0
        %2145 = vmatpush.bf16.msra.mxu0 0
        %2146 = vmatpush.bf16.msra.mxu0 0
        %2147 = vmatpush.bf16.msra.mxu0 0
        %2148 = vmatpush.bf16.msra.mxu0 0
        %2149 = vmatpush.bf16.msra.mxu0 0
        %2150 = vmatpush.bf16.msra.mxu0 %v2138
        %2151 = vmatpush.bf16.msra.mxu0 %v2137
        %2152 = vmatmul.bf16.gmra.mxu0 %v2142
        %v2153 = vpop.f32.mrf.mxu0
        %v2154 = vadd.f32 %v2124, %v2153
        %v2155 = vpop.f32.mrf.mxu0
        %2156 = vdwg.mxu0
        %v2157 = vmul.f32 %v2154, 0.17677669
        %v2158 = vsub.f32 -inf, %v2157
        %v2159 = vmul.f32 %v2158, 1.442695
        %v2160 = vpow.pop %v2159
        %v2161 = vsub.f32 %v2157, %v2157
        %v2162 = vmul.f32 %v2161, 1.442695
        %v2163 = vpow.pop %v2162
        %v2164 = vmul.f32 %v2160, 0.0
        %v2165 = vadd.f32 %v2164, %v2163
        %2167 = vset.pattern.permute.xlu0 0
        %2168 = vperm.xlu0 %2167, %v2160
        %v2169 = vpop.permute.xlu0 %2168
        %v2171 = vmul.f32 %v2169, 0.0
        %2173 = vset.pattern.permute.xlu0 0
        %2174 = vperm.xlu0 %2173, %v2163
        %v2175 = vpop.permute.xlu0 %2174
        %v2177 = vmul.f32 %v2175, %v2121
        %v2178 = vadd.f32 %v2171, %v2177
        %v2179 = vld [vmem:[#allocation2 + $0x4] sm:$0xf]
        %v2180 = vunpack.c.l.bf16 %v2179
        %2181 = vmatpush.bf16.msra.mxu0 0
        %2182 = vmatpush.bf16.msra.mxu0 0
        %2183 = vmatpush.bf16.msra.mxu0 0
        %2184 = vmatpush.bf16.msra.mxu0 0
        %2185 = vmatpush.bf16.msra.mxu0 0
        %2186 = vmatpush.bf16.msra.mxu0 0
        %2187 = vmatpush.bf16.msra.mxu0 %v2067
        %2188 = vmatpush.bf16.msra.mxu0 %v2066
        %2189 = vmatmul.bf16.gmra.mxu0 %v2142
        %v2190 = vpop.f32.mrf.mxu0
        %v2191 = vadd.f32 0.0, %v2190
        %v2192 = vpop.f32.mrf.mxu0
        %2193 = vdwg.mxu0
        %v2194 = vadd.f32 %v2180, %v2191
        %v2195 = vtanh.pop %v2194
        %v2196 = vxor.u32 %v2194, 2147483648
        %v2197 = vmul.f32 %v2196, 1.442695
        %v2198 = vpow.pop %v2197
        %v2199 = vadd.f32 %v2198, 1.0
        %v2200 = vrcp.pop %v2199
        %v2201 = vmul.f32 %v2199, %v2200
        %v2202 = vsub.f32 1.0, %v2201
        %v2203 = vmul.f32 %v2200, %v2202
        %v2204 = vadd.f32 %v2200, %v2203
        %vm2205 = vweird.f32 %v2199
        %vm2206 = vweird.f32 %v2200
        %vm2207 = vmor %vm2205, %vm2206
        %v2208 = vsel %vm2207, %v2200, %v2204
        %v2209 = vand.u32 2147483647, %v2199
        %vm2210 = vcmp.eq.f32.partialorder %v2209, 8.507059e+37
        %v2211 = vand.u32 %v2199, 2147483648
        %v2212 = vor.u32 1.1754944e-38, %v2211
        %v2213 = vsel %vm2210, %v2212, %v2208
        %v2214 = vmul.f32 1.0, %v2213
        %v2215 = vsel %vm695, %v2195, %v2214
        %v2216 = vmul.f32 %v2215, %v2115
        %2218 = vrot.lane.b32.xlu0 %v2215, 64
        %v2219 = vpop.permute.xlu0 %2218
        %v2221 = vmul.f32 %v2215, %v2219
        %2223 = vrot.lane.b32.xlu0 %v2221, 32
        %v2224 = vpop.permute.xlu0 %2223
        %v2226 = vadd.f32 %v2216, %v2224
        %v2227 = vtanh.pop %v2226
        %2229 = vrot.lane.b32.xlu0 %v2227, 64
        %v2230 = vpop.permute.xlu0 %2229
        %v2232 = vmul.f32 %v2215, %v2230
        %v2233 = vpack.c.bf16 %v2232, %v2232
        %2235 = vrot.lane.b32.xlu0 %v2233, 32
        %v2236 = vpop.permute.xlu0 %2235
        %v2238 = vsel %vm809, %v2236, 0
        %2240 = vmatpush.bf16.msra.mxu0 0
        %2241 = vmatpush.bf16.msra.mxu0 0
        %2242 = vmatpush.bf16.msra.mxu0 0
        %2243 = vmatpush.bf16.msra.mxu0 0
        %2244 = vmatpush.bf16.msra.mxu0 0
        %2245 = vmatpush.bf16.msra.mxu0 0
        %2246 = vmatpush.bf16.msra.mxu0 %v2138
        %2247 = vmatpush.bf16.msra.mxu0 %v2137
        %2248 = vmatmul.bf16.gmra.mxu0 %v2238
        %v2249 = vpop.f32.mrf.mxu0
        %v2250 = vadd.f32 %v2124, %v2249
        %v2251 = vpop.f32.mrf.mxu0
        %2252 = vdwg.mxu0
        %v2253 = vmul.f32 %v2250, 0.17677669
        %v2254 = vmax.f32 %v2157, %v2253
        %v2255 = vsub.f32 %v2157, %v2254
        %v2256 = vmul.f32 %v2255, 1.442695
        %v2257 = vpow.pop %v2256
        %v2258 = vsub.f32 %v2253, %v2254
        %v2259 = vmul.f32 %v2258, 1.442695
        %v2260 = vpow.pop %v2259
        %v2261 = vmul.f32 %v2257, %v2165
        %v2262 = vadd.f32 %v2261, %v2260
        %2264 = vset.pattern.permute.xlu0 0
        %2265 = vperm.xlu0 %2264, %v2257
        %v2266 = vpop.permute.xlu0 %2265
        %v2268 = vmul.f32 %v2266, %v2178
        %2270 = vset.pattern.permute.xlu0 0
        %2271 = vperm.xlu0 %2270, %v2260
        %v2272 = vpop.permute.xlu0 %2271
        %v2274 = vmul.f32 %v2272, %v2232
        %v2275 = vadd.f32 %v2268, %v2274
        %v2276 = vld [vmem:[#allocation2 + $0x8] sm:$0xf]
        %v2277 = vunpack.c.l.bf16 %v2276
        %2278 = vmatpush.bf16.msra.mxu0 0
        %2279 = vmatpush.bf16.msra.mxu0 0
        %2280 = vmatpush.bf16.msra.mxu0 0
        %2281 = vmatpush.bf16.msra.mxu0 0
        %2282 = vmatpush.bf16.msra.mxu0 0
        %2283 = vmatpush.bf16.msra.mxu0 0
        %2284 = vmatpush.bf16.msra.mxu0 %v2067
        %2285 = vmatpush.bf16.msra.mxu0 %v2066
        %2286 = vmatmul.bf16.gmra.mxu0 %v2238
        %v2287 = vpop.f32.mrf.mxu0
        %v2288 = vadd.f32 0.0, %v2287
        %v2289 = vpop.f32.mrf.mxu0
        %2290 = vdwg.mxu0
        %v2291 = vadd.f32 %v2277, %v2288
        %v2292 = vtanh.pop %v2291
        %v2293 = vxor.u32 %v2291, 2147483648
        %v2294 = vmul.f32 %v2293, 1.442695
        %v2295 = vpow.pop %v2294
        %v2296 = vadd.f32 %v2295, 1.0
        %v2297 = vrcp.pop %v2296
        %v2298 = vmul.f32 %v2296, %v2297
        %v2299 = vsub.f32 1.0, %v2298
        %v2300 = vmul.f32 %v2297, %v2299
        %v2301 = vadd.f32 %v2297, %v2300
        %vm2302 = vweird.f32 %v2296
        %vm2303 = vweird.f32 %v2297
        %vm2304 = vmor %vm2302, %vm2303
        %v2305 = vsel %vm2304, %v2297, %v2301
        %v2306 = vand.u32 2147483647, %v2296
        %vm2307 = vcmp.eq.f32.partialorder %v2306, 8.507059e+37
        %v2308 = vand.u32 %v2296, 2147483648
        %v2309 = vor.u32 1.1754944e-38, %v2308
        %v2310 = vsel %vm2307, %v2309, %v2305
        %v2311 = vmul.f32 1.0, %v2310
        %v2312 = vsel %vm695, %v2292, %v2311
        %v2313 = vmul.f32 %v2312, %v2226
        %2315 = vrot.lane.b32.xlu0 %v2312, 64
        %v2316 = vpop.permute.xlu0 %2315
        %v2318 = vmul.f32 %v2312, %v2316
        %2320 = vrot.lane.b32.xlu0 %v2318, 32
        %v2321 = vpop.permute.xlu0 %2320
        %v2323 = vadd.f32 %v2313, %v2321
        %v2324 = vtanh.pop %v2323
        %2326 = vrot.lane.b32.xlu0 %v2324, 64
        %v2327 = vpop.permute.xlu0 %2326
        %v2329 = vmul.f32 %v2312, %v2327
        %v2330 = vpack.c.bf16 %v2329, %v2329
        %2332 = vrot.lane.b32.xlu0 %v2330, 32
        %v2333 = vpop.permute.xlu0 %2332
        %v2335 = vsel %vm809, %v2333, 0
        %2337 = vmatpush.bf16.msra.mxu0 0
        %2338 = vmatpush.bf16.msra.mxu0 0
        %2339 = vmatpush.bf16.msra.mxu0 0
        %2340 = vmatpush.bf16.msra.mxu0 0
        %2341 = vmatpush.bf16.msra.mxu0 0
        %2342 = vmatpush.bf16.msra.mxu0 0
        %2343 = vmatpush.bf16.msra.mxu0 %v2138
        %2344 = vmatpush.bf16.msra.mxu0 %v2137
        %2345 = vmatmul.bf16.gmra.mxu0 %v2335
        %v2346 = vpop.f32.mrf.mxu0
        %v2347 = vadd.f32 %v2124, %v2346
        %v2348 = vpop.f32.mrf.mxu0
        %2349 = vdwg.mxu0
        %v2350 = vmul.f32 %v2347, 0.17677669
        %v2351 = vmax.f32 %v2254, %v2350
        %v2352 = vsub.f32 %v2254, %v2351
        %v2353 = vmul.f32 %v2352, 1.442695
        %v2354 = vpow.pop %v2353
        %v2355 = vsub.f32 %v2350, %v2351
        %v2356 = vmul.f32 %v2355, 1.442695
        %v2357 = vpow.pop %v2356
        %v2358 = vmul.f32 %v2354, %v2262
        %v2359 = vadd.f32 %v2358, %v2357
        %2361 = vset.pattern.permute.xlu0 0
        %2362 = vperm.xlu0 %2361, %v2354
        %v2363 = vpop.permute.xlu0 %2362
        %v2365 = vmul.f32 %v2363, %v2275
        %2367 = vset.pattern.permute.xlu0 0
        %2368 = vperm.xlu0 %2367, %v2357
        %v2369 = vpop.permute.xlu0 %2368
        %v2371 = vmul.f32 %v2369, %v2329
        %v2372 = vadd.f32 %v2365, %v2371
        %v2373 = vld [vmem:[#allocation2 + $0xc] sm:$0xf]
        %v2374 = vunpack.c.l.bf16 %v2373
        %2375 = vmatpush.bf16.msra.mxu0 0
        %2376 = vmatpush.bf16.msra.mxu0 0
        %2377 = vmatpush.bf16.msra.mxu0 0
        %2378 = vmatpush.bf16.msra.mxu0 0
        %2379 = vmatpush.bf16.msra.mxu0 0
        %2380 = vmatpush.bf16.msra.mxu0 0
        %2381 = vmatpush.bf16.msra.mxu0 %v2067
        %2382 = vmatpush.bf16.msra.mxu0 %v2066
        %2383 = vmatmul.bf16.gmra.mxu0 %v2335
        %v2384 = vpop.f32.mrf.mxu0
        %v2385 = vadd.f32 0.0, %v2384
        %v2386 = vpop.f32.mrf.mxu0
        %2387 = vdwg.mxu0
        %v2388 = vadd.f32 %v2374, %v2385
        %v2389 = vtanh.pop %v2388
        %v2390 = vxor.u32 %v2388, 2147483648
        %v2391 = vmul.f32 %v2390, 1.442695
        %v2392 = vpow.pop %v2391
        %v2393 = vadd.f32 %v2392, 1.0
        %v2394 = vrcp.pop %v2393
        %v2395 = vmul.f32 %v2393, %v2394
        %v2396 = vsub.f32 1.0, %v2395
        %v2397 = vmul.f32 %v2394, %v2396
        %v2398 = vadd.f32 %v2394, %v2397
        %vm2399 = vweird.f32 %v2393
        %vm2400 = vweird.f32 %v2394
        %vm2401 = vmor %vm2399, %vm2400
        %v2402 = vsel %vm2401, %v2394, %v2398
        %v2403 = vand.u32 2147483647, %v2393
        %vm2404 = vcmp.eq.f32.partialorder %v2403, 8.507059e+37
        %v2405 = vand.u32 %v2393, 2147483648
        %v2406 = vor.u32 1.1754944e-38, %v2405
        %v2407 = vsel %vm2404, %v2406, %v2402
        %v2408 = vmul.f32 1.0, %v2407
        %v2409 = vsel %vm695, %v2389, %v2408
        %v2410 = vmul.f32 %v2409, %v2323
        %2412 = vrot.lane.b32.xlu0 %v2409, 64
        %v2413 = vpop.permute.xlu0 %2412
        %v2415 = vmul.f32 %v2409, %v2413
        %2417 = vrot.lane.b32.xlu0 %v2415, 32
        %v2418 = vpop.permute.xlu0 %2417
        %v2420 = vadd.f32 %v2410, %v2418
        %v2421 = vtanh.pop %v2420
        %2423 = vrot.lane.b32.xlu0 %v2421, 64
        %v2424 = vpop.permute.xlu0 %2423
        %v2426 = vmul.f32 %v2409, %v2424
        %v2427 = vpack.c.bf16 %v2426, %v2426
        %2429 = vrot.lane.b32.xlu0 %v2427, 32
        %v2430 = vpop.permute.xlu0 %2429
        %v2432 = vsel %vm809, %v2430, 0
        %2434 = vmatpush.bf16.msra.mxu0 0
        %2435 = vmatpush.bf16.msra.mxu0 0
        %2436 = vmatpush.bf16.msra.mxu0 0
        %2437 = vmatpush.bf16.msra.mxu0 0
        %2438 = vmatpush.bf16.msra.mxu0 0
        %2439 = vmatpush.bf16.msra.mxu0 0
        %2440 = vmatpush.bf16.msra.mxu0 %v2138
        %2441 = vmatpush.bf16.msra.mxu0 %v2137
        %2442 = vmatmul.bf16.gmra.mxu0 %v2432
        %v2443 = vpop.f32.mrf.mxu0
        %v2444 = vadd.f32 %v2124, %v2443
        %v2445 = vpop.f32.mrf.mxu0
        %2446 = vdwg.mxu0
        %v2447 = vmul.f32 %v2444, 0.17677669
        %v2448 = vmax.f32 %v2351, %v2447
        %v2449 = vsub.f32 %v2351, %v2448
        %v2450 = vmul.f32 %v2449, 1.442695
        %v2451 = vpow.pop %v2450
        %v2452 = vsub.f32 %v2447, %v2448
        %v2453 = vmul.f32 %v2452, 1.442695
        %v2454 = vpow.pop %v2453
        %v2455 = vmul.f32 %v2451, %v2359
        %v2456 = vadd.f32 %v2455, %v2454
        %2458 = vset.pattern.permute.xlu0 0
        %2459 = vperm.xlu0 %2458, %v2451
        %v2460 = vpop.permute.xlu0 %2459
        %v2462 = vmul.f32 %v2460, %v2372
        %2464 = vset.pattern.permute.xlu0 0
        %2465 = vperm.xlu0 %2464, %v2454
        %v2466 = vpop.permute.xlu0 %2465
        %v2468 = vmul.f32 %v2466, %v2426
        %v2469 = vadd.f32 %v2462, %v2468
        %v2470 = vld [vmem:[#allocation2 + $0x10] sm:$0xf]
        %v2471 = vunpack.c.l.bf16 %v2470
        %2472 = vmatpush.bf16.msra.mxu0 0
        %2473 = vmatpush.bf16.msra.mxu0 0
        %2474 = vmatpush.bf16.msra.mxu0 0
        %2475 = vmatpush.bf16.msra.mxu0 0
        %2476 = vmatpush.bf16.msra.mxu0 0
        %2477 = vmatpush.bf16.msra.mxu0 0
        %2478 = vmatpush.bf16.msra.mxu0 %v2067
        %2479 = vmatpush.bf16.msra.mxu0 %v2066
        %2480 = vmatmul.bf16.gmra.mxu0 %v2432
        %v2481 = vpop.f32.mrf.mxu0
        %v2482 = vadd.f32 0.0, %v2481
        %v2483 = vpop.f32.mrf.mxu0
        %2484 = vdwg.mxu0
        %v2485 = vadd.f32 %v2471, %v2482
        %v2486 = vtanh.pop %v2485
        %v2487 = vxor.u32 %v2485, 2147483648
        %v2488 = vmul.f32 %v2487, 1.442695
        %v2489 = vpow.pop %v2488
        %v2490 = vadd.f32 %v2489, 1.0
        %v2491 = vrcp.pop %v2490
        %v2492 = vmul.f32 %v2490, %v2491
        %v2493 = vsub.f32 1.0, %v2492
        %v2494 = vmul.f32 %v2491, %v2493
        %v2495 = vadd.f32 %v2491, %v2494
        %vm2496 = vweird.f32 %v2490
        %vm2497 = vweird.f32 %v2491
        %vm2498 = vmor %vm2496, %vm2497
        %v2499 = vsel %vm2498, %v2491, %v2495
        %v2500 = vand.u32 2147483647, %v2490
        %vm2501 = vcmp.eq.f32.partialorder %v2500, 8.507059e+37
        %v2502 = vand.u32 %v2490, 2147483648
        %v2503 = vor.u32 1.1754944e-38, %v2502
        %v2504 = vsel %vm2501, %v2503, %v2499
        %v2505 = vmul.f32 1.0, %v2504
        %v2506 = vsel %vm695, %v2486, %v2505
        %v2507 = vmul.f32 %v2506, %v2420
        %2509 = vrot.lane.b32.xlu0 %v2506, 64
        %v2510 = vpop.permute.xlu0 %2509
        %v2512 = vmul.f32 %v2506, %v2510
        %2514 = vrot.lane.b32.xlu0 %v2512, 32
        %v2515 = vpop.permute.xlu0 %2514
        %v2517 = vadd.f32 %v2507, %v2515
        %v2518 = vtanh.pop %v2517
        %2520 = vrot.lane.b32.xlu0 %v2518, 64
        %v2521 = vpop.permute.xlu0 %2520
        %v2523 = vmul.f32 %v2506, %v2521
        %v2524 = vpack.c.bf16 %v2523, %v2523
        %2526 = vrot.lane.b32.xlu0 %v2524, 32
        %v2527 = vpop.permute.xlu0 %2526
        %v2529 = vsel %vm809, %v2527, 0
        %2531 = vmatpush.bf16.msra.mxu0 0
        %2532 = vmatpush.bf16.msra.mxu0 0
        %2533 = vmatpush.bf16.msra.mxu0 0
        %2534 = vmatpush.bf16.msra.mxu0 0
        %2535 = vmatpush.bf16.msra.mxu0 0
        %2536 = vmatpush.bf16.msra.mxu0 0
        %2537 = vmatpush.bf16.msra.mxu0 %v2138
        %2538 = vmatpush.bf16.msra.mxu0 %v2137
        %2539 = vmatmul.bf16.gmra.mxu0 %v2529
        %v2540 = vpop.f32.mrf.mxu0
        %v2541 = vadd.f32 %v2124, %v2540
        %v2542 = vpop.f32.mrf.mxu0
        %2543 = vdwg.mxu0
        %v2544 = vmul.f32 %v2541, 0.17677669
        %v2545 = vmax.f32 %v2448, %v2544
        %v2546 = vsub.f32 %v2448, %v2545
        %v2547 = vmul.f32 %v2546, 1.442695
        %v2548 = vpow.pop %v2547
        %v2549 = vsub.f32 %v2544, %v2545
        %v2550 = vmul.f32 %v2549, 1.442695
        %v2551 = vpow.pop %v2550
        %v2552 = vmul.f32 %v2548, %v2456
        %v2553 = vadd.f32 %v2552, %v2551
        %2555 = vset.pattern.permute.xlu0 0
        %2556 = vperm.xlu0 %2555, %v2548
        %v2557 = vpop.permute.xlu0 %2556
        %v2559 = vmul.f32 %v2557, %v2469
        %2561 = vset.pattern.permute.xlu0 0
        %2562 = vperm.xlu0 %2561, %v2551
        %v2563 = vpop.permute.xlu0 %2562
        %v2565 = vmul.f32 %v2563, %v2523
        %v2566 = vadd.f32 %v2559, %v2565
        %v2567 = vld [vmem:[#allocation2 + $0x14] sm:$0xf]
        %v2568 = vunpack.c.l.bf16 %v2567
        %2569 = vmatpush.bf16.msra.mxu0 0
        %2570 = vmatpush.bf16.msra.mxu0 0
        %2571 = vmatpush.bf16.msra.mxu0 0
        %2572 = vmatpush.bf16.msra.mxu0 0
        %2573 = vmatpush.bf16.msra.mxu0 0
        %2574 = vmatpush.bf16.msra.mxu0 0
        %2575 = vmatpush.bf16.msra.mxu0 %v2067
        %2576 = vmatpush.bf16.msra.mxu0 %v2066
        %2577 = vmatmul.bf16.gmra.mxu0 %v2529
        %v2578 = vpop.f32.mrf.mxu0
        %v2579 = vadd.f32 0.0, %v2578
        %v2580 = vpop.f32.mrf.mxu0
        %2581 = vdwg.mxu0
        %v2582 = vadd.f32 %v2568, %v2579
        %v2583 = vtanh.pop %v2582
        %v2584 = vxor.u32 %v2582, 2147483648
        %v2585 = vmul.f32 %v2584, 1.442695
        %v2586 = vpow.pop %v2585
        %v2587 = vadd.f32 %v2586, 1.0
        %v2588 = vrcp.pop %v2587
        %v2589 = vmul.f32 %v2587, %v2588
        %v2590 = vsub.f32 1.0, %v2589
        %v2591 = vmul.f32 %v2588, %v2590
        %v2592 = vadd.f32 %v2588, %v2591
        %vm2593 = vweird.f32 %v2587
        %vm2594 = vweird.f32 %v2588
        %vm2595 = vmor %vm2593, %vm2594
        %v2596 = vsel %vm2595, %v2588, %v2592
        %v2597 = vand.u32 2147483647, %v2587
        %vm2598 = vcmp.eq.f32.partialorder %v2597, 8.507059e+37
        %v2599 = vand.u32 %v2587, 2147483648
        %v2600 = vor.u32 1.1754944e-38, %v2599
        %v2601 = vsel %vm2598, %v2600, %v2596
        %v2602 = vmul.f32 1.0, %v2601
        %v2603 = vsel %vm695, %v2583, %v2602
        %v2604 = vmul.f32 %v2603, %v2517
        %2606 = vrot.lane.b32.xlu0 %v2603, 64
        %v2607 = vpop.permute.xlu0 %2606
        %v2609 = vmul.f32 %v2603, %v2607
        %2611 = vrot.lane.b32.xlu0 %v2609, 32
        %v2612 = vpop.permute.xlu0 %2611
        %v2614 = vadd.f32 %v2604, %v2612
        %v2615 = vtanh.pop %v2614
        %2617 = vrot.lane.b32.xlu0 %v2615, 64
        %v2618 = vpop.permute.xlu0 %2617
        %v2620 = vmul.f32 %v2603, %v2618
        %v2621 = vpack.c.bf16 %v2620, %v2620
        %2623 = vrot.lane.b32.xlu0 %v2621, 32
        %v2624 = vpop.permute.xlu0 %2623
        %v2626 = vsel %vm809, %v2624, 0
        %2628 = vmatpush.bf16.msra.mxu0 0
        %2629 = vmatpush.bf16.msra.mxu0 0
        %2630 = vmatpush.bf16.msra.mxu0 0
        %2631 = vmatpush.bf16.msra.mxu0 0
        %2632 = vmatpush.bf16.msra.mxu0 0
        %2633 = vmatpush.bf16.msra.mxu0 0
        %2634 = vmatpush.bf16.msra.mxu0 %v2138
        %2635 = vmatpush.bf16.msra.mxu0 %v2137
        %2636 = vmatmul.bf16.gmra.mxu0 %v2626
        %v2637 = vpop.f32.mrf.mxu0
        %v2638 = vadd.f32 %v2124, %v2637
        %v2639 = vpop.f32.mrf.mxu0
        %2640 = vdwg.mxu0
        %v2641 = vmul.f32 %v2638, 0.17677669
        %v2642 = vmax.f32 %v2545, %v2641
        %v2643 = vsub.f32 %v2545, %v2642
        %v2644 = vmul.f32 %v2643, 1.442695
        %v2645 = vpow.pop %v2644
        %v2646 = vsub.f32 %v2641, %v2642
        %v2647 = vmul.f32 %v2646, 1.442695
        %v2648 = vpow.pop %v2647
        %v2649 = vmul.f32 %v2645, %v2553
        %v2650 = vadd.f32 %v2649, %v2648
        %2652 = vset.pattern.permute.xlu0 0
        %2653 = vperm.xlu0 %2652, %v2645
        %v2654 = vpop.permute.xlu0 %2653
        %v2656 = vmul.f32 %v2654, %v2566
        %2658 = vset.pattern.permute.xlu0 0
        %2659 = vperm.xlu0 %2658, %v2648
        %v2660 = vpop.permute.xlu0 %2659
        %v2662 = vmul.f32 %v2660, %v2620
        %v2663 = vadd.f32 %v2656, %v2662
        %v2664 = vld [vmem:[#allocation2 + $0x18] sm:$0xf]
        %v2665 = vunpack.c.l.bf16 %v2664
        %2666 = vmatpush.bf16.msra.mxu0 0
        %2667 = vmatpush.bf16.msra.mxu0 0
        %2668 = vmatpush.bf16.msra.mxu0 0
        %2669 = vmatpush.bf16.msra.mxu0 0
        %2670 = vmatpush.bf16.msra.mxu0 0
        %2671 = vmatpush.bf16.msra.mxu0 0
        %2672 = vmatpush.bf16.msra.mxu0 %v2067
        %2673 = vmatpush.bf16.msra.mxu0 %v2066
        %2674 = vmatmul.bf16.gmra.mxu0 %v2626
        %v2675 = vpop.f32.mrf.mxu0
        %v2676 = vadd.f32 0.0, %v2675
        %v2677 = vpop.f32.mrf.mxu0
        %2678 = vdwg.mxu0
        %v2679 = vadd.f32 %v2665, %v2676
        %v2680 = vtanh.pop %v2679
        %v2681 = vxor.u32 %v2679, 2147483648
        %v2682 = vmul.f32 %v2681, 1.442695
        %v2683 = vpow.pop %v2682
        %v2684 = vadd.f32 %v2683, 1.0
        %v2685 = vrcp.pop %v2684
        %v2686 = vmul.f32 %v2684, %v2685
        %v2687 = vsub.f32 1.0, %v2686
        %v2688 = vmul.f32 %v2685, %v2687
        %v2689 = vadd.f32 %v2685, %v2688
        %vm2690 = vweird.f32 %v2684
        %vm2691 = vweird.f32 %v2685
        %vm2692 = vmor %vm2690, %vm2691
        %v2693 = vsel %vm2692, %v2685, %v2689
        %v2694 = vand.u32 2147483647, %v2684
        %vm2695 = vcmp.eq.f32.partialorder %v2694, 8.507059e+37
        %v2696 = vand.u32 %v2684, 2147483648
        %v2697 = vor.u32 1.1754944e-38, %v2696
        %v2698 = vsel %vm2695, %v2697, %v2693
        %v2699 = vmul.f32 1.0, %v2698
        %v2700 = vsel %vm695, %v2680, %v2699
        %v2701 = vmul.f32 %v2700, %v2614
        %2703 = vrot.lane.b32.xlu0 %v2700, 64
        %v2704 = vpop.permute.xlu0 %2703
        %v2706 = vmul.f32 %v2700, %v2704
        %2708 = vrot.lane.b32.xlu0 %v2706, 32
        %v2709 = vpop.permute.xlu0 %2708
        %v2711 = vadd.f32 %v2701, %v2709
        %v2712 = vtanh.pop %v2711
        %2714 = vrot.lane.b32.xlu0 %v2712, 64
        %v2715 = vpop.permute.xlu0 %2714
        %v2717 = vmul.f32 %v2700, %v2715
        %v2718 = vpack.c.bf16 %v2717, %v2717
        %2720 = vrot.lane.b32.xlu0 %v2718, 32
        %v2721 = vpop.permute.xlu0 %2720
        %v2723 = vsel %vm809, %v2721, 0
        %2725 = vmatpush.bf16.msra.mxu0 0
        %2726 = vmatpush.bf16.msra.mxu0 0
        %2727 = vmatpush.bf16.msra.mxu0 0
        %2728 = vmatpush.bf16.msra.mxu0 0
        %2729 = vmatpush.bf16.msra.mxu0 0
        %2730 = vmatpush.bf16.msra.mxu0 0
        %2731 = vmatpush.bf16.msra.mxu0 %v2138
        %2732 = vmatpush.bf16.msra.mxu0 %v2137
        %2733 = vmatmul.bf16.gmra.mxu0 %v2723
        %v2734 = vpop.f32.mrf.mxu0
        %v2735 = vadd.f32 %v2124, %v2734
        %v2736 = vpop.f32.mrf.mxu0
        %2737 = vdwg.mxu0
        %v2738 = vmul.f32 %v2735, 0.17677669
        %v2739 = vmax.f32 %v2642, %v2738
        %v2740 = vsub.f32 %v2642, %v2739
        %v2741 = vmul.f32 %v2740, 1.442695
        %v2742 = vpow.pop %v2741
        %v2743 = vsub.f32 %v2738, %v2739
        %v2744 = vmul.f32 %v2743, 1.442695
        %v2745 = vpow.pop %v2744
        %v2746 = vmul.f32 %v2742, %v2650
        %v2747 = vadd.f32 %v2746, %v2745
        %2749 = vset.pattern.permute.xlu0 0
        %2750 = vperm.xlu0 %2749, %v2742
        %v2751 = vpop.permute.xlu0 %2750
        %v2753 = vmul.f32 %v2751, %v2663
        %2755 = vset.pattern.permute.xlu0 0
        %2756 = vperm.xlu0 %2755, %v2745
        %v2757 = vpop.permute.xlu0 %2756
        %v2759 = vmul.f32 %v2757, %v2717
        %v2760 = vadd.f32 %v2753, %v2759
        %v2761 = vld [vmem:[#allocation2 + $0x1c] sm:$0xf]
        %v2762 = vunpack.c.l.bf16 %v2761
        %2763 = vmatpush.bf16.msra.mxu0 0
        %2764 = vmatpush.bf16.msra.mxu0 0
        %2765 = vmatpush.bf16.msra.mxu0 0
        %2766 = vmatpush.bf16.msra.mxu0 0
        %2767 = vmatpush.bf16.msra.mxu0 0
        %2768 = vmatpush.bf16.msra.mxu0 0
        %2769 = vmatpush.bf16.msra.mxu0 %v2067
        %2770 = vmatpush.bf16.msra.mxu0 %v2066
        %2771 = vmatmul.bf16.gmra.mxu0 %v2723
        %v2772 = vpop.f32.mrf.mxu0
        %v2773 = vadd.f32 0.0, %v2772
        %v2774 = vpop.f32.mrf.mxu0
        %2775 = vdwg.mxu0
        %v2776 = vadd.f32 %v2762, %v2773
        %v2777 = vtanh.pop %v2776
        %v2778 = vxor.u32 %v2776, 2147483648
        %v2779 = vmul.f32 %v2778, 1.442695
        %v2780 = vpow.pop %v2779
        %v2781 = vadd.f32 %v2780, 1.0
        %v2782 = vrcp.pop %v2781
        %v2783 = vmul.f32 %v2781, %v2782
        %v2784 = vsub.f32 1.0, %v2783
        %v2785 = vmul.f32 %v2782, %v2784
        %v2786 = vadd.f32 %v2782, %v2785
        %vm2787 = vweird.f32 %v2781
        %vm2788 = vweird.f32 %v2782
        %vm2789 = vmor %vm2787, %vm2788
        %v2790 = vsel %vm2789, %v2782, %v2786
        %v2791 = vand.u32 2147483647, %v2781
        %vm2792 = vcmp.eq.f32.partialorder %v2791, 8.507059e+37
        %v2793 = vand.u32 %v2781, 2147483648
        %v2794 = vor.u32 1.1754944e-38, %v2793
        %v2795 = vsel %vm2792, %v2794, %v2790
        %v2796 = vmul.f32 1.0, %v2795
        %v2797 = vsel %vm695, %v2777, %v2796
        %v2798 = vmul.f32 %v2797, %v2711
        %2800 = vrot.lane.b32.xlu0 %v2797, 64
        %v2801 = vpop.permute.xlu0 %2800
        %v2803 = vmul.f32 %v2797, %v2801
        %2805 = vrot.lane.b32.xlu0 %v2803, 32
        %v2806 = vpop.permute.xlu0 %2805
        %v2808 = vadd.f32 %v2798, %v2806
        %v2809 = vtanh.pop %v2808
        %2811 = vrot.lane.b32.xlu0 %v2809, 64
        %v2812 = vpop.permute.xlu0 %2811
        %v2814 = vmul.f32 %v2797, %v2812
        %v2815 = vpack.c.bf16 %v2814, %v2814
        %2817 = vrot.lane.b32.xlu0 %v2815, 32
        %v2818 = vpop.permute.xlu0 %2817
        %v2820 = vsel %vm809, %v2818, 0
        %2822 = vmatpush.bf16.msra.mxu0 0
        %2823 = vmatpush.bf16.msra.mxu0 0
        %2824 = vmatpush.bf16.msra.mxu0 0
        %2825 = vmatpush.bf16.msra.mxu0 0
        %2826 = vmatpush.bf16.msra.mxu0 0
        %2827 = vmatpush.bf16.msra.mxu0 0
        %2828 = vmatpush.bf16.msra.mxu0 %v2138
        %2829 = vmatpush.bf16.msra.mxu0 %v2137
        %2830 = vmatmul.bf16.gmra.mxu0 %v2820
        %v2831 = vpop.f32.mrf.mxu0
        %v2832 = vadd.f32 %v2124, %v2831
        %v2833 = vpop.f32.mrf.mxu0
        %2834 = vdwg.mxu0
        %v2835 = vmul.f32 %v2832, 0.17677669
        %v2836 = vmax.f32 %v2739, %v2835
        %v2837 = vsub.f32 %v2739, %v2836
        %v2838 = vmul.f32 %v2837, 1.442695
        %v2839 = vpow.pop %v2838
        %v2840 = vsub.f32 %v2835, %v2836
        %v2841 = vmul.f32 %v2840, 1.442695
        %v2842 = vpow.pop %v2841
        %v2843 = vmul.f32 %v2839, %v2747
        %v2844 = vadd.f32 %v2843, %v2842
        %2846 = vset.pattern.permute.xlu0 0
        %2847 = vperm.xlu0 %2846, %v2839
        %v2848 = vpop.permute.xlu0 %2847
        %v2850 = vmul.f32 %v2848, %v2760
        %2852 = vset.pattern.permute.xlu0 0
        %2853 = vperm.xlu0 %2852, %v2842
        %v2854 = vpop.permute.xlu0 %2853
        %v2856 = vmul.f32 %v2854, %v2814
        %v2857 = vadd.f32 %v2850, %v2856
        %v2858 = vrcp.pop %v2844
        %2860 = vset.pattern.permute.xlu0 0
        %2861 = vperm.xlu0 %2860, %v2858
        %v2862 = vpop.permute.xlu0 %2861
        %v2864 = vmul.f32 %v2857, %v2862
        %v2865 = vpack.c.bf16 %v2864, %v2864
        %v2866 = vld [vmem:[#allocation14] sm:$0xf]
        %v2867 = vld [vmem:[#allocation14 + $0x4] sm:$0xf]
        %v2868 = vld [vmem:[#allocation14 + $0x8] sm:$0xf]
        %v2869 = vld [vmem:[#allocation14 + $0xc] sm:$0xf]
        %v2870 = vld [vmem:[%s13] sm:$0x1]
        %v2872 = vperm.slane %v2870, 0
        %2875 = vrot.lane.b32.xlu0 %v2865, 32
        %v2876 = vpop.permute.xlu0 %2875
        %v2881 = vunpack.c.l.b16 %v2866
        %v2882 = vunpack.c.l.b16 %v2867
        %v2883 = vunpack.c.l.b16 %v2868
        %v2884 = vunpack.c.l.b16 %v2869
        %v2885 = vpack.c.b16 %v2882, %v2881
        %v2886 = vpack.c.b16 %v2884, %v2883
        %v2890 = vsel %vm809, %v2876, 0
        %2892 = vmatpush.bf16.msra.mxu0 0
        %2893 = vmatpush.bf16.msra.mxu0 0
        %2894 = vmatpush.bf16.msra.mxu0 0
        %2895 = vmatpush.bf16.msra.mxu0 0
        %2896 = vmatpush.bf16.msra.mxu0 0
        %2897 = vmatpush.bf16.msra.mxu0 0
        %2898 = vmatpush.bf16.msra.mxu0 %v2886
        %2899 = vmatpush.bf16.msra.mxu0 %v2885
        %2900 = vmatmul.bf16.gmra.mxu0 %v2890
        %v2901 = vpop.f32.mrf.mxu0
        %v2902 = vadd.f32 %v2872, %v2901
        %v2903 = vpop.f32.mrf.mxu0
        %2904 = vdwg.mxu0
        %v2905 = vtanh.pop %v2902
        %v2906 = vpack.c.bf16 %v2905, %v2905
        %v2907 = vld [vmem:[#allocation16] sm:$0xf]
        %v2908 = vld [vmem:[#allocation16 + $0x4] sm:$0xf]
        %v2909 = vld [vmem:[#allocation16 + $0x8] sm:$0xf]
        %v2910 = vld [vmem:[#allocation16 + $0xc] sm:$0xf]
        %v2911 = vld [vmem:[%s15] sm:$0x1]
        %v2913 = vperm.slane %v2911, 0
        %v2919 = vunpack.c.l.b16 %v2907
        %v2920 = vunpack.c.l.b16 %v2908
        %v2921 = vunpack.c.l.b16 %v2909
        %v2922 = vunpack.c.l.b16 %v2910
        %v2923 = vpack.c.b16 %v2920, %v2919
        %v2924 = vpack.c.b16 %v2922, %v2921
        %v2928 = vsel %vm809, %v2906, 0
        %2930 = vmatpush.bf16.msra.mxu0 0
        %2931 = vmatpush.bf16.msra.mxu0 0
        %2932 = vmatpush.bf16.msra.mxu0 0
        %2933 = vmatpush.bf16.msra.mxu0 0
        %2934 = vmatpush.bf16.msra.mxu0 0
        %2935 = vmatpush.bf16.msra.mxu0 0
        %2936 = vmatpush.bf16.msra.mxu0 %v2924
        %2937 = vmatpush.bf16.msra.mxu0 %v2923
        %2938 = vmatmul.bf16.gmra.mxu0 %v2928
        %v2939 = vpop.f32.mrf.mxu0
        %v2940 = vadd.f32 %v2913, %v2939
        %v2941 = vpop.f32.mrf.mxu0
        %2942 = vdwg.mxu0
        %v2944 = vrot.slane %v2940, 4
        %v2946 = vmul.f32 %v2940, 0.17677669
        %v2947 = vmul.f32 %v2944, 0.17677669
        %vm2948 = vcmask 257024
        %v2949 = vsel %vm2948, %v2946, -inf
        %v2950 = vrot.slane %v2949, 4
        %v2951 = vmax.f32 %v2949, %v2950
        %v2952 = vrot.slane %v2951, 2
        %v2953 = vmax.f32 %v2951, %v2952
        %v2954 = vrot.slane %v2953, 1
        %v2955 = vmax.f32 %v2953, %v2954
        %v2956 = vsel %vm2948, %v2947, -inf
        %v2957 = vrot.slane %v2956, 4
        %v2958 = vmax.f32 %v2956, %v2957
        %v2959 = vrot.slane %v2958, 2
        %v2960 = vmax.f32 %v2958, %v2959
        %v2961 = vrot.slane %v2960, 1
        %v2962 = vmax.f32 %v2960, %v2961
        %v2963 = vsub.f32 %v2946, %v2955
        %v2964 = vsub.f32 %v2947, %v2962
        %v2965 = vmul.f32 %v2963, 1.442695
        %v2966 = vpow.pop %v2965
        %v2967 = vmul.f32 %v2964, 1.442695
        %v2968 = vpow.pop %v2967
        %v2969 = vsel %vm2948, %v2966, 0.0
        %v2970 = vrot.slane %v2969, 4
        %v2971 = vadd.f32 %v2969, %v2970
        %v2972 = vrot.slane %v2971, 2
        %v2973 = vadd.f32 %v2971, %v2972
        %v2974 = vrot.slane %v2973, 1
        %v2975 = vadd.f32 %v2973, %v2974
        %v2976 = vsel %vm2948, %v2968, 0.0
        %v2977 = vrot.slane %v2976, 4
        %v2978 = vadd.f32 %v2976, %v2977
        %v2979 = vrot.slane %v2978, 2
        %v2980 = vadd.f32 %v2978, %v2979
        %v2981 = vrot.slane %v2980, 1
        %v2982 = vadd.f32 %v2980, %v2981
        %v2983 = vrcp.pop %v2975
        %v2984 = vrcp.pop %v2982
        %v2985 = vmul.f32 %v2966, %v2983
        %v2986 = vmul.f32 %v2968, %v2984
        %v2988 = vrot.slane %v2864, 4
        %2992 = vrot.lane.b32.xlu0 %v2985, 96
        %v2993 = vpop.permute.xlu0 %2992
        %2994 = vrot.lane.b32.xlu0 %v2986, 96
        %v2995 = vpop.permute.xlu0 %2994
        %v2998 = vmul.f32 %v2864, %v2993
        %v2999 = vmul.f32 %v2988, %v2995
        %3002 = vrot.lane.b32.xlu0 %v2998, 32
        %v3003 = vpop.permute.xlu0 %3002
        %3004 = vrot.lane.b32.xlu0 %v2999, 32
        %v3005 = vpop.permute.xlu0 %3004
        %v3008 = vunpack.c.l.s4 1983009808
        %v3009 = vunpack.c.0.s8 %v3008
        %v3010 = vperm.slane %v3003, %v3009
        %v3013 = vunpack.c.l.s4 1983009808
        %v3014 = vunpack.c.0.s8 %v3013
        %v3015 = vperm.slane %v3005, %v3014
        %v3016 = vrot.slane %v3015, 4
        %vm3017 = vcmask 1047556
        %v3018 = vsel %vm3017, %v3016, %v3010
        %v3019 = vrot.slane %v3010, 4
        %v3020 = vsel %vm3017, %v3015, %v3019
        %v3022 = vunpack.c.l.s4 1934713408
        %v3023 = vunpack.c.0.s8 %v3022
        %v3024 = vperm.slane %v3018, %v3023
        %v3026 = vunpack.c.l.s4 1934713408
        %v3027 = vunpack.c.0.s8 %v3026
        %v3028 = vperm.slane %v3020, %v3027
        %v3029 = vrot.slane %v3024, 4
        %v3030 = vsel %vm3017, 0.0, %v3029
        %v3031 = vrot.slane %v3028, 4
        %v3032 = vsel %vm3017, 0.0, %v3031
        %3034 = vst [vmem:[#allocation1] ss:$2 sm:$0xff] %v3030
        %v3035 = vld.sshfl [vmem:[#allocation1] sm:$0xff pattern:$0x75316420]
        %3036 = vrot.lane.b32.xlu0 %v3035, 32
        %v3037 = vpop.permute.xlu0 %3036
        %3040 = vst [vmem:[#allocation1] ss:$2 sm:$0xff] %v3028
        %v3041 = vld.sshfl [vmem:[#allocation1] sm:$0xff pattern:$0x75316420]
        %3042 = vrot.lane.b32.xlu0 %v3041, 64
        %v3043 = vpop.permute.xlu0 %3042
        %3046 = vst [vmem:[#allocation1] ss:$2 sm:$0xff] %v3032
        %v3047 = vld.sshfl [vmem:[#allocation1] sm:$0xff pattern:$0x75316420]
        %3048 = vrot.lane.b32.xlu0 %v3047, 96
        %v3049 = vpop.permute.xlu0 %3048
        %v3051 = vsel %vm809, %v3024, %v3037
        %vm3052 = vcmask 523264
        %v3053 = vsel %vm3052, %v3051, %v3043
        %vm3054 = vcmask 785408
        %v3055 = vsel %vm3054, %v3053, %v3049
        %v3056 = vpack.c.bf16 %v3055, %v3055
        %v3057 = vld [vmem:[%s16] sm:$0xf]
        %v3058 = vld [vmem:[%s16 + $0x4] sm:$0xf]
        %v3059 = vld [vmem:[%s16 + $0x8] sm:$0xf]
        %v3060 = vld [vmem:[%s16 + $0xc] sm:$0xf]
        %v3061 = vld [vmem:[%s16 + $0x10] sm:$0xf]
        %v3062 = vld [vmem:[%s16 + $0x14] sm:$0xf]
        %v3063 = vld [vmem:[%s16 + $0x18] sm:$0xf]
        %v3064 = vld [vmem:[%s16 + $0x1c] sm:$0xf]
        %v3065 = vld [vmem:[%s16 + $0x20] sm:$0xf]
        %v3066 = vld [vmem:[%s16 + $0x24] sm:$0xf]
        %v3067 = vld [vmem:[%s16 + $0x28] sm:$0xf]
        %v3068 = vld [vmem:[%s16 + $0x2c] sm:$0xf]
        %v3069 = vld [vmem:[%s16 + $0x30] sm:$0xf]
        %v3070 = vld [vmem:[%s16 + $0x34] sm:$0xf]
        %v3071 = vld [vmem:[%s16 + $0x38] sm:$0xf]
        %v3072 = vld [vmem:[%s16 + $0x3c] sm:$0xf]
        %v3073 = vld [vmem:[%s17] sm:$0x1]
        %v3075 = vperm.slane %v3073, 0
        %v3093 = vunpack.c.l.b16 %v3057
        %v3094 = vunpack.c.l.b16 %v3058
        %v3095 = vunpack.c.l.b16 %v3059
        %v3096 = vunpack.c.l.b16 %v3060
        %v3097 = vunpack.c.l.b16 %v3061
        %v3098 = vunpack.c.l.b16 %v3062
        %v3099 = vunpack.c.l.b16 %v3063
        %v3100 = vunpack.c.l.b16 %v3064
        %v3101 = vunpack.c.l.b16 %v3065
        %v3102 = vunpack.c.l.b16 %v3066
        %v3103 = vunpack.c.l.b16 %v3067
        %v3104 = vunpack.c.l.b16 %v3068
        %v3105 = vunpack.c.l.b16 %v3069
        %v3106 = vunpack.c.l.b16 %v3070
        %v3107 = vunpack.c.l.b16 %v3071
        %v3108 = vunpack.c.l.b16 %v3072
        %v3109 = vpack.c.b16 %v3094, %v3093
        %v3110 = vpack.c.b16 %v3096, %v3095
        %v3111 = vpack.c.b16 %v3098, %v3097
        %v3112 = vpack.c.b16 %v3100, %v3099
        %v3113 = vpack.c.b16 %v3102, %v3101
        %v3114 = vpack.c.b16 %v3104, %v3103
        %v3115 = vpack.c.b16 %v3106, %v3105
        %v3116 = vpack.c.b16 %v3108, %v3107
        %3125 = vmatpush.bf16.msra.mxu0 %v3116
        %3126 = vmatpush.bf16.msra.mxu0 %v3115
        %3127 = vmatpush.bf16.msra.mxu0 %v3114
        %3128 = vmatpush.bf16.msra.mxu0 %v3113
        %3129 = vmatpush.bf16.msra.mxu0 %v3112
        %3130 = vmatpush.bf16.msra.mxu0 %v3111
        %3131 = vmatpush.bf16.msra.mxu0 %v3110
        %3132 = vmatpush.bf16.msra.mxu0 %v3109
        %3133 = vmatmul.bf16.gmra.mxu0 %v3056
        %v3134 = vpop.f32.mrf.mxu0
        %v3135 = vadd.f32 %v3075, %v3134
        %v3136 = vpop.f32.mrf.mxu0
        %3137 = vdwg.mxu0
        %3138 = vst [vmem:[%s684] sm:$0x3] %v3135
        %s3139 = sand.u32 %s429, 1
        %s3140 = scalar_lea.sflag [#allocation7], %s3139
        %s3141 = sand.u32 %s429, 1
        %s3142 = smul.addr %s3141, 2
        %s3143 = scalar_lea.vmem [#allocation17], %s3142
        // Predicated region
        $region121: #{tpu_custom_call.1} parent=91 // pred_check
          %p3144 = pneg %p439
        $region122: #{tpu_custom_call.1} parent=91 // pred_check_branch
          %3146 = sbr.rel (%p3144) target = $region124
        $region123: #{tpu_custom_call.1} parent=91 // pred_region
          %3148 = vsyncadd %s3140, 0
          %s3149 = smul.addr %s38, 2
          %s3150 = scalar_lea.hbm %s18, %s3149
          %s3152 = sshll.u32 %s3143, 4
          %s3153 = int_to_ptr.vmem [resolvable:$true] %s3152
          %s3154 = sshll.u32 %s3150, 4
          %s3155 = int_to_ptr.hbm [resolvable:$true] %s3154
          %3157 = dma.vmem_to_hbm [thread:$0]  %s3153, 32, %s3155, %s3140
        $region124: #{tpu_custom_call.1} parent=91 // pred_fallthru
          _
      $region92: #{tpu_custom_call.1} parent=5 // pred_fallthru
        _
      %p3158 = scmp.le.s32.totalorder 2, %s33
      // Predicated region
      $region125: #{tpu_custom_call.1} parent=5 // pred_check
        %p3159 = pneg %p3158
      $region126: #{tpu_custom_call.1} parent=5 // pred_check_branch
        %3161 = sbr.rel (%p3159) target = $region128
      $region127: #{tpu_custom_call.1} parent=5 // pred_region
        %s3162 = ssub.s32 %s33, 2
        // Predicated region
        $region129: #{tpu_custom_call.1} parent=127 // pred_check
          %p3163 = pneg %p445
        $region130: #{tpu_custom_call.1} parent=127 // pred_check_branch
          %3165 = sbr.rel (%p3163) target = $region132
        $region131: #{tpu_custom_call.1} parent=127 // pred_region
          %s3166 = sand.u32 %s430, 1
          %s3167 = scalar_lea.sflag [#allocation7], %s3166
          %s3168 = sand.u32 %s430, 1
          %s3169 = smul.addr %s3168, 2
          %s3170 = scalar_lea.vmem [#allocation17], %s3169
          %3172 = dma.done %s3167, 32
        $region132: #{tpu_custom_call.1} parent=127 // pred_fallthru
          _
      $region128: #{tpu_custom_call.1} parent=5 // pred_fallthru
        _
    $region6: #{tpu_custom_call.1} parent=1 // loop_footer
      %s37 = sadd.s32 1, %s33
    $region7: #{tpu_custom_call.1} parent=1 // loop_footer_branch
      %32 = sbr.rel target = $region3
    $region8: #{tpu_custom_call.1} parent=1 // loop_exit
      _
    %3173 = vsyncpa [#allocation6], 1
    %s3174 = scalar_lea.sflag [#allocation6], 1
    %3175 = vsyncpa %s3174, 1
    %3176 = vsyncpa [#allocation9], 1
    %3177 = vsyncpa [#allocation12], 1
    %3178 = vsyncpa [#allocation15], 1
    %3179 = vsyncpa [#allocation7], 1
    %s3180 = scalar_lea.sflag [#allocation7], 1
    %3181 = vsyncpa %s3180, 1

</llo_original>
